<compile_context>
chip_gen: v6e
topology: v6e:2x2x1
jax: 0.10.0
libtpu: 0.0.40
codegen_flags: <defaults>
</compile_context>

<pallas_src>
import functools

import numpy as np
import jax
import jax.numpy as jnp
from jax.experimental import pallas as pl
from jax.experimental.pallas import tpu as pltpu


# -----------------------------------------------------------------------------
# 1x1 Conv + folded-BN + SiLU : per-image GEMM, tiled over (batch, HW)
# -----------------------------------------------------------------------------
def _pw_conv_kernel(x_ref, w_ref, b_ref, o_ref):
    y = jnp.dot(w_ref[...], x_ref[...], preferred_element_type=jnp.float32)
    y = y + b_ref[...]                                   # folded-BN bias
    o_ref[...] = (y * jax.nn.sigmoid(y)).astype(o_ref.dtype)   # SiLU


def conv1x1_bn_silu(x, w, scale, bias, out_dtype=jnp.bfloat16):
    """x: (B, Cin, H, W) NCHW.  w: (Co, Cin, 1, 1).  BN scale folded into weights."""
    B, Cin, H, W = x.shape
    Co = w.shape[0]
    HW = H * W
    x2 = x.reshape(B, Cin, HW).astype(jnp.bfloat16)
    w2 = (w.reshape(Co, Cin) * scale[:, None]).astype(jnp.bfloat16)
    b2 = bias.reshape(Co, 1).astype(jnp.float32)

    thw = HW
    for cand in (2048, 1024, 512):                       # tile HW when it is large
        if HW % cand == 0:
            thw = cand
            break
    grid = (B, HW // thw)

    out = pl.pallas_call(
        _pw_conv_kernel,
        out_shape=jax.ShapeDtypeStruct((B, Co, HW), out_dtype),
        grid=grid,
        in_specs=[
            pl.BlockSpec((None, Cin, thw), lambda b, t: (b, 0, t)),
            pl.BlockSpec((Co, Cin), lambda b, t: (0, 0)),
            pl.BlockSpec((Co, 1), lambda b, t: (0, 0)),
        ],
        out_specs=pl.BlockSpec((None, Co, thw), lambda b, t: (b, 0, t)),
        compiler_params=pltpu.CompilerParams(
            dimension_semantics=("parallel", "parallel")),
    )(x2, w2, b2)
    return out.reshape(B, Co, H, W)


# -----------------------------------------------------------------------------
# 3x3 "same" Conv + folded-BN + SiLU : 9 shifted GEMMs, no im2col
# -----------------------------------------------------------------------------
def _conv3x3_bias_silu_kernel(x_ref, w_ref, b_ref, o_ref, *, Wp, L):
    acc = jnp.zeros(o_ref.shape, jnp.float32)            # (Co, L)
    for kh in range(3):
        for kw in range(3):
            off = kh * Wp + kw
            acc = acc + jnp.dot(w_ref[kh * 3 + kw], x_ref[:, off:off + L],
                                preferred_element_type=jnp.float32)
    y = acc + b_ref[...]
    o_ref[...] = (y * jax.nn.sigmoid(y)).astype(o_ref.dtype)


def conv3x3_bn_silu(x, w, scale, bias, out_dtype=jnp.bfloat16):
    """x: (B, Cin, H, W) NCHW.  w: (Co, Cin, 3, 3).
    Zero-haloed, spatially-flattened activation; the kernel accumulates 9 shifted
    GEMMs.  Outputs for the 2 junk columns per row are discarded outside."""
    B, Cin, H, W = x.shape
    Co = w.shape[0]
    Wp = W + 2
    L = H * Wp                      # output rows per image (incl. 2 junk cols / row)
    Lin = (H + 3) * Wp              # padded input rows (1 top, 2 bottom, 1 left/right)
    xp = jnp.pad(x.astype(jnp.bfloat16), ((0, 0), (0, 0), (1, 2), (1, 1)))
    xp = xp.reshape(B, Cin, Lin)
    w2 = (jnp.transpose(w * scale[:, None, None, None], (2, 3, 0, 1))
          .reshape(9, Co, Cin)).astype(jnp.bfloat16)
    b2 = bias.reshape(Co, 1).astype(jnp.float32)

    kern = functools.partial(_conv3x3_bias_silu_kernel, Wp=Wp, L=L)
    out = pl.pallas_call(
        kern,
        out_shape=jax.ShapeDtypeStruct((B, Co, L), out_dtype),
        grid=(B,),
        in_specs=[
            pl.BlockSpec((None, Cin, Lin), lambda b: (b, 0, 0)),
            pl.BlockSpec((9, Co, Cin), lambda b: (0, 0, 0)),
            pl.BlockSpec((Co, 1), lambda b: (0, 0)),
        ],
        out_specs=pl.BlockSpec((None, Co, L), lambda b: (b, 0, 0)),
        compiler_params=pltpu.CompilerParams(dimension_semantics=("parallel",)),
    )(xp, w2, b2)
    return out.reshape(B, Co, H, Wp)[:, :, :, :W]


# -----------------------------------------------------------------------------
# SCSA : one kernel per image on a lane-dense (C, H*W) block
# -----------------------------------------------------------------------------
def _scsa_constants(H, W, win):
    HW = H * W
    Ho = (H - win) // win + 1
    Wo = (W - win) // win + 1
    NP = Ho * Wo
    # (HW, H+W): row mean (over W) and col mean (over H) extraction in one matmul
    mhw = np.zeros((HW, H + W), np.float32)
    for ph in range(H):
        for pw in range(W):
            p = ph * W + pw
            mhw[p, ph] = 1.0 / W
            mhw[p, H + pw] = 1.0 / H

    # (L, 9L): the 9 zero-padded shifts needed by the width-9 packed depthwise conv
    def shifts(L):
        s = np.zeros((L, 9 * L), np.float32)
        for k in range(9):
            for j in range(L):
                src = j + k - 4
                if 0 <= src < L:
                    s[src, k * L + j] = 1.0
        return s

    sh, sw = shifts(H), shifts(W)
    # (H, HW) / (W, HW): broadcast of the 1-D gates back onto the flat image
    bh = np.zeros((H, HW), np.float32)
    bw = np.zeros((W, HW), np.float32)
    for ph in range(H):
        bh[ph, ph * W:(ph + 1) * W] = 1.0
    for pw in range(W):
        bw[pw, pw::W] = 1.0
    # (HW, Ho*Wo): AvgPool2d(win, stride=win) as a pooling matrix
    mp = np.zeros((HW, NP), np.float32)
    inv = 1.0 / (win * win)
    for oh in range(Ho):
        for ow in range(Wo):
            for dh in range(win):
                for dw_ in range(win):
                    mp[(oh * win + dh) * W + (ow * win + dw_), oh * Wo + ow] = inv
    return (jnp.asarray(mhw), jnp.asarray(sh), jnp.asarray(sw),
            jnp.asarray(bh), jnp.asarray(bw), jnp.asarray(mp))


def _scsa_kernel(x_ref, dww_ref, p_ref, mhw_ref, sh_ref, sw_ref,
                 bh_ref, bw_ref, mp_ref, o_ref, *, C, H, W, gc, head_dim):
    f32 = jnp.float32
    eps = 1e-5
    x = x_ref[...].astype(f32)            # (C, H*W), spatial in lanes
    dww = dww_ref[...].astype(f32)        # (C, 9) packed depthwise taps
    p = p_ref[...].astype(f32)            # (C, 10) per-channel params

    dw_b = p[:, 0:1]
    gnh_w, gnh_b = p[:, 1:2], p[:, 2:3]
    gnw_w, gnw_b = p[:, 3:4], p[:, 4:5]
    gn_w, gn_b = p[:, 5:6], p[:, 6:7]
    wq, wk, wv = p[:, 7:8], p[:, 8:9], p[:, 9:10]

    # ---- spatial attention ---------------------------------------------------
    xm = jnp.dot(x, mhw_ref[...], preferred_element_type=f32)          # (C, H+W)
    s_h = jnp.dot(xm[:, :H], sh_ref[...], preferred_element_type=f32)  # (C, 9H)
    s_w = jnp.dot(xm[:, H:], sw_ref[...], preferred_element_type=f32)  # (C, 9W)

    ridx = jax.lax.broadcasted_iota(jnp.int32, (C, 1), 0)

    def branch(s, L, gw, gb):
        # packed depthwise 1-D conv (kernels 3/5/7/9 centered in 9 taps)
        acc = jnp.broadcast_to(dw_b, (C, L))
        for k in range(9):
            acc = acc + dww[:, k:k + 1] * s[:, k * L:(k + 1) * L]
        # GroupNorm(4, C) via per-group masks
        mu_c = jnp.zeros((C, 1), f32)
        var_c = jnp.zeros((C, 1), f32)
        inv_n = 1.0 / (gc * L)
        for g in range(4):
            m = ((ridx >= g * gc) & (ridx < (g + 1) * gc)).astype(f32)
            mu_g = jnp.sum(acc * m) * inv_n
            var_g = jnp.sum(((acc - mu_g) ** 2) * m) * inv_n
            mu_c = mu_c + m * mu_g
            var_c = var_c + m * var_g
        normed = (acc - mu_c) * jax.lax.rsqrt(var_c + eps) * gw + gb
        return jax.nn.sigmoid(normed)       # (C, L)

    ah = branch(s_h, H, gnh_w, gnh_b)
    aw = branch(s_w, W, gnw_w, gnw_b)

    ah_full = jnp.dot(ah, bh_ref[...], preferred_element_type=f32)     # (C, HW)
    aw_full = jnp.dot(aw, bw_ref[...], preferred_element_type=f32)     # (C, HW)
    xg = x * ah_full * aw_full                                          # gated x

    # ---- channel attention -----------------------------------------------------
    y = jnp.dot(xg, mp_ref[...], preferred_element_type=f32)           # (C, Ho*Wo)

    # GroupNorm(1, C)
    mu = jnp.mean(y)
    var = jnp.mean((y - mu) ** 2)
    yn = (y - mu) * jax.lax.rsqrt(var + eps) * gn_w + gn_b

    q = yn * wq
    k = yn * wk
    v = yn * wv

    logits = jax.lax.dot_general(q, k, (((1,), (1,)), ((), ())),
                                 preferred_element_type=f32) * (head_dim ** -0.5)
    if C != head_dim:   # multi-head: block-diagonal per-head channel attention
        hr = jax.lax.broadcasted_iota(jnp.int32, (C, C), 0) // head_dim
        hc = jax.lax.broadcasted_iota(jnp.int32, (C, C), 1) // head_dim
        logits = jnp.where(hr == hc, logits, -1e30)
    lmax = jnp.max(logits, axis=1, keepdims=True)
    e = jnp.exp(logits - lmax)
    attn = e * pl.reciprocal(jnp.sum(e, axis=1, keepdims=True), approx=True)
    out = jnp.dot(attn, v, preferred_element_type=f32)                 # (C, Ho*Wo)

    gate = jax.nn.sigmoid(jnp.mean(out, axis=1, keepdims=True))        # (C, 1)
    o_ref[...] = (xg * gate).astype(o_ref.dtype)


def scsa_forward(x, P):
    """x: (B, C, H, W) NCHW."""
    B, C, H, W = x.shape
    win = P["scsa_window"]
    head_dim = P["scsa_head_dim"]
    HW = H * W
    NP = ((H - win) // win + 1) * ((W - win) // win + 1)
    mhw, sh, sw, bh, bw, mp = _scsa_constants(H, W, win)
    x2 = x.reshape(B, C, HW)

    kern = functools.partial(_scsa_kernel, C=C, H=H, W=W,
                             gc=C // 4, head_dim=head_dim)
    out = pl.pallas_call(
        kern,
        out_shape=jax.ShapeDtypeStruct((B, C, HW), x.dtype),
        grid=(B,),
        in_specs=[
            pl.BlockSpec((None, C, HW), lambda b: (b, 0, 0)),
            pl.BlockSpec((C, 9), lambda b: (0, 0)),
            pl.BlockSpec((C, 10), lambda b: (0, 0)),
            pl.BlockSpec((HW, H + W), lambda b: (0, 0)),
            pl.BlockSpec((H, 9 * H), lambda b: (0, 0)),
            pl.BlockSpec((W, 9 * W), lambda b: (0, 0)),
            pl.BlockSpec((H, HW), lambda b: (0, 0)),
            pl.BlockSpec((W, HW), lambda b: (0, 0)),
            pl.BlockSpec((HW, NP), lambda b: (0, 0)),
        ],
        out_specs=pl.BlockSpec((None, C, HW), lambda b: (b, 0, 0)),
        compiler_params=pltpu.CompilerParams(dimension_semantics=("parallel",)),
    )(x2, P["scsa_dw_w9"], P["scsa_pvec"], mhw, sh, sw, bh, bw, mp)
    return out.reshape(B, C, H, W)


# -----------------------------------------------------------------------------
# Module forward (glue in plain JAX, zero transposes)
# -----------------------------------------------------------------------------
def bottleneck1_forward(x, P, add):
    # Bottleneck_1: x + cv2(cv1(x)) if add else cv2(att(cv1(x)))
    t = conv3x3_bn_silu(x, P["m_cv1_w"], P["m_cv1_s"], P["m_cv1_b"])
    if add:
        return x + conv3x3_bn_silu(t, P["m_cv2_w"], P["m_cv2_s"], P["m_cv2_b"])
    t = scsa_forward(t, P)
    return conv3x3_bn_silu(t, P["m_cv2_w"], P["m_cv2_s"], P["m_cv2_b"])


def c2f_scsa1_forward(x, P, shortcut=False):
    c = P["c"]
    y = conv1x1_bn_silu(x, P["cv1_w"], P["cv1_s"], P["cv1_b"])     # (B, 2c, H, W)
    y0, y1 = y[:, :c], y[:, c:]
    y2 = bottleneck1_forward(y1, P, add=shortcut)                  # c1==c2==c -> add==shortcut
    ycat = jnp.concatenate([y0, y1, y2], axis=1)                   # (B, 3c, H, W)
    return conv1x1_bn_silu(ycat, P["cv2_w"], P["cv2_s"], P["cv2_b"],
                           out_dtype=jnp.float32)


# -----------------------------------------------------------------------------
# Deterministic parameter construction (BN folded, eval mode)
# -----------------------------------------------------------------------------
def fold_bn(gamma, beta, mean, var, eps=1e-5):
    scale = gamma / jnp.sqrt(var + eps)
    bias = beta - mean * scale
    return scale, bias


def make_params(key, c1, c2, e=0.5, window=7):
    c = int(c2 * e)
    dim = c                                   # SCSA dim (Bottleneck_1 has e=1.0)
    gc = dim // 4
    head_num = max(dim // 64, 1)
    head_dim = dim // head_num

    ks = jax.random.split(key, 40)
    ki = iter(ks)

    def nrm(shape, s=0.2):
        return s * jax.random.normal(next(ki), shape, jnp.float32)

    def bn(ch):
        gamma = 1.0 + nrm((ch,), 0.1)
        beta = nrm((ch,), 0.1)
        mean = nrm((ch,), 0.1)
        var = 0.5 + jax.random.uniform(next(ki), (ch,), jnp.float32)
        return fold_bn(gamma, beta, mean, var)

    P = {"c": c}
    # C2f cv1 / cv2 (1x1 Conv + BN + SiLU)
    P["cv1_w"] = nrm((2 * c, c1, 1, 1))
    P["cv1_s"], P["cv1_b"] = bn(2 * c)
    P["cv2_w"] = nrm((c2, 3 * c, 1, 1))
    P["cv2_s"], P["cv2_b"] = bn(c2)
    # Bottleneck_1 cv1 / cv2 (3x3 Conv + BN + SiLU)
    P["m_cv1_w"] = nrm((c, c, 3, 3))
    P["m_cv1_s"], P["m_cv1_b"] = bn(c)
    P["m_cv2_w"] = nrm((c, c, 3, 3))
    P["m_cv2_s"], P["m_cv2_b"] = bn(c)

    # SCSA params: depthwise Conv1d kernels (3,5,7,9) packed & centered into 9 taps
    kernel_sizes = [3, 5, 7, 9]
    dw_w9 = jnp.zeros((dim, 9), jnp.float32)
    dw_b = jnp.zeros((dim,), jnp.float32)
    for g, K in enumerate(kernel_sizes):
        w = nrm((gc, 1, K), 0.3)                       # Conv1d weight, groups=gc
        b = nrm((gc,), 0.1)                            # Conv1d bias
        start = 4 - K // 2
        dw_w9 = dw_w9.at[g * gc:(g + 1) * gc, start:start + K].set(w[:, 0, :])
        dw_b = dw_b.at[g * gc:(g + 1) * gc].set(b)

    gnh_w = 1.0 + nrm((dim,), 0.1); gnh_b = nrm((dim,), 0.1)
    gnw_w = 1.0 + nrm((dim,), 0.1); gnw_b = nrm((dim,), 0.1)
    gn_w = 1.0 + nrm((dim,), 0.1);  gn_b = nrm((dim,), 0.1)
    qw = nrm((dim, 1, 1, 1), 0.3).reshape(dim)         # depthwise 1x1, no bias
    kw = nrm((dim, 1, 1, 1), 0.3).reshape(dim)
    vw = nrm((dim, 1, 1, 1), 0.3).reshape(dim)

    P["scsa_dw_w9"] = dw_w9
    P["scsa_pvec"] = jnp.stack(
        [dw_b, gnh_w, gnh_b, gnw_w, gnw_b, gn_w, gn_b, qw, kw, vw], axis=1)
    P["scsa_head_dim"] = head_dim
    P["scsa_window"] = window
    return P


# -----------------------------------------------------------------------------
if __name__ == "__main__":
    B, c1, c2, H, W = 2, 16, 16, 16, 16
    key = jax.random.PRNGKey(0)
    kp, kx = jax.random.split(key)
    P = make_params(kp, c1, c2)
    x = jax.random.normal(kx, (B, c1, H, W), jnp.float32)

    # shortcut=False (the C2f_SCSA1 default) exercises the SCSA path of Bottleneck_1
    fwd = jax.jit(lambda xx: c2f_scsa1_forward(xx, P, shortcut=False))
    out = fwd(x)
    jax.block_until_ready(out)
    assert out.shape == (B, c2, H, W)
    assert bool(jnp.all(jnp.isfinite(out)))
    print("KERNEL_OK")
</pallas_src>

<mosaic_0001>
module attributes {stable_mosaic.version = 11 : i64} {
  func.func @_pw_conv_kernel(%arg0: i32, %arg1: i32, %arg2: memref<1x16x256xbf16, #tpu.memory_space<vmem>>, %arg3: memref<16x16xbf16, #tpu.memory_space<vmem>>, %arg4: memref<16x1xf32, #tpu.memory_space<vmem>>, %arg5: memref<1x16x256xbf16, #tpu.memory_space<vmem>>) attributes {dimension_semantics = [#tpu.dimension_semantics<parallel>, #tpu.dimension_semantics<parallel>], iteration_bounds = array<i64: 2, 1>, scalar_prefetch = 0 : i64, scratch_operands = 0 : i64, tpu.core_type = #tpu.core_type<tc>, window_params = [{transform_indices = @transform_0, window_bounds = array<i64: 1, 16, 256>}, {pipeline_mode = #tpu.pipeline_mode<synchronous>, transform_indices = @transform_1, window_bounds = array<i64: 16, 16>}, {pipeline_mode = #tpu.pipeline_mode<synchronous>, transform_indices = @transform_2, window_bounds = array<i64: 16, 1>}, {transform_indices = @transform_3, window_bounds = array<i64: 1, 16, 256>}]} {
    %c0 = arith.constant 0 : index
    %c0_0 = arith.constant 0 : index
    %0 = vector.load %arg3[%c0, %c0_0] : memref<16x16xbf16, #tpu.memory_space<vmem>>, vector<16x16xbf16>
    %c0_1 = arith.constant 0 : index
    %c0_2 = arith.constant 0 : index
    %c0_3 = arith.constant 0 : index
    %1 = vector.load %arg2[%c0_1, %c0_2, %c0_3] : memref<1x16x256xbf16, #tpu.memory_space<vmem>>, vector<1x16x256xbf16>
    %2 = vector.shape_cast %1 : vector<1x16x256xbf16> to vector<16x256xbf16>
    %cst = arith.constant dense<0.000000e+00> : vector<16x256xf32>
    %3 = tpu.matmul %0, %2, %cst {dimension_numbers = #tpu.dot_dimension_numbers<[1], [0], [0], [1], [0, 0, 1, 1], [], []>} : vector<16x16xbf16>, vector<16x256xbf16>, vector<16x256xf32> -> vector<16x256xf32>
    %c0_4 = arith.constant 0 : index
    %c0_5 = arith.constant 0 : index
    %4 = vector.load %arg4[%c0_4, %c0_5] : memref<16x1xf32, #tpu.memory_space<vmem>>, vector<16x1xf32>
    %5 = vector.broadcast %4 : vector<16x1xf32> to vector<16x256xf32>
    %6 = arith.addf %3, %5 : vector<16x256xf32>
    %7 = arith.negf %6 : vector<16x256xf32>
    %8 = math.exp %7 : vector<16x256xf32>
    %cst_6 = arith.constant 1.000000e+00 : f32
    %9 = vector.broadcast %cst_6 : f32 to vector<16x256xf32>
    %10 = arith.addf %9, %8 : vector<16x256xf32>
    %11 = arith.divf %9, %10 : vector<16x256xf32>
    %12 = arith.mulf %6, %11 : vector<16x256xf32>
    %13 = arith.truncf %12 : vector<16x256xf32> to vector<16x256xbf16>
    %c0_7 = arith.constant 0 : index
    %c0_8 = arith.constant 0 : index
    %c0_9 = arith.constant 0 : index
    %14 = vector.load %arg5[%c0_7, %c0_8, %c0_9] : memref<1x16x256xbf16, #tpu.memory_space<vmem>>, vector<1x16x256xbf16>
    %15 = vector.shape_cast %14 : vector<1x16x256xbf16> to vector<16x256xbf16>
    %16 = vector.shape_cast %13 : vector<16x256xbf16> to vector<1x16x256xbf16>
    tpu.vector_store %arg5[%c0_7, %c0_8, %c0_9], %16 {strides = array<i32>} : memref<1x16x256xbf16, #tpu.memory_space<vmem>>, vector<1x16x256xbf16>,
    return
  }
  func.func @transform_0(%arg0: i32, %arg1: i32) -> (i32, i32, i32) {
    %c0_i32 = arith.constant 0 : i32
    %c0_i32_0 = arith.constant 0 : i32
    return %arg0, %c0_i32, %arg1 : i32, i32, i32
  }
  func.func @transform_1(%arg0: i32, %arg1: i32) -> (i32, i32) {
    %c0_i32 = arith.constant 0 : i32
    %c0_i32_0 = arith.constant 0 : i32
    %c0_i32_1 = arith.constant 0 : i32
    return %c0_i32, %c0_i32_0 : i32, i32
  }
  func.func @transform_2(%arg0: i32, %arg1: i32) -> (i32, i32) {
    %c0_i32 = arith.constant 0 : i32
    %c0_i32_0 = arith.constant 0 : i32
    %c0_i32_1 = arith.constant 0 : i32
    return %c0_i32, %c0_i32_0 : i32, i32
  }
  func.func @transform_3(%arg0: i32, %arg1: i32) -> (i32, i32, i32) {
    %c0_i32 = arith.constant 0 : i32
    %c0_i32_0 = arith.constant 0 : i32
    return %arg0, %c0_i32, %arg1 : i32, i32, i32
  }
}

module attributes {stable_mosaic.version = 11 : i64} {
  func.func @_conv3x3_bias_silu_kernel(%arg0: i32, %arg1: memref<1x8x342xbf16, #tpu.memory_space<vmem>>, %arg2: memref<9x8x8xbf16, #tpu.memory_space<vmem>>, %arg3: memref<8x1xf32, #tpu.memory_space<vmem>>, %arg4: memref<1x8x288xbf16, #tpu.memory_space<vmem>>) attributes {dimension_semantics = [#tpu.dimension_semantics<parallel>], iteration_bounds = array<i64: 2>, scalar_prefetch = 0 : i64, scratch_operands = 0 : i64, tpu.core_type = #tpu.core_type<tc>, window_params = [{transform_indices = @transform_0, window_bounds = array<i64: 1, 8, 342>}, {pipeline_mode = #tpu.pipeline_mode<synchronous>, transform_indices = @transform_1, window_bounds = array<i64: 9, 8, 8>}, {pipeline_mode = #tpu.pipeline_mode<synchronous>, transform_indices = @transform_2, window_bounds = array<i64: 8, 1>}, {transform_indices = @transform_3, window_bounds = array<i64: 1, 8, 288>}]} {
    %cst = arith.constant 0.000000e+00 : f32
    %0 = vector.broadcast %cst : f32 to vector<8x288xf32>
    %c0 = arith.constant 0 : index
    %c0_0 = arith.constant 0 : index
    %c0_1 = arith.constant 0 : index
    %1 = vector.load %arg2[%c0, %c0_0, %c0_1] : memref<9x8x8xbf16, #tpu.memory_space<vmem>>, vector<1x8x8xbf16>
    %2 = vector.shape_cast %1 : vector<1x8x8xbf16> to vector<8x8xbf16>
    %c0_2 = arith.constant 0 : index
    %c0_3 = arith.constant 0 : index
    %c0_4 = arith.constant 0 : index
    %3 = vector.load %arg1[%c0_2, %c0_3, %c0_4] : memref<1x8x342xbf16, #tpu.memory_space<vmem>>, vector<1x8x288xbf16>
    %4 = vector.shape_cast %3 : vector<1x8x288xbf16> to vector<8x288xbf16>
    %cst_5 = arith.constant dense<0.000000e+00> : vector<8x288xf32>
    %5 = tpu.matmul %2, %4, %cst_5 {dimension_numbers = #tpu.dot_dimension_numbers<[1], [0], [0], [1], [0, 0, 1, 1], [], []>} : vector<8x8xbf16>, vector<8x288xbf16>, vector<8x288xf32> -> vector<8x288xf32>
    %6 = arith.addf %0, %5 : vector<8x288xf32>
    %c1 = arith.constant 1 : index
    %c0_6 = arith.constant 0 : index
    %c0_7 = arith.constant 0 : index
    %7 = vector.load %arg2[%c1, %c0_6, %c0_7] : memref<9x8x8xbf16, #tpu.memory_space<vmem>>, vector<1x8x8xbf16>
    %8 = vector.shape_cast %7 : vector<1x8x8xbf16> to vector<8x8xbf16>
    %c0_8 = arith.constant 0 : index
    %c0_9 = arith.constant 0 : index
    %c1_10 = arith.constant 1 : index
    %9 = vector.load %arg1[%c0_8, %c0_9, %c1_10] : memref<1x8x342xbf16, #tpu.memory_space<vmem>>, vector<1x8x288xbf16>
    %10 = vector.shape_cast %9 : vector<1x8x288xbf16> to vector<8x288xbf16>
    %cst_11 = arith.constant dense<0.000000e+00> : vector<8x288xf32>
    %11 = tpu.matmul %8, %10, %cst_11 {dimension_numbers = #tpu.dot_dimension_numbers<[1], [0], [0], [1], [0, 0, 1, 1], [], []>} : vector<8x8xbf16>, vector<8x288xbf16>, vector<8x288xf32> -> vector<8x288xf32>
    %12 = arith.addf %6, %11 : vector<8x288xf32>
    %c2 = arith.constant 2 : index
    %c0_12 = arith.constant 0 : index
    %c0_13 = arith.constant 0 : index
    %13 = vector.load %arg2[%c2, %c0_12, %c0_13] : memref<9x8x8xbf16, #tpu.memory_space<vmem>>, vector<1x8x8xbf16>
    %14 = vector.shape_cast %13 : vector<1x8x8xbf16> to vector<8x8xbf16>
    %c0_14 = arith.constant 0 : index
    %c0_15 = arith.constant 0 : index
    %c2_16 = arith.constant 2 : index
    %15 = vector.load %arg1[%c0_14, %c0_15, %c2_16] : memref<1x8x342xbf16, #tpu.memory_space<vmem>>, vector<1x8x288xbf16>
    %16 = vector.shape_cast %15 : vector<1x8x288xbf16> to vector<8x288xbf16>
    %cst_17 = arith.constant dense<0.000000e+00> : vector<8x288xf32>
    %17 = tpu.matmul %14, %16, %cst_17 {dimension_numbers = #tpu.dot_dimension_numbers<[1], [0], [0], [1], [0, 0, 1, 1], [], []>} : vector<8x8xbf16>, vector<8x288xbf16>, vector<8x288xf32> -> vector<8x288xf32>
    %18 = arith.addf %12, %17 : vector<8x288xf32>
    %c3 = arith.constant 3 : index
    %c0_18 = arith.constant 0 : index
    %c0_19 = arith.constant 0 : index
    %19 = vector.load %arg2[%c3, %c0_18, %c0_19] : memref<9x8x8xbf16, #tpu.memory_space<vmem>>, vector<1x8x8xbf16>
    %20 = vector.shape_cast %19 : vector<1x8x8xbf16> to vector<8x8xbf16>
    %c0_20 = arith.constant 0 : index
    %c0_21 = arith.constant 0 : index
    %c18 = arith.constant 18 : index
    %21 = vector.load %arg1[%c0_20, %c0_21, %c18] : memref<1x8x342xbf16, #tpu.memory_space<vmem>>, vector<1x8x288xbf16>
    %22 = vector.shape_cast %21 : vector<1x8x288xbf16> to vector<8x288xbf16>
    %cst_22 = arith.constant dense<0.000000e+00> : vector<8x288xf32>
    %23 = tpu.matmul %20, %22, %cst_22 {dimension_numbers = #tpu.dot_dimension_numbers<[1], [0], [0], [1], [0, 0, 1, 1], [], []>} : vector<8x8xbf16>, vector<8x288xbf16>, vector<8x288xf32> -> vector<8x288xf32>
    %24 = arith.addf %18, %23 : vector<8x288xf32>
    %c4 = arith.constant 4 : index
    %c0_23 = arith.constant 0 : index
    %c0_24 = arith.constant 0 : index
    %25 = vector.load %arg2[%c4, %c0_23, %c0_24] : memref<9x8x8xbf16, #tpu.memory_space<vmem>>, vector<1x8x8xbf16>
    %26 = vector.shape_cast %25 : vector<1x8x8xbf16> to vector<8x8xbf16>
    %c0_25 = arith.constant 0 : index
    %c0_26 = arith.constant 0 : index
    %c19 = arith.constant 19 : index
    %27 = vector.load %arg1[%c0_25, %c0_26, %c19] : memref<1x8x342xbf16, #tpu.memory_space<vmem>>, vector<1x8x288xbf16>
    %28 = vector.shape_cast %27 : vector<1x8x288xbf16> to vector<8x288xbf16>
    %cst_27 = arith.constant dense<0.000000e+00> : vector<8x288xf32>
    %29 = tpu.matmul %26, %28, %cst_27 {dimension_numbers = #tpu.dot_dimension_numbers<[1], [0], [0], [1], [0, 0, 1, 1], [], []>} : vector<8x8xbf16>, vector<8x288xbf16>, vector<8x288xf32> -> vector<8x288xf32>
    %30 = arith.addf %24, %29 : vector<8x288xf32>
    %c5 = arith.constant 5 : index
    %c0_28 = arith.constant 0 : index
    %c0_29 = arith.constant 0 : index
    %31 = vector.load %arg2[%c5, %c0_28, %c0_29] : memref<9x8x8xbf16, #tpu.memory_space<vmem>>, vector<1x8x8xbf16>
    %32 = vector.shape_cast %31 : vector<1x8x8xbf16> to vector<8x8xbf16>
    %c0_30 = arith.constant 0 : index
    %c0_31 = arith.constant 0 : index
    %c20 = arith.constant 20 : index
    %33 = vector.load %arg1[%c0_30, %c0_31, %c20] : memref<1x8x342xbf16, #tpu.memory_space<vmem>>, vector<1x8x288xbf16>
    %34 = vector.shape_cast %33 : vector<1x8x288xbf16> to vector<8x288xbf16>
    %cst_32 = arith.constant dense<0.000000e+00> : vector<8x288xf32>
    %35 = tpu.matmul %32, %34, %cst_32 {dimension_numbers = #tpu.dot_dimension_numbers<[1], [0], [0], [1], [0, 0, 1, 1], [], []>} : vector<8x8xbf16>, vector<8x288xbf16>, vector<8x288xf32> -> vector<8x288xf32>
    %36 = arith.addf %30, %35 : vector<8x288xf32>
    %c6 = arith.constant 6 : index
    %c0_33 = arith.constant 0 : index
    %c0_34 = arith.constant 0 : index
    %37 = vector.load %arg2[%c6, %c0_33, %c0_34] : memref<9x8x8xbf16, #tpu.memory_space<vmem>>, vector<1x8x8xbf16>
    %38 = vector.shape_cast %37 : vector<1x8x8xbf16> to vector<8x8xbf16>
    %c0_35 = arith.constant 0 : index
    %c0_36 = arith.constant 0 : index
    %c36 = arith.constant 36 : index
    %39 = vector.load %arg1[%c0_35, %c0_36, %c36] : memref<1x8x342xbf16, #tpu.memory_space<vmem>>, vector<1x8x288xbf16>
    %40 = vector.shape_cast %39 : vector<1x8x288xbf16> to vector<8x288xbf16>
    %cst_37 = arith.constant dense<0.000000e+00> : vector<8x288xf32>
    %41 = tpu.matmul %38, %40, %cst_37 {dimension_numbers = #tpu.dot_dimension_numbers<[1], [0], [0], [1], [0, 0, 1, 1], [], []>} : vector<8x8xbf16>, vector<8x288xbf16>, vector<8x288xf32> -> vector<8x288xf32>
    %42 = arith.addf %36, %41 : vector<8x288xf32>
    %c7 = arith.constant 7 : index
    %c0_38 = arith.constant 0 : index
    %c0_39 = arith.constant 0 : index
    %43 = vector.load %arg2[%c7, %c0_38, %c0_39] : memref<9x8x8xbf16, #tpu.memory_space<vmem>>, vector<1x8x8xbf16>
    %44 = vector.shape_cast %43 : vector<1x8x8xbf16> to vector<8x8xbf16>
    %c0_40 = arith.constant 0 : index
    %c0_41 = arith.constant 0 : index
    %c37 = arith.constant 37 : index
    %45 = vector.load %arg1[%c0_40, %c0_41, %c37] : memref<1x8x342xbf16, #tpu.memory_space<vmem>>, vector<1x8x288xbf16>
    %46 = vector.shape_cast %45 : vector<1x8x288xbf16> to vector<8x288xbf16>
    %cst_42 = arith.constant dense<0.000000e+00> : vector<8x288xf32>
    %47 = tpu.matmul %44, %46, %cst_42 {dimension_numbers = #tpu.dot_dimension_numbers<[1], [0], [0], [1], [0, 0, 1, 1], [], []>} : vector<8x8xbf16>, vector<8x288xbf16>, vector<8x288xf32> -> vector<8x288xf32>
    %48 = arith.addf %42, %47 : vector<8x288xf32>
    %c8 = arith.constant 8 : index
    %c0_43 = arith.constant 0 : index
    %c0_44 = arith.constant 0 : index
    %49 = vector.load %arg2[%c8, %c0_43, %c0_44] : memref<9x8x8xbf16, #tpu.memory_space<vmem>>, vector<1x8x8xbf16>
    %50 = vector.shape_cast %49 : vector<1x8x8xbf16> to vector<8x8xbf16>
    %c0_45 = arith.constant 0 : index
    %c0_46 = arith.constant 0 : index
    %c38 = arith.constant 38 : index
    %51 = vector.load %arg1[%c0_45, %c0_46, %c38] : memref<1x8x342xbf16, #tpu.memory_space<vmem>>, vector<1x8x288xbf16>
    %52 = vector.shape_cast %51 : vector<1x8x288xbf16> to vector<8x288xbf16>
    %cst_47 = arith.constant dense<0.000000e+00> : vector<8x288xf32>
    %53 = tpu.matmul %50, %52, %cst_47 {dimension_numbers = #tpu.dot_dimension_numbers<[1], [0], [0], [1], [0, 0, 1, 1], [], []>} : vector<8x8xbf16>, vector<8x288xbf16>, vector<8x288xf32> -> vector<8x288xf32>
    %54 = arith.addf %48, %53 : vector<8x288xf32>
    %c0_48 = arith.constant 0 : index
    %c0_49 = arith.constant 0 : index
    %55 = vector.load %arg3[%c0_48, %c0_49] : memref<8x1xf32, #tpu.memory_space<vmem>>, vector<8x1xf32>
    %56 = vector.broadcast %55 : vector<8x1xf32> to vector<8x288xf32>
    %57 = arith.addf %54, %56 : vector<8x288xf32>
    %58 = arith.negf %57 : vector<8x288xf32>
    %59 = math.exp %58 : vector<8x288xf32>
    %cst_50 = arith.constant 1.000000e+00 : f32
    %60 = vector.broadcast %cst_50 : f32 to vector<8x288xf32>
    %61 = arith.addf %60, %59 : vector<8x288xf32>
    %62 = arith.divf %60, %61 : vector<8x288xf32>
    %63 = arith.mulf %57, %62 : vector<8x288xf32>
    %64 = arith.truncf %63 : vector<8x288xf32> to vector<8x288xbf16>
    %c0_51 = arith.constant 0 : index
    %c0_52 = arith.constant 0 : index
    %c0_53 = arith.constant 0 : index
    %65 = vector.load %arg4[%c0_51, %c0_52, %c0_53] : memref<1x8x288xbf16, #tpu.memory_space<vmem>>, vector<1x8x288xbf16>
    %66 = vector.shape_cast %65 : vector<1x8x288xbf16> to vector<8x288xbf16>
    %67 = vector.shape_cast %64 : vector<8x288xbf16> to vector<1x8x288xbf16>
    tpu.vector_store %arg4[%c0_51, %c0_52, %c0_53], %67 {strides = array<i32>} : memref<1x8x288xbf16, #tpu.memory_space<vmem>>, vector<1x8x288xbf16>,
    return
  }
  func.func @transform_0(%arg0: i32) -> (i32, i32, i32) {
    %c0_i32 = arith.constant 0 : i32
    %c0_i32_0 = arith.constant 0 : i32
    %c0_i32_1 = arith.constant 0 : i32
    return %arg0, %c0_i32, %c0_i32_0 : i32, i32, i32
  }
  func.func @transform_1(%arg0: i32) -> (i32, i32, i32) {
    %c0_i32 = arith.constant 0 : i32
    %c0_i32_0 = arith.constant 0 : i32
    %c0_i32_1 = arith.constant 0 : i32
    %c0_i32_2 = arith.constant 0 : i32
    return %c0_i32, %c0_i32_0, %c0_i32_1 : i32, i32, i32
  }
  func.func @transform_2(%arg0: i32) -> (i32, i32) {
    %c0_i32 = arith.constant 0 : i32
    %c0_i32_0 = arith.constant 0 : i32
    %c0_i32_1 = arith.constant 0 : i32
    return %c0_i32, %c0_i32_0 : i32, i32
  }
  func.func @transform_3(%arg0: i32) -> (i32, i32, i32) {
    %c0_i32 = arith.constant 0 : i32
    %c0_i32_0 = arith.constant 0 : i32
    %c0_i32_1 = arith.constant 0 : i32
    return %arg0, %c0_i32, %c0_i32_0 : i32, i32, i32
  }
}

module attributes {stable_mosaic.version = 11 : i64} {
  func.func @_scsa_kernel(%arg0: i32, %arg1: memref<1x8x256xbf16, #tpu.memory_space<vmem>>, %arg2: memref<8x9xf32, #tpu.memory_space<vmem>>, %arg3: memref<8x10xf32, #tpu.memory_space<vmem>>, %arg4: memref<256x32xf32, #tpu.memory_space<vmem>>, %arg5: memref<16x144xf32, #tpu.memory_space<vmem>>, %arg6: memref<16x144xf32, #tpu.memory_space<vmem>>, %arg7: memref<16x256xf32, #tpu.memory_space<vmem>>, %arg8: memref<16x256xf32, #tpu.memory_space<vmem>>, %arg9: memref<256x4xf32, #tpu.memory_space<vmem>>, %arg10: memref<1x8x256xbf16, #tpu.memory_space<vmem>>) attributes {dimension_semantics = [#tpu.dimension_semantics<parallel>], iteration_bounds = array<i64: 2>, scalar_prefetch = 0 : i64, scratch_operands = 0 : i64, tpu.core_type = #tpu.core_type<tc>, window_params = [{transform_indices = @transform_0, window_bounds = array<i64: 1, 8, 256>}, {pipeline_mode = #tpu.pipeline_mode<synchronous>, transform_indices = @transform_1, window_bounds = array<i64: 8, 9>}, {pipeline_mode = #tpu.pipeline_mode<synchronous>, transform_indices = @transform_2, window_bounds = array<i64: 8, 10>}, {pipeline_mode = #tpu.pipeline_mode<synchronous>, transform_indices = @transform_3, window_bounds = array<i64: 256, 32>}, {pipeline_mode = #tpu.pipeline_mode<synchronous>, transform_indices = @transform_4, window_bounds = array<i64: 16, 144>}, {pipeline_mode = #tpu.pipeline_mode<synchronous>, transform_indices = @transform_5, window_bounds = array<i64: 16, 144>}, {pipeline_mode = #tpu.pipeline_mode<synchronous>, transform_indices = @transform_6, window_bounds = array<i64: 16, 256>}, {pipeline_mode = #tpu.pipeline_mode<synchronous>, transform_indices = @transform_7, window_bounds = array<i64: 16, 256>}, {pipeline_mode = #tpu.pipeline_mode<synchronous>, transform_indices = @transform_8, window_bounds = array<i64: 256, 4>}, {transform_indices = @transform_9, window_bounds = array<i64: 1, 8, 256>}]} {
    %c0 = arith.constant 0 : index
    %c0_0 = arith.constant 0 : index
    %c0_1 = arith.constant 0 : index
    %0 = vector.load %arg1[%c0, %c0_0, %c0_1] : memref<1x8x256xbf16, #tpu.memory_space<vmem>>, vector<1x8x256xbf16>
    %1 = vector.shape_cast %0 : vector<1x8x256xbf16> to vector<8x256xbf16>
    %2 = arith.extf %1 : vector<8x256xbf16> to vector<8x256xf32>
    %c0_2 = arith.constant 0 : index
    %c0_3 = arith.constant 0 : index
    %3 = vector.load %arg2[%c0_2, %c0_3] : memref<8x9xf32, #tpu.memory_space<vmem>>, vector<8x9xf32>
    %c0_4 = arith.constant 0 : index
    %c0_5 = arith.constant 0 : index
    %4 = vector.load %arg3[%c0_4, %c0_5] : memref<8x10xf32, #tpu.memory_space<vmem>>, vector<8x10xf32>
    %5 = vector.extract_strided_slice %4 {offsets = [0, 0], sizes = [8, 1], strides = [1, 1]} : vector<8x10xf32> to vector<8x1xf32>
    %6 = vector.extract_strided_slice %4 {offsets = [0, 1], sizes = [8, 1], strides = [1, 1]} : vector<8x10xf32> to vector<8x1xf32>
    %7 = vector.extract_strided_slice %4 {offsets = [0, 2], sizes = [8, 1], strides = [1, 1]} : vector<8x10xf32> to vector<8x1xf32>
    %8 = vector.extract_strided_slice %4 {offsets = [0, 3], sizes = [8, 1], strides = [1, 1]} : vector<8x10xf32> to vector<8x1xf32>
    %9 = vector.extract_strided_slice %4 {offsets = [0, 4], sizes = [8, 1], strides = [1, 1]} : vector<8x10xf32> to vector<8x1xf32>
    %10 = vector.extract_strided_slice %4 {offsets = [0, 5], sizes = [8, 1], strides = [1, 1]} : vector<8x10xf32> to vector<8x1xf32>
    %11 = vector.extract_strided_slice %4 {offsets = [0, 6], sizes = [8, 1], strides = [1, 1]} : vector<8x10xf32> to vector<8x1xf32>
    %12 = vector.extract_strided_slice %4 {offsets = [0, 7], sizes = [8, 1], strides = [1, 1]} : vector<8x10xf32> to vector<8x1xf32>
    %13 = vector.extract_strided_slice %4 {offsets = [0, 8], sizes = [8, 1], strides = [1, 1]} : vector<8x10xf32> to vector<8x1xf32>
    %14 = vector.extract_strided_slice %4 {offsets = [0, 9], sizes = [8, 1], strides = [1, 1]} : vector<8x10xf32> to vector<8x1xf32>
    %c0_6 = arith.constant 0 : index
    %c0_7 = arith.constant 0 : index
    %15 = vector.load %arg4[%c0_6, %c0_7] : memref<256x32xf32, #tpu.memory_space<vmem>>, vector<256x32xf32>
    %cst = arith.constant dense<0.000000e+00> : vector<8x32xf32>
    %16 = tpu.matmul %2, %15, %cst {dimension_numbers = #tpu.dot_dimension_numbers<[1], [0], [0], [1], [0, 0, 1, 1], [], []>} : vector<8x256xf32>, vector<256x32xf32>, vector<8x32xf32> -> vector<8x32xf32>
    %17 = vector.extract_strided_slice %16 {offsets = [0, 0], sizes = [8, 16], strides = [1, 1]} : vector<8x32xf32> to vector<8x16xf32>
    %c0_8 = arith.constant 0 : index
    %c0_9 = arith.constant 0 : index
    %18 = vector.load %arg5[%c0_8, %c0_9] : memref<16x144xf32, #tpu.memory_space<vmem>>, vector<16x144xf32>
    %cst_10 = arith.constant dense<0.000000e+00> : vector<8x144xf32>
    %19 = tpu.matmul %17, %18, %cst_10 {dimension_numbers = #tpu.dot_dimension_numbers<[1], [0], [0], [1], [0, 0, 1, 1], [], []>} : vector<8x16xf32>, vector<16x144xf32>, vector<8x144xf32> -> vector<8x144xf32>
    %20 = vector.extract_strided_slice %16 {offsets = [0, 16], sizes = [8, 16], strides = [1, 1]} : vector<8x32xf32> to vector<8x16xf32>
    %c0_11 = arith.constant 0 : index
    %c0_12 = arith.constant 0 : index
    %21 = vector.load %arg6[%c0_11, %c0_12] : memref<16x144xf32, #tpu.memory_space<vmem>>, vector<16x144xf32>
    %cst_13 = arith.constant dense<0.000000e+00> : vector<8x144xf32>
    %22 = tpu.matmul %20, %21, %cst_13 {dimension_numbers = #tpu.dot_dimension_numbers<[1], [0], [0], [1], [0, 0, 1, 1], [], []>} : vector<8x16xf32>, vector<16x144xf32>, vector<8x144xf32> -> vector<8x144xf32>
    %23 = tpu.iota {dimensions = array<i32: 0>} : vector<8x1xi32>
    %24 = vector.shape_cast %5 : vector<8x1xf32> to vector<8x1xf32>
    %25 = vector.broadcast %24 : vector<8x1xf32> to vector<8x16xf32>
    %26 = vector.extract_strided_slice %3 {offsets = [0, 0], sizes = [8, 1], strides = [1, 1]} : vector<8x9xf32> to vector<8x1xf32>
    %27 = vector.extract_strided_slice %19 {offsets = [0, 0], sizes = [8, 16], strides = [1, 1]} : vector<8x144xf32> to vector<8x16xf32>
    %28 = vector.broadcast %26 : vector<8x1xf32> to vector<8x16xf32>
    %29 = arith.mulf %28, %27 : vector<8x16xf32>
    %30 = arith.addf %25, %29 : vector<8x16xf32>
    %31 = vector.extract_strided_slice %3 {offsets = [0, 1], sizes = [8, 1], strides = [1, 1]} : vector<8x9xf32> to vector<8x1xf32>
    %32 = vector.extract_strided_slice %19 {offsets = [0, 16], sizes = [8, 16], strides = [1, 1]} : vector<8x144xf32> to vector<8x16xf32>
    %33 = vector.broadcast %31 : vector<8x1xf32> to vector<8x16xf32>
    %34 = arith.mulf %33, %32 : vector<8x16xf32>
    %35 = arith.addf %30, %34 : vector<8x16xf32>
    %36 = vector.extract_strided_slice %3 {offsets = [0, 2], sizes = [8, 1], strides = [1, 1]} : vector<8x9xf32> to vector<8x1xf32>
    %37 = vector.extract_strided_slice %19 {offsets = [0, 32], sizes = [8, 16], strides = [1, 1]} : vector<8x144xf32> to vector<8x16xf32>
    %38 = vector.broadcast %36 : vector<8x1xf32> to vector<8x16xf32>
    %39 = arith.mulf %38, %37 : vector<8x16xf32>
    %40 = arith.addf %35, %39 : vector<8x16xf32>
    %41 = vector.extract_strided_slice %3 {offsets = [0, 3], sizes = [8, 1], strides = [1, 1]} : vector<8x9xf32> to vector<8x1xf32>
    %42 = vector.extract_strided_slice %19 {offsets = [0, 48], sizes = [8, 16], strides = [1, 1]} : vector<8x144xf32> to vector<8x16xf32>
    %43 = vector.broadcast %41 : vector<8x1xf32> to vector<8x16xf32>
    %44 = arith.mulf %43, %42 : vector<8x16xf32>
    %45 = arith.addf %40, %44 : vector<8x16xf32>
    %46 = vector.extract_strided_slice %3 {offsets = [0, 4], sizes = [8, 1], strides = [1, 1]} : vector<8x9xf32> to vector<8x1xf32>
    %47 = vector.extract_strided_slice %19 {offsets = [0, 64], sizes = [8, 16], strides = [1, 1]} : vector<8x144xf32> to vector<8x16xf32>
    %48 = vector.broadcast %46 : vector<8x1xf32> to vector<8x16xf32>
    %49 = arith.mulf %48, %47 : vector<8x16xf32>
    %50 = arith.addf %45, %49 : vector<8x16xf32>
    %51 = vector.extract_strided_slice %3 {offsets = [0, 5], sizes = [8, 1], strides = [1, 1]} : vector<8x9xf32> to vector<8x1xf32>
    %52 = vector.extract_strided_slice %19 {offsets = [0, 80], sizes = [8, 16], strides = [1, 1]} : vector<8x144xf32> to vector<8x16xf32>
    %53 = vector.broadcast %51 : vector<8x1xf32> to vector<8x16xf32>
    %54 = arith.mulf %53, %52 : vector<8x16xf32>
    %55 = arith.addf %50, %54 : vector<8x16xf32>
    %56 = vector.extract_strided_slice %3 {offsets = [0, 6], sizes = [8, 1], strides = [1, 1]} : vector<8x9xf32> to vector<8x1xf32>
    %57 = vector.extract_strided_slice %19 {offsets = [0, 96], sizes = [8, 16], strides = [1, 1]} : vector<8x144xf32> to vector<8x16xf32>
    %58 = vector.broadcast %56 : vector<8x1xf32> to vector<8x16xf32>
    %59 = arith.mulf %58, %57 : vector<8x16xf32>
    %60 = arith.addf %55, %59 : vector<8x16xf32>
    %61 = vector.extract_strided_slice %3 {offsets = [0, 7], sizes = [8, 1], strides = [1, 1]} : vector<8x9xf32> to vector<8x1xf32>
    %62 = vector.extract_strided_slice %19 {offsets = [0, 112], sizes = [8, 16], strides = [1, 1]} : vector<8x144xf32> to vector<8x16xf32>
    %63 = vector.broadcast %61 : vector<8x1xf32> to vector<8x16xf32>
    %64 = arith.mulf %63, %62 : vector<8x16xf32>
    %65 = arith.addf %60, %64 : vector<8x16xf32>
    %66 = vector.extract_strided_slice %3 {offsets = [0, 8], sizes = [8, 1], strides = [1, 1]} : vector<8x9xf32> to vector<8x1xf32>
    %67 = vector.extract_strided_slice %19 {offsets = [0, 128], sizes = [8, 16], strides = [1, 1]} : vector<8x144xf32> to vector<8x16xf32>
    %68 = vector.broadcast %66 : vector<8x1xf32> to vector<8x16xf32>
    %69 = arith.mulf %68, %67 : vector<8x16xf32>
    %70 = arith.addf %65, %69 : vector<8x16xf32>
    %cst_14 = arith.constant 0.000000e+00 : f32
    %71 = vector.broadcast %cst_14 : f32 to vector<8x1xf32>
    %cst_15 = arith.constant 0.000000e+00 : f32
    %72 = vector.broadcast %cst_15 : f32 to vector<8x1xf32>
    %c0_i32 = arith.constant 0 : i32
    %73 = vector.broadcast %c0_i32 : i32 to vector<8x1xi32>
    %74 = arith.cmpi sge, %23, %73 : vector<8x1xi32>
    %c2_i32 = arith.constant 2 : i32
    %75 = vector.broadcast %c2_i32 : i32 to vector<8x1xi32>
    %76 = arith.cmpi slt, %23, %75 : vector<8x1xi32>
    %77 = arith.andi %74, %76 : vector<8x1xi1>
    %78 = arith.extui %77 : vector<8x1xi1> to vector<8x1xi32>
    %79 = arith.sitofp %78 : vector<8x1xi32> to vector<8x1xf32>
    %80 = vector.broadcast %79 : vector<8x1xf32> to vector<8x16xf32>
    %81 = arith.mulf %70, %80 : vector<8x16xf32>
    %82 = vector.shape_cast %81 : vector<8x16xf32> to vector<1x8x16xf32>
    %cst_16 = arith.constant dense<0.000000e+00> : vector<1xf32>
    %83 = vector.multi_reduction <add>, %82, %cst_16 [1, 2] : vector<1x8x16xf32> to vector<1xf32>
    %84 = vector.shape_cast %83 : vector<1xf32> to vector<1x1x1xf32>
    %85 = vector.extract %84[0, 0, 0] : f32 from vector<1x1x1xf32>
    %cst_17 = arith.constant 3.125000e-02 : f32
    %86 = arith.mulf %85, %cst_17 : f32
    %87 = vector.broadcast %86 : f32 to vector<8x16xf32>
    %88 = arith.subf %70, %87 : vector<8x16xf32>
    %89 = arith.mulf %88, %88 : vector<8x16xf32>
    %90 = vector.broadcast %79 : vector<8x1xf32> to vector<8x16xf32>
    %91 = arith.mulf %89, %90 : vector<8x16xf32>
    %92 = vector.shape_cast %91 : vector<8x16xf32> to vector<1x8x16xf32>
    %cst_18 = arith.constant dense<0.000000e+00> : vector<1xf32>
    %93 = vector.multi_reduction <add>, %92, %cst_18 [1, 2] : vector<1x8x16xf32> to vector<1xf32>
    %94 = vector.shape_cast %93 : vector<1xf32> to vector<1x1x1xf32>
    %95 = vector.extract %94[0, 0, 0] : f32 from vector<1x1x1xf32>
    %cst_19 = arith.constant 3.125000e-02 : f32
    %96 = arith.mulf %95, %cst_19 : f32
    %97 = vector.broadcast %86 : f32 to vector<8x1xf32>
    %98 = arith.mulf %79, %97 : vector<8x1xf32>
    %99 = arith.addf %71, %98 : vector<8x1xf32>
    %100 = vector.broadcast %96 : f32 to vector<8x1xf32>
    %101 = arith.mulf %79, %100 : vector<8x1xf32>
    %102 = arith.addf %72, %101 : vector<8x1xf32>
    %c2_i32_20 = arith.constant 2 : i32
    %103 = vector.broadcast %c2_i32_20 : i32 to vector<8x1xi32>
    %104 = arith.cmpi sge, %23, %103 : vector<8x1xi32>
    %c4_i32 = arith.constant 4 : i32
    %105 = vector.broadcast %c4_i32 : i32 to vector<8x1xi32>
    %106 = arith.cmpi slt, %23, %105 : vector<8x1xi32>
    %107 = arith.andi %104, %106 : vector<8x1xi1>
    %108 = arith.extui %107 : vector<8x1xi1> to vector<8x1xi32>
    %109 = arith.sitofp %108 : vector<8x1xi32> to vector<8x1xf32>
    %110 = vector.broadcast %109 : vector<8x1xf32> to vector<8x16xf32>
    %111 = arith.mulf %70, %110 : vector<8x16xf32>
    %112 = vector.shape_cast %111 : vector<8x16xf32> to vector<1x8x16xf32>
    %cst_21 = arith.constant dense<0.000000e+00> : vector<1xf32>
    %113 = vector.multi_reduction <add>, %112, %cst_21 [1, 2] : vector<1x8x16xf32> to vector<1xf32>
    %114 = vector.shape_cast %113 : vector<1xf32> to vector<1x1x1xf32>
    %115 = vector.extract %114[0, 0, 0] : f32 from vector<1x1x1xf32>
    %cst_22 = arith.constant 3.125000e-02 : f32
    %116 = arith.mulf %115, %cst_22 : f32
    %117 = vector.broadcast %116 : f32 to vector<8x16xf32>
    %118 = arith.subf %70, %117 : vector<8x16xf32>
    %119 = arith.mulf %118, %118 : vector<8x16xf32>
    %120 = vector.broadcast %109 : vector<8x1xf32> to vector<8x16xf32>
    %121 = arith.mulf %119, %120 : vector<8x16xf32>
    %122 = vector.shape_cast %121 : vector<8x16xf32> to vector<1x8x16xf32>
    %cst_23 = arith.constant dense<0.000000e+00> : vector<1xf32>
    %123 = vector.multi_reduction <add>, %122, %cst_23 [1, 2] : vector<1x8x16xf32> to vector<1xf32>
    %124 = vector.shape_cast %123 : vector<1xf32> to vector<1x1x1xf32>
    %125 = vector.extract %124[0, 0, 0] : f32 from vector<1x1x1xf32>
    %cst_24 = arith.constant 3.125000e-02 : f32
    %126 = arith.mulf %125, %cst_24 : f32
    %127 = vector.broadcast %116 : f32 to vector<8x1xf32>
    %128 = arith.mulf %109, %127 : vector<8x1xf32>
    %129 = arith.addf %99, %128 : vector<8x1xf32>
    %130 = vector.broadcast %126 : f32 to vector<8x1xf32>
    %131 = arith.mulf %109, %130 : vector<8x1xf32>
    %132 = arith.addf %102, %131 : vector<8x1xf32>
    %c4_i32_25 = arith.constant 4 : i32
    %133 = vector.broadcast %c4_i32_25 : i32 to vector<8x1xi32>
    %134 = arith.cmpi sge, %23, %133 : vector<8x1xi32>
    %c6_i32 = arith.constant 6 : i32
    %135 = vector.broadcast %c6_i32 : i32 to vector<8x1xi32>
    %136 = arith.cmpi slt, %23, %135 : vector<8x1xi32>
    %137 = arith.andi %134, %136 : vector<8x1xi1>
    %138 = arith.extui %137 : vector<8x1xi1> to vector<8x1xi32>
    %139 = arith.sitofp %138 : vector<8x1xi32> to vector<8x1xf32>
    %140 = vector.broadcast %139 : vector<8x1xf32> to vector<8x16xf32>
    %141 = arith.mulf %70, %140 : vector<8x16xf32>
    %142 = vector.shape_cast %141 : vector<8x16xf32> to vector<1x8x16xf32>
    %cst_26 = arith.constant dense<0.000000e+00> : vector<1xf32>
    %143 = vector.multi_reduction <add>, %142, %cst_26 [1, 2] : vector<1x8x16xf32> to vector<1xf32>
    %144 = vector.shape_cast %143 : vector<1xf32> to vector<1x1x1xf32>
    %145 = vector.extract %144[0, 0, 0] : f32 from vector<1x1x1xf32>
    %cst_27 = arith.constant 3.125000e-02 : f32
    %146 = arith.mulf %145, %cst_27 : f32
    %147 = vector.broadcast %146 : f32 to vector<8x16xf32>
    %148 = arith.subf %70, %147 : vector<8x16xf32>
    %149 = arith.mulf %148, %148 : vector<8x16xf32>
    %150 = vector.broadcast %139 : vector<8x1xf32> to vector<8x16xf32>
    %151 = arith.mulf %149, %150 : vector<8x16xf32>
    %152 = vector.shape_cast %151 : vector<8x16xf32> to vector<1x8x16xf32>
    %cst_28 = arith.constant dense<0.000000e+00> : vector<1xf32>
    %153 = vector.multi_reduction <add>, %152, %cst_28 [1, 2] : vector<1x8x16xf32> to vector<1xf32>
    %154 = vector.shape_cast %153 : vector<1xf32> to vector<1x1x1xf32>
    %155 = vector.extract %154[0, 0, 0] : f32 from vector<1x1x1xf32>
    %cst_29 = arith.constant 3.125000e-02 : f32
    %156 = arith.mulf %155, %cst_29 : f32
    %157 = vector.broadcast %146 : f32 to vector<8x1xf32>
    %158 = arith.mulf %139, %157 : vector<8x1xf32>
    %159 = arith.addf %129, %158 : vector<8x1xf32>
    %160 = vector.broadcast %156 : f32 to vector<8x1xf32>
    %161 = arith.mulf %139, %160 : vector<8x1xf32>
    %162 = arith.addf %132, %161 : vector<8x1xf32>
    %c6_i32_30 = arith.constant 6 : i32
    %163 = vector.broadcast %c6_i32_30 : i32 to vector<8x1xi32>
    %164 = arith.cmpi sge, %23, %163 : vector<8x1xi32>
    %c8_i32 = arith.constant 8 : i32
    %165 = vector.broadcast %c8_i32 : i32 to vector<8x1xi32>
    %166 = arith.cmpi slt, %23, %165 : vector<8x1xi32>
    %167 = arith.andi %164, %166 : vector<8x1xi1>
    %168 = arith.extui %167 : vector<8x1xi1> to vector<8x1xi32>
    %169 = arith.sitofp %168 : vector<8x1xi32> to vector<8x1xf32>
    %170 = vector.broadcast %169 : vector<8x1xf32> to vector<8x16xf32>
    %171 = arith.mulf %70, %170 : vector<8x16xf32>
    %172 = vector.shape_cast %171 : vector<8x16xf32> to vector<1x8x16xf32>
    %cst_31 = arith.constant dense<0.000000e+00> : vector<1xf32>
    %173 = vector.multi_reduction <add>, %172, %cst_31 [1, 2] : vector<1x8x16xf32> to vector<1xf32>
    %174 = vector.shape_cast %173 : vector<1xf32> to vector<1x1x1xf32>
    %175 = vector.extract %174[0, 0, 0] : f32 from vector<1x1x1xf32>
    %cst_32 = arith.constant 3.125000e-02 : f32
    %176 = arith.mulf %175, %cst_32 : f32
    %177 = vector.broadcast %176 : f32 to vector<8x16xf32>
    %178 = arith.subf %70, %177 : vector<8x16xf32>
    %179 = arith.mulf %178, %178 : vector<8x16xf32>
    %180 = vector.broadcast %169 : vector<8x1xf32> to vector<8x16xf32>
    %181 = arith.mulf %179, %180 : vector<8x16xf32>
    %182 = vector.shape_cast %181 : vector<8x16xf32> to vector<1x8x16xf32>
    %cst_33 = arith.constant dense<0.000000e+00> : vector<1xf32>
    %183 = vector.multi_reduction <add>, %182, %cst_33 [1, 2] : vector<1x8x16xf32> to vector<1xf32>
    %184 = vector.shape_cast %183 : vector<1xf32> to vector<1x1x1xf32>
    %185 = vector.extract %184[0, 0, 0] : f32 from vector<1x1x1xf32>
    %cst_34 = arith.constant 3.125000e-02 : f32
    %186 = arith.mulf %185, %cst_34 : f32
    %187 = vector.broadcast %176 : f32 to vector<8x1xf32>
    %188 = arith.mulf %169, %187 : vector<8x1xf32>
    %189 = arith.addf %159, %188 : vector<8x1xf32>
    %190 = vector.broadcast %186 : f32 to vector<8x1xf32>
    %191 = arith.mulf %169, %190 : vector<8x1xf32>
    %192 = arith.addf %162, %191 : vector<8x1xf32>
    %193 = vector.broadcast %189 : vector<8x1xf32> to vector<8x16xf32>
    %194 = arith.subf %70, %193 : vector<8x16xf32>
    %cst_35 = arith.constant 9.99999974E-6 : f32
    %195 = vector.broadcast %cst_35 : f32 to vector<8x1xf32>
    %196 = arith.addf %192, %195 : vector<8x1xf32>
    %197 = math.rsqrt %196 : vector<8x1xf32>
    %198 = vector.broadcast %197 : vector<8x1xf32> to vector<8x16xf32>
    %199 = arith.mulf %194, %198 : vector<8x16xf32>
    %200 = vector.broadcast %6 : vector<8x1xf32> to vector<8x16xf32>
    %201 = arith.mulf %199, %200 : vector<8x16xf32>
    %202 = vector.broadcast %7 : vector<8x1xf32> to vector<8x16xf32>
    %203 = arith.addf %201, %202 : vector<8x16xf32>
    %204 = arith.negf %203 : vector<8x16xf32>
    %205 = math.exp %204 : vector<8x16xf32>
    %cst_36 = arith.constant 1.000000e+00 : f32
    %206 = vector.broadcast %cst_36 : f32 to vector<8x16xf32>
    %207 = arith.addf %206, %205 : vector<8x16xf32>
    %208 = arith.divf %206, %207 : vector<8x16xf32>
    %209 = vector.shape_cast %5 : vector<8x1xf32> to vector<8x1xf32>
    %210 = vector.broadcast %209 : vector<8x1xf32> to vector<8x16xf32>
    %211 = vector.extract_strided_slice %3 {offsets = [0, 0], sizes = [8, 1], strides = [1, 1]} : vector<8x9xf32> to vector<8x1xf32>
    %212 = vector.extract_strided_slice %22 {offsets = [0, 0], sizes = [8, 16], strides = [1, 1]} : vector<8x144xf32> to vector<8x16xf32>
    %213 = vector.broadcast %211 : vector<8x1xf32> to vector<8x16xf32>
    %214 = arith.mulf %213, %212 : vector<8x16xf32>
    %215 = arith.addf %210, %214 : vector<8x16xf32>
    %216 = vector.extract_strided_slice %3 {offsets = [0, 1], sizes = [8, 1], strides = [1, 1]} : vector<8x9xf32> to vector<8x1xf32>
    %217 = vector.extract_strided_slice %22 {offsets = [0, 16], sizes = [8, 16], strides = [1, 1]} : vector<8x144xf32> to vector<8x16xf32>
    %218 = vector.broadcast %216 : vector<8x1xf32> to vector<8x16xf32>
    %219 = arith.mulf %218, %217 : vector<8x16xf32>
    %220 = arith.addf %215, %219 : vector<8x16xf32>
    %221 = vector.extract_strided_slice %3 {offsets = [0, 2], sizes = [8, 1], strides = [1, 1]} : vector<8x9xf32> to vector<8x1xf32>
    %222 = vector.extract_strided_slice %22 {offsets = [0, 32], sizes = [8, 16], strides = [1, 1]} : vector<8x144xf32> to vector<8x16xf32>
    %223 = vector.broadcast %221 : vector<8x1xf32> to vector<8x16xf32>
    %224 = arith.mulf %223, %222 : vector<8x16xf32>
    %225 = arith.addf %220, %224 : vector<8x16xf32>
    %226 = vector.extract_strided_slice %3 {offsets = [0, 3], sizes = [8, 1], strides = [1, 1]} : vector<8x9xf32> to vector<8x1xf32>
    %227 = vector.extract_strided_slice %22 {offsets = [0, 48], sizes = [8, 16], strides = [1, 1]} : vector<8x144xf32> to vector<8x16xf32>
    %228 = vector.broadcast %226 : vector<8x1xf32> to vector<8x16xf32>
    %229 = arith.mulf %228, %227 : vector<8x16xf32>
    %230 = arith.addf %225, %229 : vector<8x16xf32>
    %231 = vector.extract_strided_slice %3 {offsets = [0, 4], sizes = [8, 1], strides = [1, 1]} : vector<8x9xf32> to vector<8x1xf32>
    %232 = vector.extract_strided_slice %22 {offsets = [0, 64], sizes = [8, 16], strides = [1, 1]} : vector<8x144xf32> to vector<8x16xf32>
    %233 = vector.broadcast %231 : vector<8x1xf32> to vector<8x16xf32>
    %234 = arith.mulf %233, %232 : vector<8x16xf32>
    %235 = arith.addf %230, %234 : vector<8x16xf32>
    %236 = vector.extract_strided_slice %3 {offsets = [0, 5], sizes = [8, 1], strides = [1, 1]} : vector<8x9xf32> to vector<8x1xf32>
    %237 = vector.extract_strided_slice %22 {offsets = [0, 80], sizes = [8, 16], strides = [1, 1]} : vector<8x144xf32> to vector<8x16xf32>
    %238 = vector.broadcast %236 : vector<8x1xf32> to vector<8x16xf32>
    %239 = arith.mulf %238, %237 : vector<8x16xf32>
    %240 = arith.addf %235, %239 : vector<8x16xf32>
    %241 = vector.extract_strided_slice %3 {offsets = [0, 6], sizes = [8, 1], strides = [1, 1]} : vector<8x9xf32> to vector<8x1xf32>
    %242 = vector.extract_strided_slice %22 {offsets = [0, 96], sizes = [8, 16], strides = [1, 1]} : vector<8x144xf32> to vector<8x16xf32>
    %243 = vector.broadcast %241 : vector<8x1xf32> to vector<8x16xf32>
    %244 = arith.mulf %243, %242 : vector<8x16xf32>
    %245 = arith.addf %240, %244 : vector<8x16xf32>
    %246 = vector.extract_strided_slice %3 {offsets = [0, 7], sizes = [8, 1], strides = [1, 1]} : vector<8x9xf32> to vector<8x1xf32>
    %247 = vector.extract_strided_slice %22 {offsets = [0, 112], sizes = [8, 16], strides = [1, 1]} : vector<8x144xf32> to vector<8x16xf32>
    %248 = vector.broadcast %246 : vector<8x1xf32> to vector<8x16xf32>
    %249 = arith.mulf %248, %247 : vector<8x16xf32>
    %250 = arith.addf %245, %249 : vector<8x16xf32>
    %251 = vector.extract_strided_slice %3 {offsets = [0, 8], sizes = [8, 1], strides = [1, 1]} : vector<8x9xf32> to vector<8x1xf32>
    %252 = vector.extract_strided_slice %22 {offsets = [0, 128], sizes = [8, 16], strides = [1, 1]} : vector<8x144xf32> to vector<8x16xf32>
    %253 = vector.broadcast %251 : vector<8x1xf32> to vector<8x16xf32>
    %254 = arith.mulf %253, %252 : vector<8x16xf32>
    %255 = arith.addf %250, %254 : vector<8x16xf32>
    %cst_37 = arith.constant 0.000000e+00 : f32
    %256 = vector.broadcast %cst_37 : f32 to vector<8x1xf32>
    %cst_38 = arith.constant 0.000000e+00 : f32
    %257 = vector.broadcast %cst_38 : f32 to vector<8x1xf32>
    %c0_i32_39 = arith.constant 0 : i32
    %258 = vector.broadcast %c0_i32_39 : i32 to vector<8x1xi32>
    %259 = arith.cmpi sge, %23, %258 : vector<8x1xi32>
    %c2_i32_40 = arith.constant 2 : i32
    %260 = vector.broadcast %c2_i32_40 : i32 to vector<8x1xi32>
    %261 = arith.cmpi slt, %23, %260 : vector<8x1xi32>
    %262 = arith.andi %259, %261 : vector<8x1xi1>
    %263 = arith.extui %262 : vector<8x1xi1> to vector<8x1xi32>
    %264 = arith.sitofp %263 : vector<8x1xi32> to vector<8x1xf32>
    %265 = vector.broadcast %264 : vector<8x1xf32> to vector<8x16xf32>
    %266 = arith.mulf %255, %265 : vector<8x16xf32>
    %267 = vector.shape_cast %266 : vector<8x16xf32> to vector<1x8x16xf32>
    %cst_41 = arith.constant dense<0.000000e+00> : vector<1xf32>
    %268 = vector.multi_reduction <add>, %267, %cst_41 [1, 2] : vector<1x8x16xf32> to vector<1xf32>
    %269 = vector.shape_cast %268 : vector<1xf32> to vector<1x1x1xf32>
    %270 = vector.extract %269[0, 0, 0] : f32 from vector<1x1x1xf32>
    %cst_42 = arith.constant 3.125000e-02 : f32
    %271 = arith.mulf %270, %cst_42 : f32
    %272 = vector.broadcast %271 : f32 to vector<8x16xf32>
    %273 = arith.subf %255, %272 : vector<8x16xf32>
    %274 = arith.mulf %273, %273 : vector<8x16xf32>
    %275 = vector.broadcast %264 : vector<8x1xf32> to vector<8x16xf32>
    %276 = arith.mulf %274, %275 : vector<8x16xf32>
    %277 = vector.shape_cast %276 : vector<8x16xf32> to vector<1x8x16xf32>
    %cst_43 = arith.constant dense<0.000000e+00> : vector<1xf32>
    %278 = vector.multi_reduction <add>, %277, %cst_43 [1, 2] : vector<1x8x16xf32> to vector<1xf32>
    %279 = vector.shape_cast %278 : vector<1xf32> to vector<1x1x1xf32>
    %280 = vector.extract %279[0, 0, 0] : f32 from vector<1x1x1xf32>
    %cst_44 = arith.constant 3.125000e-02 : f32
    %281 = arith.mulf %280, %cst_44 : f32
    %282 = vector.broadcast %271 : f32 to vector<8x1xf32>
    %283 = arith.mulf %264, %282 : vector<8x1xf32>
    %284 = arith.addf %256, %283 : vector<8x1xf32>
    %285 = vector.broadcast %281 : f32 to vector<8x1xf32>
    %286 = arith.mulf %264, %285 : vector<8x1xf32>
    %287 = arith.addf %257, %286 : vector<8x1xf32>
    %c2_i32_45 = arith.constant 2 : i32
    %288 = vector.broadcast %c2_i32_45 : i32 to vector<8x1xi32>
    %289 = arith.cmpi sge, %23, %288 : vector<8x1xi32>
    %c4_i32_46 = arith.constant 4 : i32
    %290 = vector.broadcast %c4_i32_46 : i32 to vector<8x1xi32>
    %291 = arith.cmpi slt, %23, %290 : vector<8x1xi32>
    %292 = arith.andi %289, %291 : vector<8x1xi1>
    %293 = arith.extui %292 : vector<8x1xi1> to vector<8x1xi32>
    %294 = arith.sitofp %293 : vector<8x1xi32> to vector<8x1xf32>
    %295 = vector.broadcast %294 : vector<8x1xf32> to vector<8x16xf32>
    %296 = arith.mulf %255, %295 : vector<8x16xf32>
    %297 = vector.shape_cast %296 : vector<8x16xf32> to vector<1x8x16xf32>
    %cst_47 = arith.constant dense<0.000000e+00> : vector<1xf32>
    %298 = vector.multi_reduction <add>, %297, %cst_47 [1, 2] : vector<1x8x16xf32> to vector<1xf32>
    %299 = vector.shape_cast %298 : vector<1xf32> to vector<1x1x1xf32>
    %300 = vector.extract %299[0, 0, 0] : f32 from vector<1x1x1xf32>
    %cst_48 = arith.constant 3.125000e-02 : f32
    %301 = arith.mulf %300, %cst_48 : f32
    %302 = vector.broadcast %301 : f32 to vector<8x16xf32>
    %303 = arith.subf %255, %302 : vector<8x16xf32>
    %304 = arith.mulf %303, %303 : vector<8x16xf32>
    %305 = vector.broadcast %294 : vector<8x1xf32> to vector<8x16xf32>
    %306 = arith.mulf %304, %305 : vector<8x16xf32>
    %307 = vector.shape_cast %306 : vector<8x16xf32> to vector<1x8x16xf32>
    %cst_49 = arith.constant dense<0.000000e+00> : vector<1xf32>
    %308 = vector.multi_reduction <add>, %307, %cst_49 [1, 2] : vector<1x8x16xf32> to vector<1xf32>
    %309 = vector.shape_cast %308 : vector<1xf32> to vector<1x1x1xf32>
    %310 = vector.extract %309[0, 0, 0] : f32 from vector<1x1x1xf32>
    %cst_50 = arith.constant 3.125000e-02 : f32
    %311 = arith.mulf %310, %cst_50 : f32
    %312 = vector.broadcast %301 : f32 to vector<8x1xf32>
    %313 = arith.mulf %294, %312 : vector<8x1xf32>
    %314 = arith.addf %284, %313 : vector<8x1xf32>
    %315 = vector.broadcast %311 : f32 to vector<8x1xf32>
    %316 = arith.mulf %294, %315 : vector<8x1xf32>
    %317 = arith.addf %287, %316 : vector<8x1xf32>
    %c4_i32_51 = arith.constant 4 : i32
    %318 = vector.broadcast %c4_i32_51 : i32 to vector<8x1xi32>
    %319 = arith.cmpi sge, %23, %318 : vector<8x1xi32>
    %c6_i32_52 = arith.constant 6 : i32
    %320 = vector.broadcast %c6_i32_52 : i32 to vector<8x1xi32>
    %321 = arith.cmpi slt, %23, %320 : vector<8x1xi32>
    %322 = arith.andi %319, %321 : vector<8x1xi1>
    %323 = arith.extui %322 : vector<8x1xi1> to vector<8x1xi32>
    %324 = arith.sitofp %323 : vector<8x1xi32> to vector<8x1xf32>
    %325 = vector.broadcast %324 : vector<8x1xf32> to vector<8x16xf32>
    %326 = arith.mulf %255, %325 : vector<8x16xf32>
    %327 = vector.shape_cast %326 : vector<8x16xf32> to vector<1x8x16xf32>
    %cst_53 = arith.constant dense<0.000000e+00> : vector<1xf32>
    %328 = vector.multi_reduction <add>, %327, %cst_53 [1, 2] : vector<1x8x16xf32> to vector<1xf32>
    %329 = vector.shape_cast %328 : vector<1xf32> to vector<1x1x1xf32>
    %330 = vector.extract %329[0, 0, 0] : f32 from vector<1x1x1xf32>
    %cst_54 = arith.constant 3.125000e-02 : f32
    %331 = arith.mulf %330, %cst_54 : f32
    %332 = vector.broadcast %331 : f32 to vector<8x16xf32>
    %333 = arith.subf %255, %332 : vector<8x16xf32>
    %334 = arith.mulf %333, %333 : vector<8x16xf32>
    %335 = vector.broadcast %324 : vector<8x1xf32> to vector<8x16xf32>
    %336 = arith.mulf %334, %335 : vector<8x16xf32>
    %337 = vector.shape_cast %336 : vector<8x16xf32> to vector<1x8x16xf32>
    %cst_55 = arith.constant dense<0.000000e+00> : vector<1xf32>
    %338 = vector.multi_reduction <add>, %337, %cst_55 [1, 2] : vector<1x8x16xf32> to vector<1xf32>
    %339 = vector.shape_cast %338 : vector<1xf32> to vector<1x1x1xf32>
    %340 = vector.extract %339[0, 0, 0] : f32 from vector<1x1x1xf32>
    %cst_56 = arith.constant 3.125000e-02 : f32
    %341 = arith.mulf %340, %cst_56 : f32
    %342 = vector.broadcast %331 : f32 to vector<8x1xf32>
    %343 = arith.mulf %324, %342 : vector<8x1xf32>
    %344 = arith.addf %314, %343 : vector<8x1xf32>
    %345 = vector.broadcast %341 : f32 to vector<8x1xf32>
    %346 = arith.mulf %324, %345 : vector<8x1xf32>
    %347 = arith.addf %317, %346 : vector<8x1xf32>
    %c6_i32_57 = arith.constant 6 : i32
    %348 = vector.broadcast %c6_i32_57 : i32 to vector<8x1xi32>
    %349 = arith.cmpi sge, %23, %348 : vector<8x1xi32>
    %c8_i32_58 = arith.constant 8 : i32
    %350 = vector.broadcast %c8_i32_58 : i32 to vector<8x1xi32>
    %351 = arith.cmpi slt, %23, %350 : vector<8x1xi32>
    %352 = arith.andi %349, %351 : vector<8x1xi1>
    %353 = arith.extui %352 : vector<8x1xi1> to vector<8x1xi32>
    %354 = arith.sitofp %353 : vector<8x1xi32> to vector<8x1xf32>
    %355 = vector.broadcast %354 : vector<8x1xf32> to vector<8x16xf32>
    %356 = arith.mulf %255, %355 : vector<8x16xf32>
    %357 = vector.shape_cast %356 : vector<8x16xf32> to vector<1x8x16xf32>
    %cst_59 = arith.constant dense<0.000000e+00> : vector<1xf32>
    %358 = vector.multi_reduction <add>, %357, %cst_59 [1, 2] : vector<1x8x16xf32> to vector<1xf32>
    %359 = vector.shape_cast %358 : vector<1xf32> to vector<1x1x1xf32>
    %360 = vector.extract %359[0, 0, 0] : f32 from vector<1x1x1xf32>
    %cst_60 = arith.constant 3.125000e-02 : f32
    %361 = arith.mulf %360, %cst_60 : f32
    %362 = vector.broadcast %361 : f32 to vector<8x16xf32>
    %363 = arith.subf %255, %362 : vector<8x16xf32>
    %364 = arith.mulf %363, %363 : vector<8x16xf32>
    %365 = vector.broadcast %354 : vector<8x1xf32> to vector<8x16xf32>
    %366 = arith.mulf %364, %365 : vector<8x16xf32>
    %367 = vector.shape_cast %366 : vector<8x16xf32> to vector<1x8x16xf32>
    %cst_61 = arith.constant dense<0.000000e+00> : vector<1xf32>
    %368 = vector.multi_reduction <add>, %367, %cst_61 [1, 2] : vector<1x8x16xf32> to vector<1xf32>
    %369 = vector.shape_cast %368 : vector<1xf32> to vector<1x1x1xf32>
    %370 = vector.extract %369[0, 0, 0] : f32 from vector<1x1x1xf32>
    %cst_62 = arith.constant 3.125000e-02 : f32
    %371 = arith.mulf %370, %cst_62 : f32
    %372 = vector.broadcast %361 : f32 to vector<8x1xf32>
    %373 = arith.mulf %354, %372 : vector<8x1xf32>
    %374 = arith.addf %344, %373 : vector<8x1xf32>
    %375 = vector.broadcast %371 : f32 to vector<8x1xf32>
    %376 = arith.mulf %354, %375 : vector<8x1xf32>
    %377 = arith.addf %347, %376 : vector<8x1xf32>
    %378 = vector.broadcast %374 : vector<8x1xf32> to vector<8x16xf32>
    %379 = arith.subf %255, %378 : vector<8x16xf32>
    %cst_63 = arith.constant 9.99999974E-6 : f32
    %380 = vector.broadcast %cst_63 : f32 to vector<8x1xf32>
    %381 = arith.addf %377, %380 : vector<8x1xf32>
    %382 = math.rsqrt %381 : vector<8x1xf32>
    %383 = vector.broadcast %382 : vector<8x1xf32> to vector<8x16xf32>
    %384 = arith.mulf %379, %383 : vector<8x16xf32>
    %385 = vector.broadcast %8 : vector<8x1xf32> to vector<8x16xf32>
    %386 = arith.mulf %384, %385 : vector<8x16xf32>
    %387 = vector.broadcast %9 : vector<8x1xf32> to vector<8x16xf32>
    %388 = arith.addf %386, %387 : vector<8x16xf32>
    %389 = arith.negf %388 : vector<8x16xf32>
    %390 = math.exp %389 : vector<8x16xf32>
    %cst_64 = arith.constant 1.000000e+00 : f32
    %391 = vector.broadcast %cst_64 : f32 to vector<8x16xf32>
    %392 = arith.addf %391, %390 : vector<8x16xf32>
    %393 = arith.divf %391, %392 : vector<8x16xf32>
    %c0_65 = arith.constant 0 : index
    %c0_66 = arith.constant 0 : index
    %394 = vector.load %arg7[%c0_65, %c0_66] : memref<16x256xf32, #tpu.memory_space<vmem>>, vector<16x256xf32>
    %cst_67 = arith.constant dense<0.000000e+00> : vector<8x256xf32>
    %395 = tpu.matmul %208, %394, %cst_67 {dimension_numbers = #tpu.dot_dimension_numbers<[1], [0], [0], [1], [0, 0, 1, 1], [], []>} : vector<8x16xf32>, vector<16x256xf32>, vector<8x256xf32> -> vector<8x256xf32>
    %c0_68 = arith.constant 0 : index
    %c0_69 = arith.constant 0 : index
    %396 = vector.load %arg8[%c0_68, %c0_69] : memref<16x256xf32, #tpu.memory_space<vmem>>, vector<16x256xf32>
    %cst_70 = arith.constant dense<0.000000e+00> : vector<8x256xf32>
    %397 = tpu.matmul %393, %396, %cst_70 {dimension_numbers = #tpu.dot_dimension_numbers<[1], [0], [0], [1], [0, 0, 1, 1], [], []>} : vector<8x16xf32>, vector<16x256xf32>, vector<8x256xf32> -> vector<8x256xf32>
    %398 = arith.mulf %2, %395 : vector<8x256xf32>
    %399 = arith.mulf %398, %397 : vector<8x256xf32>
    %c0_71 = arith.constant 0 : index
    %c0_72 = arith.constant 0 : index
    %400 = vector.load %arg9[%c0_71, %c0_72] : memref<256x4xf32, #tpu.memory_space<vmem>>, vector<256x4xf32>
    %cst_73 = arith.constant dense<0.000000e+00> : vector<8x4xf32>
    %401 = tpu.matmul %399, %400, %cst_73 {dimension_numbers = #tpu.dot_dimension_numbers<[1], [0], [0], [1], [0, 0, 1, 1], [], []>} : vector<8x256xf32>, vector<256x4xf32>, vector<8x4xf32> -> vector<8x4xf32>
    %402 = vector.shape_cast %401 : vector<8x4xf32> to vector<1x8x4xf32>
    %cst_74 = arith.constant dense<0.000000e+00> : vector<1xf32>
    %403 = vector.multi_reduction <add>, %402, %cst_74 [1, 2] : vector<1x8x4xf32> to vector<1xf32>
    %404 = vector.shape_cast %403 : vector<1xf32> to vector<1x1x1xf32>
    %405 = vector.extract %404[0, 0, 0] : f32 from vector<1x1x1xf32>
    %cst_75 = arith.constant 3.200000e+01 : f32
    %406 = arith.divf %405, %cst_75 : f32
    %407 = vector.broadcast %406 : f32 to vector<8x4xf32>
    %408 = arith.subf %401, %407 : vector<8x4xf32>
    %409 = arith.mulf %408, %408 : vector<8x4xf32>
    %410 = vector.shape_cast %409 : vector<8x4xf32> to vector<1x8x4xf32>
    %cst_76 = arith.constant dense<0.000000e+00> : vector<1xf32>
    %411 = vector.multi_reduction <add>, %410, %cst_76 [1, 2] : vector<1x8x4xf32> to vector<1xf32>
    %412 = vector.shape_cast %411 : vector<1xf32> to vector<1x1x1xf32>
    %413 = vector.extract %412[0, 0, 0] : f32 from vector<1x1x1xf32>
    %cst_77 = arith.constant 3.200000e+01 : f32
    %414 = arith.divf %413, %cst_77 : f32
    %415 = vector.broadcast %406 : f32 to vector<8x4xf32>
    %416 = arith.subf %401, %415 : vector<8x4xf32>
    %cst_78 = arith.constant 9.99999974E-6 : f32
    %417 = arith.addf %414, %cst_78 : f32
    %418 = math.rsqrt %417 : f32
    %419 = vector.broadcast %418 : f32 to vector<8x4xf32>
    %420 = arith.mulf %416, %419 : vector<8x4xf32>
    %421 = vector.broadcast %10 : vector<8x1xf32> to vector<8x4xf32>
    %422 = arith.mulf %420, %421 : vector<8x4xf32>
    %423 = vector.broadcast %11 : vector<8x1xf32> to vector<8x4xf32>
    %424 = arith.addf %422, %423 : vector<8x4xf32>
    %425 = vector.broadcast %12 : vector<8x1xf32> to vector<8x4xf32>
    %426 = arith.mulf %424, %425 : vector<8x4xf32>
    %427 = vector.broadcast %13 : vector<8x1xf32> to vector<8x4xf32>
    %428 = arith.mulf %424, %427 : vector<8x4xf32>
    %429 = vector.broadcast %14 : vector<8x1xf32> to vector<8x4xf32>
    %430 = arith.mulf %424, %429 : vector<8x4xf32>
    %cst_79 = arith.constant dense<0.000000e+00> : vector<8x8xf32>
    %431 = tpu.matmul %426, %428, %cst_79 {dimension_numbers = #tpu.dot_dimension_numbers<[1], [1], [0], [0], [0, 0, 1, 0], [], []>} : vector<8x4xf32>, vector<8x4xf32>, vector<8x8xf32> -> vector<8x8xf32>
    %cst_80 = arith.constant 0.353553385 : f32
    %432 = vector.broadcast %cst_80 : f32 to vector<8x8xf32>
    %433 = arith.mulf %431, %432 : vector<8x8xf32>
    %cst_81 = arith.constant dense<0xFF800000> : vector<8xf32>
    %434 = vector.multi_reduction <maximumf>, %433, %cst_81 [1] : vector<8x8xf32> to vector<8xf32>
    %435 = vector.shape_cast %434 : vector<8xf32> to vector<8x1xf32>
    %436 = vector.broadcast %435 : vector<8x1xf32> to vector<8x8xf32>
    %437 = arith.subf %433, %436 : vector<8x8xf32>
    %438 = math.exp %437 : vector<8x8xf32>
    %cst_82 = arith.constant dense<0.000000e+00> : vector<8xf32>
    %439 = vector.multi_reduction <add>, %438, %cst_82 [1] : vector<8x8xf32> to vector<8xf32>
    %440 = vector.shape_cast %439 : vector<8xf32> to vector<8x1xf32>
    %441 = tpu.reciprocal %440 {approx = true} : vector<8x1xf32> -> vector<8x1xf32>
    %442 = vector.broadcast %441 : vector<8x1xf32> to vector<8x8xf32>
    %443 = arith.mulf %438, %442 : vector<8x8xf32>
    %cst_83 = arith.constant dense<0.000000e+00> : vector<8x4xf32>
    %444 = tpu.matmul %443, %430, %cst_83 {dimension_numbers = #tpu.dot_dimension_numbers<[1], [0], [0], [1], [0, 0, 1, 1], [], []>} : vector<8x8xf32>, vector<8x4xf32>, vector<8x4xf32> -> vector<8x4xf32>
    %cst_84 = arith.constant dense<0.000000e+00> : vector<8xf32>
    %445 = vector.multi_reduction <add>, %444, %cst_84 [1] : vector<8x4xf32> to vector<8xf32>
    %446 = vector.shape_cast %445 : vector<8xf32> to vector<8x1xf32>
    %cst_85 = arith.constant 4.000000e+00 : f32
    %447 = vector.broadcast %cst_85 : f32 to vector<8x1xf32>
    %448 = arith.divf %446, %447 : vector<8x1xf32>
    %449 = arith.negf %448 : vector<8x1xf32>
    %450 = math.exp %449 : vector<8x1xf32>
    %cst_86 = arith.constant 1.000000e+00 : f32
    %451 = vector.broadcast %cst_86 : f32 to vector<8x1xf32>
    %452 = arith.addf %451, %450 : vector<8x1xf32>
    %453 = arith.divf %451, %452 : vector<8x1xf32>
    %454 = vector.broadcast %453 : vector<8x1xf32> to vector<8x256xf32>
    %455 = arith.mulf %399, %454 : vector<8x256xf32>
    %456 = arith.truncf %455 : vector<8x256xf32> to vector<8x256xbf16>
    %c0_87 = arith.constant 0 : index
    %c0_88 = arith.constant 0 : index
    %c0_89 = arith.constant 0 : index
    %457 = vector.load %arg10[%c0_87, %c0_88, %c0_89] : memref<1x8x256xbf16, #tpu.memory_space<vmem>>, vector<1x8x256xbf16>
    %458 = vector.shape_cast %457 : vector<1x8x256xbf16> to vector<8x256xbf16>
    %459 = vector.shape_cast %456 : vector<8x256xbf16> to vector<1x8x256xbf16>
    tpu.vector_store %arg10[%c0_87, %c0_88, %c0_89], %459 {strides = array<i32>} : memref<1x8x256xbf16, #tpu.memory_space<vmem>>, vector<1x8x256xbf16>,
    return
  }
  func.func @transform_0(%arg0: i32) -> (i32, i32, i32) {
    %c0_i32 = arith.constant 0 : i32
    %c0_i32_0 = arith.constant 0 : i32
    %c0_i32_1 = arith.constant 0 : i32
    return %arg0, %c0_i32, %c0_i32_0 : i32, i32, i32
  }
  func.func @transform_1(%arg0: i32) -> (i32, i32) {
    %c0_i32 = arith.constant 0 : i32
    %c0_i32_0 = arith.constant 0 : i32
    %c0_i32_1 = arith.constant 0 : i32
    return %c0_i32, %c0_i32_0 : i32, i32
  }
  func.func @transform_2(%arg0: i32) -> (i32, i32) {
    %c0_i32 = arith.constant 0 : i32
    %c0_i32_0 = arith.constant 0 : i32
    %c0_i32_1 = arith.constant 0 : i32
    return %c0_i32, %c0_i32_0 : i32, i32
  }
  func.func @transform_3(%arg0: i32) -> (i32, i32) {
    %c0_i32 = arith.constant 0 : i32
    %c0_i32_0 = arith.constant 0 : i32
    %c0_i32_1 = arith.constant 0 : i32
    return %c0_i32, %c0_i32_0 : i32, i32
  }
  func.func @transform_4(%arg0: i32) -> (i32, i32) {
    %c0_i32 = arith.constant 0 : i32
    %c0_i32_0 = arith.constant 0 : i32
    %c0_i32_1 = arith.constant 0 : i32
    return %c0_i32, %c0_i32_0 : i32, i32
  }
  func.func @transform_5(%arg0: i32) -> (i32, i32) {
    %c0_i32 = arith.constant 0 : i32
    %c0_i32_0 = arith.constant 0 : i32
    %c0_i32_1 = arith.constant 0 : i32
    return %c0_i32, %c0_i32_0 : i32, i32
  }
  func.func @transform_6(%arg0: i32) -> (i32, i32) {
    %c0_i32 = arith.constant 0 : i32
    %c0_i32_0 = arith.constant 0 : i32
    %c0_i32_1 = arith.constant 0 : i32
    return %c0_i32, %c0_i32_0 : i32, i32
  }
  func.func @transform_7(%arg0: i32) -> (i32, i32) {
    %c0_i32 = arith.constant 0 : i32
    %c0_i32_0 = arith.constant 0 : i32
    %c0_i32_1 = arith.constant 0 : i32
    return %c0_i32, %c0_i32_0 : i32, i32
  }
  func.func @transform_8(%arg0: i32) -> (i32, i32) {
    %c0_i32 = arith.constant 0 : i32
    %c0_i32_0 = arith.constant 0 : i32
    %c0_i32_1 = arith.constant 0 : i32
    return %c0_i32, %c0_i32_0 : i32, i32
  }
  func.func @transform_9(%arg0: i32) -> (i32, i32, i32) {
    %c0_i32 = arith.constant 0 : i32
    %c0_i32_0 = arith.constant 0 : i32
    %c0_i32_1 = arith.constant 0 : i32
    return %arg0, %c0_i32, %c0_i32_0 : i32, i32, i32
  }
}

module attributes {stable_mosaic.version = 11 : i64} {
  func.func @_pw_conv_kernel(%arg0: i32, %arg1: i32, %arg2: memref<1x24x256xbf16, #tpu.memory_space<vmem>>, %arg3: memref<16x24xbf16, #tpu.memory_space<vmem>>, %arg4: memref<16x1xf32, #tpu.memory_space<vmem>>, %arg5: memref<1x16x256xf32, #tpu.memory_space<vmem>>) attributes {dimension_semantics = [#tpu.dimension_semantics<parallel>, #tpu.dimension_semantics<parallel>], iteration_bounds = array<i64: 2, 1>, scalar_prefetch = 0 : i64, scratch_operands = 0 : i64, tpu.core_type = #tpu.core_type<tc>, window_params = [{transform_indices = @transform_0, window_bounds = array<i64: 1, 24, 256>}, {pipeline_mode = #tpu.pipeline_mode<synchronous>, transform_indices = @transform_1, window_bounds = array<i64: 16, 24>}, {pipeline_mode = #tpu.pipeline_mode<synchronous>, transform_indices = @transform_2, window_bounds = array<i64: 16, 1>}, {transform_indices = @transform_3, window_bounds = array<i64: 1, 16, 256>}]} {
    %c0 = arith.constant 0 : index
    %c0_0 = arith.constant 0 : index
    %0 = vector.load %arg3[%c0, %c0_0] : memref<16x24xbf16, #tpu.memory_space<vmem>>, vector<16x24xbf16>
    %c0_1 = arith.constant 0 : index
    %c0_2 = arith.constant 0 : index
    %c0_3 = arith.constant 0 : index
    %1 = vector.load %arg2[%c0_1, %c0_2, %c0_3] : memref<1x24x256xbf16, #tpu.memory_space<vmem>>, vector<1x24x256xbf16>
    %2 = vector.shape_cast %1 : vector<1x24x256xbf16> to vector<24x256xbf16>
    %cst = arith.constant dense<0.000000e+00> : vector<16x256xf32>
    %3 = tpu.matmul %0, %2, %cst {dimension_numbers = #tpu.dot_dimension_numbers<[1], [0], [0], [1], [0, 0, 1, 1], [], []>} : vector<16x24xbf16>, vector<24x256xbf16>, vector<16x256xf32> -> vector<16x256xf32>
    %c0_4 = arith.constant 0 : index
    %c0_5 = arith.constant 0 : index
    %4 = vector.load %arg4[%c0_4, %c0_5] : memref<16x1xf32, #tpu.memory_space<vmem>>, vector<16x1xf32>
    %5 = vector.broadcast %4 : vector<16x1xf32> to vector<16x256xf32>
    %6 = arith.addf %3, %5 : vector<16x256xf32>
    %7 = arith.negf %6 : vector<16x256xf32>
    %8 = math.exp %7 : vector<16x256xf32>
    %cst_6 = arith.constant 1.000000e+00 : f32
    %9 = vector.broadcast %cst_6 : f32 to vector<16x256xf32>
    %10 = arith.addf %9, %8 : vector<16x256xf32>
    %11 = arith.divf %9, %10 : vector<16x256xf32>
    %12 = arith.mulf %6, %11 : vector<16x256xf32>
    %c0_7 = arith.constant 0 : index
    %c0_8 = arith.constant 0 : index
    %c0_9 = arith.constant 0 : index
    %13 = vector.load %arg5[%c0_7, %c0_8, %c0_9] : memref<1x16x256xf32, #tpu.memory_space<vmem>>, vector<1x16x256xf32>
    %14 = vector.shape_cast %13 : vector<1x16x256xf32> to vector<16x256xf32>
    %15 = vector.shape_cast %12 : vector<16x256xf32> to vector<1x16x256xf32>
    tpu.vector_store %arg5[%c0_7, %c0_8, %c0_9], %15 {strides = array<i32>} : memref<1x16x256xf32, #tpu.memory_space<vmem>>, vector<1x16x256xf32>,
    return
  }
  func.func @transform_0(%arg0: i32, %arg1: i32) -> (i32, i32, i32) {
    %c0_i32 = arith.constant 0 : i32
    %c0_i32_0 = arith.constant 0 : i32
    return %arg0, %c0_i32, %arg1 : i32, i32, i32
  }
  func.func @transform_1(%arg0: i32, %arg1: i32) -> (i32, i32) {
    %c0_i32 = arith.constant 0 : i32
    %c0_i32_0 = arith.constant 0 : i32
    %c0_i32_1 = arith.constant 0 : i32
    return %c0_i32, %c0_i32_0 : i32, i32
  }
  func.func @transform_2(%arg0: i32, %arg1: i32) -> (i32, i32) {
    %c0_i32 = arith.constant 0 : i32
    %c0_i32_0 = arith.constant 0 : i32
    %c0_i32_1 = arith.constant 0 : i32
    return %c0_i32, %c0_i32_0 : i32, i32
  }
  func.func @transform_3(%arg0: i32, %arg1: i32) -> (i32, i32, i32) {
    %c0_i32 = arith.constant 0 : i32
    %c0_i32_0 = arith.constant 0 : i32
    return %arg0, %c0_i32, %arg1 : i32, i32, i32
  }
}

</mosaic_0001>

<llo_original>
// kernel: _lambda_.5
$region0: #{_lambda_.5}
  #allocation0 [shape = 'u32[]', space=smem, size = 0x4, offset = 0x4, fixed_abs, tag = 'smem constant byte address 0x4 - core index']
  #allocation1 [shape = 'u32[144,128]{1,0:T(1,128)}', space=vmem, size = 0x12000, scoped, tag = 'internal scratch']
  %s0 = inlined_call_operand.vmem [shape: bf16[2,16,256], index: 0, kind: input, shape index: {}]
  %s1 = inlined_call_operand.vmem [shape: bf16[16,16], index: 1, kind: input, shape index: {}]
  %s2 = inlined_call_operand.vmem [shape: f32[16,1], index: 2, kind: input, shape index: {}]
  %s3 = inlined_call_operand.vmem [shape: bf16[2,16,256], index: 3, kind: output, shape index: {}]
  %s4 = sld [smem:[#allocation0]]
  $region45: #{_lambda_.5} parent=0
    _
  %s6 = ssub.s32 1, %s4
  %s7 = scalar_select 0, %s6, %s4
  loop: start=0, step=1, limit=4
  $region2: #{_lambda_.5} parent=0 // loop_pre_header
    _
  $region3: #{_lambda_.5} parent=0 // loop_header
    %s9 = sphi 0, %s13
    %p10 = scmp.ge.s32.totalorder %s9, 4
    %s16 = sphi 0, %s28
    %s17 = sphi 0, %s24
    %s18 = sphi 0, %s16
    %s19 = sphi 0, %s17
    %s20 = sphi 0, %s18
    %s21 = sphi 0, %s19
    %s33 = sphi 0, %s35
    %s36 = sphi 0, %s33
    %s37 = sphi 0, %s36
    %s53 = sphi 0, %s37
    %s57 = sphi 0, %s57
    %s59 = sphi 0, %s57
    %s60 = sphi 0, %s59
    %s74 = sphi 0, %s60
    %s78 = sphi 0, %s78
    %s80 = sphi 0, %s78
    %s81 = sphi 0, %s80
    %s95 = sphi 0, %s81
    %s103 = sphi 0, %s105
    %s106 = sphi 0, %s103
    %s107 = sphi 0, %s106
    %s123 = sphi 0, %s107
  $region4: #{_lambda_.5} parent=0 // loop_header_branch
    %12 = sbr.rel (%p10) target = $region8
  $region5: #{_lambda_.5} parent=0 // loop_body
    %s14 = ssub.s32 %s9, 1
    %s15 = ssub.s32 %s9, 2
    %s22 = sadd.s32 1, %s17
    %p23 = scmp.ge.s32.totalorder %s22, 1
    %s24 = scalar_select %p23, 0, %s22
    %s25 = sadd.s32 1, %s16
    %s26 = scalar_select %p23, %s25, %s16
    %p27 = scmp.ge.s32.totalorder %s26, 2
    %s28 = scalar_select %p27, 0, %s26
    %s29 = ssub.s32 %s16, %s28
    %s30 = ssub.s32 %s17, %s24
    %s31 = sor.u32 %s29, %s30
    %p32 = scmp.eq.s32.totalorder %s31, 0
    %s34 = sadd.s32 %s33, 1
    %s35 = scalar_select %p32, %s33, %s34
    %p38 = pneg %p32
    %p39 = scmp.eq.s32.totalorder %s9, 1
    %p40 = por %p38, %p39
    %p41 = scmp.ne.s32.totalorder %s33, %s36
    %p42 = scmp.eq.s32.totalorder %s9, 0
    %p43 = por %p41, %p42
    %p44 = scmp.ne.s32.totalorder %s33, %s36
    %p45 = scmp.eq.s32.totalorder %s14, 1
    %p46 = por %p44, %p45
    %p47 = scmp.ne.s32.totalorder %s36, %s37
    %p48 = scmp.eq.s32.totalorder %s14, 0
    %p49 = por %p47, %p48
    %p50 = scmp.ne.s32.totalorder %s36, %s37
    %p51 = scmp.eq.s32.totalorder %s15, 1
    %p52 = por %p50, %p51
    %p54 = scmp.ne.s32.totalorder %s37, %s53
    %p55 = scmp.eq.s32.totalorder %s15, 0
    %p56 = por %p54, %p55
    %s58 = sadd.s32 %s57, 1
    %p61 = scmp.eq.s32.totalorder %s9, 1
    %p62 = scmp.ne.s32.totalorder %s57, %s59
    %p63 = scmp.eq.s32.totalorder %s9, 0
    %p64 = por %p62, %p63
    %p65 = scmp.ne.s32.totalorder %s57, %s59
    %p66 = scmp.eq.s32.totalorder %s14, 1
    %p67 = por %p65, %p66
    %p68 = scmp.ne.s32.totalorder %s59, %s60
    %p69 = scmp.eq.s32.totalorder %s14, 0
    %p70 = por %p68, %p69
    %p71 = scmp.ne.s32.totalorder %s59, %s60
    %p72 = scmp.eq.s32.totalorder %s15, 1
    %p73 = por %p71, %p72
    %p75 = scmp.ne.s32.totalorder %s60, %s74
    %p76 = scmp.eq.s32.totalorder %s15, 0
    %p77 = por %p75, %p76
    %s79 = sadd.s32 %s78, 1
    %p82 = scmp.eq.s32.totalorder %s9, 1
    %p83 = scmp.ne.s32.totalorder %s78, %s80
    %p84 = scmp.eq.s32.totalorder %s9, 0
    %p85 = por %p83, %p84
    %p86 = scmp.ne.s32.totalorder %s78, %s80
    %p87 = scmp.eq.s32.totalorder %s14, 1
    %p88 = por %p86, %p87
    %p89 = scmp.ne.s32.totalorder %s80, %s81
    %p90 = scmp.eq.s32.totalorder %s14, 0
    %p91 = por %p89, %p90
    %p92 = scmp.ne.s32.totalorder %s80, %s81
    %p93 = scmp.eq.s32.totalorder %s15, 1
    %p94 = por %p92, %p93
    %p96 = scmp.ne.s32.totalorder %s81, %s95
    %p97 = scmp.eq.s32.totalorder %s15, 0
    %p98 = por %p96, %p97
    %s99 = ssub.s32 %s16, %s28
    %s100 = ssub.s32 %s17, %s24
    %s101 = sor.u32 %s99, %s100
    %p102 = scmp.eq.s32.totalorder %s101, 0
    %s104 = sadd.s32 %s103, 1
    %s105 = scalar_select %p102, %s103, %s104
    %p108 = pneg %p102
    %p109 = scmp.eq.s32.totalorder %s9, 1
    %p110 = por %p108, %p109
    %p111 = scmp.ne.s32.totalorder %s103, %s106
    %p112 = scmp.eq.s32.totalorder %s9, 0
    %p113 = por %p111, %p112
    %p114 = scmp.ne.s32.totalorder %s103, %s106
    %p115 = scmp.eq.s32.totalorder %s14, 1
    %p116 = por %p114, %p115
    %p117 = scmp.ne.s32.totalorder %s106, %s107
    %p118 = scmp.eq.s32.totalorder %s14, 0
    %p119 = por %p117, %p118
    %p120 = scmp.ne.s32.totalorder %s106, %s107
    %p121 = scmp.eq.s32.totalorder %s15, 1
    %p122 = por %p120, %p121
    %p124 = scmp.ne.s32.totalorder %s107, %s123
    %p125 = scmp.eq.s32.totalorder %s15, 0
    %p126 = por %p124, %p125
    %p127 = scmp.le.s32.totalorder 1, %s9
    %p128 = scmp.lt.s32.totalorder %s9, 3
    %p129 = pnand %p127, %p128
    %p130 = pneg %p129
    // Predicated region
    $region9: #{_lambda_.5} parent=5 // pred_check
      _
    $region10: #{_lambda_.5} parent=5 // pred_check_branch
      %132 = sbr.rel (%p129) target = $region12
    $region11: #{_lambda_.5} parent=5 // pred_region
      %s133 = ssub.s32 %s9, 1
      // Predicated region
      $region13: #{_lambda_.5} parent=11 // pred_check
        %p134 = pneg %p70
      $region14: #{_lambda_.5} parent=11 // pred_check_branch
        %136 = sbr.rel (%p134) target = $region16
      $region15: #{_lambda_.5} parent=11 // pred_region
        _
      $region16: #{_lambda_.5} parent=11 // pred_fallthru
        _
      // Predicated region
      $region17: #{_lambda_.5} parent=11 // pred_check
        %p137 = pneg %p91
      $region18: #{_lambda_.5} parent=11 // pred_check_branch
        %139 = sbr.rel (%p137) target = $region20
      $region19: #{_lambda_.5} parent=11 // pred_region
        _
      $region20: #{_lambda_.5} parent=11 // pred_fallthru
        _
    $region12: #{_lambda_.5} parent=5 // pred_fallthru
      _
    %p140 = scmp.lt.s32.totalorder %s9, 2
    // Predicated region
    $region21: #{_lambda_.5} parent=5 // pred_check
      %p141 = pneg %p140
    $region22: #{_lambda_.5} parent=5 // pred_check_branch
      %143 = sbr.rel (%p141) target = $region24
    $region23: #{_lambda_.5} parent=5 // pred_region
      // Predicated region
      $region25: #{_lambda_.5} parent=23 // pred_check
        %p144 = pneg %p43
      $region26: #{_lambda_.5} parent=23 // pred_check_branch
        %146 = sbr.rel (%p144) target = $region28
      $region27: #{_lambda_.5} parent=23 // pred_region
        %s147 = smul.u32 2, %s17
        %p148 = scmp.lt.s32.totalorder %s16, 1
        %s149 = scalar_select %p148, %s16, 1
        %p150 = scmp.lt.s32.totalorder %s147, 1
        %s151 = scalar_select %p150, %s147, 1
        %s152 = smul.addr %s149, 4
        %s153 = sadd.s32 %s151, %s152
        %s154 = smul.addr %s153, 4
        %s155 = scalar_lea.vmem %s0, %s154
        %s156 = smul.u32 2, %s17
      $region28: #{_lambda_.5} parent=23 // pred_fallthru
        _
    $region24: #{_lambda_.5} parent=5 // pred_fallthru
      _
    %p157 = scmp.le.s32.totalorder 1, %s9
    %p158 = scmp.lt.s32.totalorder %s9, 3
    %p159 = pnand %p157, %p158
    %p160 = pneg %p159
    // Predicated region
    $region29: #{_lambda_.5} parent=5 // pred_check
      _
    $region30: #{_lambda_.5} parent=5 // pred_check_branch
      %162 = sbr.rel (%p159) target = $region32
    $region31: #{_lambda_.5} parent=5 // pred_region
      %s163 = ssub.s32 %s9, 1
      %s164 = smul.u32 2, %s19
      %p165 = scmp.lt.s32.totalorder %s18, 1
      %s166 = scalar_select %p165, %s18, 1
      %p167 = scmp.lt.s32.totalorder %s164, 1
      %s168 = scalar_select %p167, %s164, 1
      %s169 = smul.addr %s166, 4
      %s170 = sadd.s32 %s168, %s169
      %s171 = smul.addr %s170, 4
      %s172 = scalar_lea.vmem %s0, %s171
      %p173 = pneg %p49
      %p174 = pneg %p46
      %p175 = pneg %p70
      %p176 = pneg %p67
      %p177 = pneg %p91
      %p178 = pneg %p88
      %p179 = pneg %p119
      %p180 = pneg %p116
      %s181 = smul.u32 2, %s19
      %p182 = scmp.lt.s32.totalorder %s18, 1
      %s183 = scalar_select %p182, %s18, 1
      %p184 = scmp.lt.s32.totalorder %s181, 1
      %s185 = scalar_select %p184, %s181, 1
      %s186 = smul.addr %s183, 4
      %s187 = sadd.s32 %s185, %s186
      %s188 = smul.addr %s187, 4
      %s189 = scalar_lea.vmem %s3, %s188
      %s190 = smul.u32 2, %s19
      %p191 = scmp.lt.s32.totalorder %s18, 1
      %s192 = scalar_select %p191, %s18, 1
      %p193 = scmp.lt.s32.totalorder %s190, 1
      %s194 = scalar_select %p193, %s190, 1
      %s195 = smul.addr %s192, 4
      %s196 = sadd.s32 %s194, %s195
      %s197 = smul.addr %s196, 4
      %s198 = scalar_lea.vmem %s0, %s197
      %s199 = smul.u32 2, %s19
      %s200 = smul.u32 2, %s19
      %p201 = scmp.lt.s32.totalorder %s18, 1
      %s202 = scalar_select %p201, %s18, 1
      %p203 = scmp.lt.s32.totalorder %s200, 1
      %s204 = scalar_select %p203, %s200, 1
      %s205 = smul.addr %s202, 4
      %s206 = sadd.s32 %s204, %s205
      %s207 = smul.addr %s206, 4
      %s208 = scalar_lea.vmem %s3, %s207
      %s209 = smul.u32 2, %s19
      %v211 = vld [vmem:[%s1] sm:$0xf]
      %v212 = vld [vmem:[%s1 + $0x4] sm:$0xf]
      %v213 = vld [vmem:[%s198] sm:$0xff]
      %v214 = vld [vmem:[%s198 + $0x8] sm:$0xff]
      %v215 = vld [vmem:[%s2] sm:$0xff]
      %v216 = vld [vmem:[%s2 + $0x8] sm:$0xff]
      %218 = vset.pattern.permute.xlu0 0
      %219 = vperm.xlu0 %218, %v215
      %v220 = vpop.permute.xlu0 %219
      %223 = vset.pattern.permute.xlu0 0
      %224 = vperm.xlu0 %223, %v216
      %v225 = vpop.permute.xlu0 %224
      %v229 = vunpack.c.l.b16 %v211
      %v230 = vunpack.c.l.b16 %v212
      %v231 = vpack.c.b16 %v230, %v229
      %v234 = vunpack.c.l.b16 %v213
      %v235 = vunpack.c.h.b16 %v213
      %v236 = vunpack.c.l.b16 %v214
      %v237 = vunpack.c.h.b16 %v214
      %v238 = vpack.c.b16 %v236, %v234
      %v239 = vpack.c.b16 %v237, %v235
      %vm242 = vcmask 130048
      %v244 = vsel %vm242, %v231, 0
      %246 = vmatprep.subr.bf16.mxu0 0
      %247 = vmatpush1.bf16.msra.mxu0 0
      %248 = vmatprep.subr.bf16.mxu0 0
      %249 = vmatpush1.bf16.msra.mxu0 0
      %250 = vmatprep.subr.bf16.mxu0 0
      %251 = vmatpush1.bf16.msra.mxu0 0
      %252 = vmatprep.subr.bf16.mxu0 0
      %253 = vmatpush1.bf16.msra.mxu0 0
      %254 = vmatprep.subr.bf16.mxu0 0
      %255 = vmatpush1.bf16.msra.mxu0 0
      %256 = vmatprep.subr.bf16.mxu0 0
      %257 = vmatpush1.bf16.msra.mxu0 0
      %258 = vmatprep.subr.bf16.mxu0 0
      %259 = vmatpush1.bf16.msra.mxu0 0
      %260 = vmatprep.subr.bf16.mxu0 %v239
      %261 = vmatpush1.bf16.msra.mxu0 %v238
      %262 = vmatprep.subr.bf16.mxu0 0
      %263 = vmatpush2.bf16.msra.mxu0 0
      %264 = vmatprep.subr.bf16.mxu0 0
      %265 = vmatpush2.bf16.msra.mxu0 0
      %266 = vmatprep.subr.bf16.mxu0 0
      %267 = vmatpush2.bf16.msra.mxu0 0
      %268 = vmatprep.subr.bf16.mxu0 0
      %269 = vmatpush2.bf16.msra.mxu0 0
      %270 = vmatprep.subr.bf16.mxu0 0
      %271 = vmatpush2.bf16.msra.mxu0 0
      %272 = vmatprep.subr.bf16.mxu0 0
      %273 = vmatpush2.bf16.msra.mxu0 0
      %274 = vmatprep.subr.bf16.mxu0 0
      %275 = vmatpush2.bf16.msra.mxu0 0
      %276 = vmatprep.subr.bf16.mxu0 0
      %277 = vmatpush2.bf16.msra.mxu0 0
      %278 = vmatprep.mubr.bf16.mxu0 0
      %279 = vmatmul.mubr.bf16.gmra.mxu0 %v244
      %v280 = vpop.f32.mrf.mxu0
      %v281 = vadd.f32 %v220, %v280
      %v282 = vpop.f32.mrf.mxu0
      %v283 = vadd.f32 %v220, %v282
      %v284 = vpop.f32.mrf.mxu0
      %v285 = vadd.f32 %v225, %v284
      %v286 = vpop.f32.mrf.mxu0
      %v287 = vadd.f32 %v225, %v286
      %288 = vdwg.mxu0
      %v289 = vxor.u32 %v281, 2147483648
      %v290 = vxor.u32 %v283, 2147483648
      %v291 = vxor.u32 %v285, 2147483648
      %v292 = vxor.u32 %v287, 2147483648
      %v293 = vmul.f32 %v289, 1.442695
      %v294 = vpow.pop %v293
      %v295 = vmul.f32 %v290, 1.442695
      %v296 = vpow.pop %v295
      %v297 = vmul.f32 %v291, 1.442695
      %v298 = vpow.pop %v297
      %v299 = vmul.f32 %v292, 1.442695
      %v300 = vpow.pop %v299
      %v301 = vadd.f32 %v294, 1.0
      %v302 = vadd.f32 %v296, 1.0
      %v303 = vadd.f32 %v298, 1.0
      %v304 = vadd.f32 %v300, 1.0
      %v305 = vrcp.pop %v301
      %v306 = vmul.f32 1.0, %v305
      %v307 = vrcp.pop %v302
      %v308 = vmul.f32 1.0, %v307
      %v309 = vrcp.pop %v303
      %v310 = vmul.f32 1.0, %v309
      %v311 = vrcp.pop %v304
      %v312 = vmul.f32 1.0, %v311
      %v313 = vmul.f32 %v281, %v306
      %v314 = vmul.f32 %v283, %v308
      %v315 = vmul.f32 %v285, %v310
      %v316 = vmul.f32 %v287, %v312
      %v317 = vpack.c.bf16 %v315, %v313
      %v318 = vpack.c.bf16 %v316, %v314
      %v321 = vunpack.c.l.b16 %v317
      %v322 = vunpack.c.l.b16 %v318
      %v323 = vunpack.c.h.b16 %v317
      %v324 = vunpack.c.h.b16 %v318
      %v325 = vpack.c.b16 %v322, %v321
      %v326 = vpack.c.b16 %v324, %v323
      %329 = vst [vmem:[%s208] sm:$0xff] %v325
      %330 = vst [vmem:[%s208 + $0x8] sm:$0xff] %v326
      %s331 = smul.u32 2, %s19
      %p332 = scmp.lt.s32.totalorder %s18, 1
      %s333 = scalar_select %p332, %s18, 1
      %p334 = scmp.lt.s32.totalorder %s331, 1
      %s335 = scalar_select %p334, %s331, 1
      %s336 = smul.addr %s333, 4
      %s337 = sadd.s32 %s335, %s336
      %s338 = smul.addr %s337, 4
      %s339 = scalar_lea.vmem %s3, %s338
      // Predicated region
      $region33: #{_lambda_.5} parent=31 // pred_check
        %p340 = pneg %p116
      $region34: #{_lambda_.5} parent=31 // pred_check_branch
        %342 = sbr.rel (%p340) target = $region36
      $region35: #{_lambda_.5} parent=31 // pred_region
        %s343 = smul.u32 2, %s19
      $region36: #{_lambda_.5} parent=31 // pred_fallthru
        _
    $region32: #{_lambda_.5} parent=5 // pred_fallthru
      _
    %p344 = scmp.le.s32.totalorder 2, %s9
    // Predicated region
    $region37: #{_lambda_.5} parent=5 // pred_check
      %p345 = pneg %p344
    $region38: #{_lambda_.5} parent=5 // pred_check_branch
      %347 = sbr.rel (%p345) target = $region40
    $region39: #{_lambda_.5} parent=5 // pred_region
      %s348 = ssub.s32 %s9, 2
      // Predicated region
      $region41: #{_lambda_.5} parent=39 // pred_check
        %p349 = pneg %p122
      $region42: #{_lambda_.5} parent=39 // pred_check_branch
        %351 = sbr.rel (%p349) target = $region44
      $region43: #{_lambda_.5} parent=39 // pred_region
        %s352 = smul.u32 2, %s21
        %p353 = scmp.lt.s32.totalorder %s20, 1
        %s354 = scalar_select %p353, %s20, 1
        %p355 = scmp.lt.s32.totalorder %s352, 1
        %s356 = scalar_select %p355, %s352, 1
        %s357 = smul.addr %s354, 4
        %s358 = sadd.s32 %s356, %s357
        %s359 = smul.addr %s358, 4
        %s360 = scalar_lea.vmem %s3, %s359
      $region44: #{_lambda_.5} parent=39 // pred_fallthru
        _
    $region40: #{_lambda_.5} parent=5 // pred_fallthru
      _
  $region6: #{_lambda_.5} parent=0 // loop_footer
    %s13 = sadd.s32 1, %s9
  $region7: #{_lambda_.5} parent=0 // loop_footer_branch
    %8 = sbr.rel target = $region3
  $region8: #{_lambda_.5} parent=0 // loop_exit
    _

// kernel: _lambda_.6
$region0: #{_lambda_.6}
  #allocation0 [shape = 'u32[]', space=smem, size = 0x4, offset = 0x4, fixed_abs, tag = 'smem constant byte address 0x4 - core index']
  #allocation1 [shape = 'u32[144,128]{1,0:T(1,128)}', space=vmem, size = 0x12000, scoped, tag = 'internal scratch']
  %s0 = inlined_call_operand.vmem [shape: bf16[2,8,342], index: 0, kind: input, shape index: {}]
  %s1 = inlined_call_operand.vmem [shape: bf16[9,8,8], index: 1, kind: input, shape index: {}]
  %s2 = inlined_call_operand.vmem [shape: f32[8,1], index: 2, kind: input, shape index: {}]
  %s3 = inlined_call_operand.vmem [shape: bf16[2,8,288], index: 3, kind: output, shape index: {}]
  %s4 = sld [smem:[#allocation0]]
  $region45: #{_lambda_.6} parent=0
    _
  %s6 = ssub.s32 1, %s4
  %s7 = scalar_select 0, %s6, %s4
  loop: start=0, step=1, limit=4
  $region2: #{_lambda_.6} parent=0 // loop_pre_header
    _
  $region3: #{_lambda_.6} parent=0 // loop_header
    %s9 = sphi 0, %s13
    %p10 = scmp.ge.s32.totalorder %s9, 4
    %s19 = sphi 0, %s21
    %s22 = sphi 0, %s19
    %s23 = sphi 0, %s22
    %s39 = sphi 0, %s23
    %s43 = sphi 0, %s43
    %s45 = sphi 0, %s43
    %s46 = sphi 0, %s45
    %s60 = sphi 0, %s46
    %s64 = sphi 0, %s64
    %s66 = sphi 0, %s64
    %s67 = sphi 0, %s66
    %s81 = sphi 0, %s67
    %s87 = sphi 0, %s89
    %s90 = sphi 0, %s87
    %s91 = sphi 0, %s90
    %s107 = sphi 0, %s91
  $region4: #{_lambda_.6} parent=0 // loop_header_branch
    %12 = sbr.rel (%p10) target = $region8
  $region5: #{_lambda_.6} parent=0 // loop_body
    %s14 = ssub.s32 %s9, 1
    %s15 = ssub.s32 %s9, 2
    %s16 = sadd.s32 %s9, 1
    %s17 = ssub.s32 %s9, %s16
    %p18 = scmp.eq.s32.totalorder %s17, 0
    %s20 = sadd.s32 %s19, 1
    %s21 = scalar_select %p18, %s19, %s20
    %p24 = pneg %p18
    %p25 = scmp.eq.s32.totalorder %s9, 1
    %p26 = por %p24, %p25
    %p27 = scmp.ne.s32.totalorder %s19, %s22
    %p28 = scmp.eq.s32.totalorder %s9, 0
    %p29 = por %p27, %p28
    %p30 = scmp.ne.s32.totalorder %s19, %s22
    %p31 = scmp.eq.s32.totalorder %s14, 1
    %p32 = por %p30, %p31
    %p33 = scmp.ne.s32.totalorder %s22, %s23
    %p34 = scmp.eq.s32.totalorder %s14, 0
    %p35 = por %p33, %p34
    %p36 = scmp.ne.s32.totalorder %s22, %s23
    %p37 = scmp.eq.s32.totalorder %s15, 1
    %p38 = por %p36, %p37
    %p40 = scmp.ne.s32.totalorder %s23, %s39
    %p41 = scmp.eq.s32.totalorder %s15, 0
    %p42 = por %p40, %p41
    %s44 = sadd.s32 %s43, 1
    %p47 = scmp.eq.s32.totalorder %s9, 1
    %p48 = scmp.ne.s32.totalorder %s43, %s45
    %p49 = scmp.eq.s32.totalorder %s9, 0
    %p50 = por %p48, %p49
    %p51 = scmp.ne.s32.totalorder %s43, %s45
    %p52 = scmp.eq.s32.totalorder %s14, 1
    %p53 = por %p51, %p52
    %p54 = scmp.ne.s32.totalorder %s45, %s46
    %p55 = scmp.eq.s32.totalorder %s14, 0
    %p56 = por %p54, %p55
    %p57 = scmp.ne.s32.totalorder %s45, %s46
    %p58 = scmp.eq.s32.totalorder %s15, 1
    %p59 = por %p57, %p58
    %p61 = scmp.ne.s32.totalorder %s46, %s60
    %p62 = scmp.eq.s32.totalorder %s15, 0
    %p63 = por %p61, %p62
    %s65 = sadd.s32 %s64, 1
    %p68 = scmp.eq.s32.totalorder %s9, 1
    %p69 = scmp.ne.s32.totalorder %s64, %s66
    %p70 = scmp.eq.s32.totalorder %s9, 0
    %p71 = por %p69, %p70
    %p72 = scmp.ne.s32.totalorder %s64, %s66
    %p73 = scmp.eq.s32.totalorder %s14, 1
    %p74 = por %p72, %p73
    %p75 = scmp.ne.s32.totalorder %s66, %s67
    %p76 = scmp.eq.s32.totalorder %s14, 0
    %p77 = por %p75, %p76
    %p78 = scmp.ne.s32.totalorder %s66, %s67
    %p79 = scmp.eq.s32.totalorder %s15, 1
    %p80 = por %p78, %p79
    %p82 = scmp.ne.s32.totalorder %s67, %s81
    %p83 = scmp.eq.s32.totalorder %s15, 0
    %p84 = por %p82, %p83
    %s85 = ssub.s32 %s9, %s16
    %p86 = scmp.eq.s32.totalorder %s85, 0
    %s88 = sadd.s32 %s87, 1
    %s89 = scalar_select %p86, %s87, %s88
    %p92 = pneg %p86
    %p93 = scmp.eq.s32.totalorder %s9, 1
    %p94 = por %p92, %p93
    %p95 = scmp.ne.s32.totalorder %s87, %s90
    %p96 = scmp.eq.s32.totalorder %s9, 0
    %p97 = por %p95, %p96
    %p98 = scmp.ne.s32.totalorder %s87, %s90
    %p99 = scmp.eq.s32.totalorder %s14, 1
    %p100 = por %p98, %p99
    %p101 = scmp.ne.s32.totalorder %s90, %s91
    %p102 = scmp.eq.s32.totalorder %s14, 0
    %p103 = por %p101, %p102
    %p104 = scmp.ne.s32.totalorder %s90, %s91
    %p105 = scmp.eq.s32.totalorder %s15, 1
    %p106 = por %p104, %p105
    %p108 = scmp.ne.s32.totalorder %s91, %s107
    %p109 = scmp.eq.s32.totalorder %s15, 0
    %p110 = por %p108, %p109
    %p111 = scmp.le.s32.totalorder 1, %s9
    %p112 = scmp.lt.s32.totalorder %s9, 3
    %p113 = pnand %p111, %p112
    %p114 = pneg %p113
    // Predicated region
    $region9: #{_lambda_.6} parent=5 // pred_check
      _
    $region10: #{_lambda_.6} parent=5 // pred_check_branch
      %116 = sbr.rel (%p113) target = $region12
    $region11: #{_lambda_.6} parent=5 // pred_region
      %s117 = ssub.s32 %s9, 1
      // Predicated region
      $region13: #{_lambda_.6} parent=11 // pred_check
        %p118 = pneg %p56
      $region14: #{_lambda_.6} parent=11 // pred_check_branch
        %120 = sbr.rel (%p118) target = $region16
      $region15: #{_lambda_.6} parent=11 // pred_region
        _
      $region16: #{_lambda_.6} parent=11 // pred_fallthru
        _
      // Predicated region
      $region17: #{_lambda_.6} parent=11 // pred_check
        %p121 = pneg %p77
      $region18: #{_lambda_.6} parent=11 // pred_check_branch
        %123 = sbr.rel (%p121) target = $region20
      $region19: #{_lambda_.6} parent=11 // pred_region
        _
      $region20: #{_lambda_.6} parent=11 // pred_fallthru
        _
    $region12: #{_lambda_.6} parent=5 // pred_fallthru
      _
    %p124 = scmp.lt.s32.totalorder %s9, 2
    // Predicated region
    $region21: #{_lambda_.6} parent=5 // pred_check
      %p125 = pneg %p124
    $region22: #{_lambda_.6} parent=5 // pred_check_branch
      %127 = sbr.rel (%p125) target = $region24
    $region23: #{_lambda_.6} parent=5 // pred_region
      // Predicated region
      $region25: #{_lambda_.6} parent=23 // pred_check
        %p128 = pneg %p29
      $region26: #{_lambda_.6} parent=23 // pred_check_branch
        %130 = sbr.rel (%p128) target = $region28
      $region27: #{_lambda_.6} parent=23 // pred_region
        %p131 = scmp.lt.s32.totalorder %s9, 1
        %s132 = scalar_select %p131, %s9, 1
        %s133 = smul.addr %s132, 3
        %s134 = smul.addr %s133, 4
        %s135 = scalar_lea.vmem %s0, %s134
      $region28: #{_lambda_.6} parent=23 // pred_fallthru
        _
    $region24: #{_lambda_.6} parent=5 // pred_fallthru
      _
    %p136 = scmp.le.s32.totalorder 1, %s9
    %p137 = scmp.lt.s32.totalorder %s9, 3
    %p138 = pnand %p136, %p137
    %p139 = pneg %p138
    // Predicated region
    $region29: #{_lambda_.6} parent=5 // pred_check
      _
    $region30: #{_lambda_.6} parent=5 // pred_check_branch
      %141 = sbr.rel (%p138) target = $region32
    $region31: #{_lambda_.6} parent=5 // pred_region
      %s142 = ssub.s32 %s9, 1
      %p143 = scmp.lt.s32.totalorder %s14, 1
      %s144 = scalar_select %p143, %s14, 1
      %s145 = smul.addr %s144, 3
      %s146 = smul.addr %s145, 4
      %s147 = scalar_lea.vmem %s0, %s146
      %p148 = pneg %p35
      %p149 = pneg %p32
      %p150 = pneg %p56
      %p151 = pneg %p53
      %p152 = pneg %p77
      %p153 = pneg %p74
      %p154 = pneg %p103
      %p155 = pneg %p100
      %p156 = scmp.lt.s32.totalorder %s14, 1
      %s157 = scalar_select %p156, %s14, 1
      %s158 = smul.addr %s157, 3
      %s159 = smul.addr %s158, 4
      %s160 = scalar_lea.vmem %s3, %s159
      %p161 = scmp.lt.s32.totalorder %s14, 1
      %s162 = scalar_select %p161, %s14, 1
      %s163 = smul.addr %s162, 3
      %s164 = smul.addr %s163, 4
      %s165 = scalar_lea.vmem %s0, %s164
      %p166 = scmp.lt.s32.totalorder %s14, 1
      %s167 = scalar_select %p166, %s14, 1
      %s168 = smul.addr %s167, 3
      %s169 = smul.addr %s168, 4
      %s170 = scalar_lea.vmem %s3, %s169
      %v172 = vld [vmem:[%s1] sm:$0xf]
      %v173 = vld [vmem:[%s165] sm:$0xff]
      %v174 = vld [vmem:[%s165 + $0x8] sm:$0xf]
      %s175 = scalar_lea.vmem %s1, 4
      %v176 = vld [vmem:[%s175] sm:$0xf]
      %v179 = vunpack.c.l.b16 %v173
      %v180 = vunpack.c.h.b16 %v173
      %v181 = vunpack.c.l.b16 %v174
      %v182 = vpack.c.b16 %v179, %v179
      %v183 = vpack.c.b16 %v180, %v180
      %v184 = vpack.c.b16 %v181, %v181
      %185 = vrot.lane.b32.xlu0 %v182, 127
      %v186 = vpop.permute.xlu0 %185
      %187 = vrot.lane.b32.xlu0 %v183, 127
      %v188 = vpop.permute.xlu0 %187
      %189 = vrot.lane.b32.xlu0 %v184, 127
      %v190 = vpop.permute.xlu0 %189
      %vm191 = vcmask 1039360
      %v192 = vsel %vm191, %v186, %v188
      %v193 = vsel %vm191, %v188, %v190
      %vm194 = vcmask 64512
      %v196 = vsel %vm194, %v176, 0
      %vm198 = vcmask 1043456
      %v200 = vsel %vm198, %v192, 0
      %v203 = vsel %vm198, %v193, 0
      %v206 = vsel %vm198, %v190, 0
      %208 = vmatprep.subr.bf16.mxu0 0
      %209 = vmatpush1.bf16.msra.mxu0 0
      %210 = vmatprep.subr.bf16.mxu0 0
      %211 = vmatpush1.bf16.msra.mxu0 0
      %212 = vmatprep.subr.bf16.mxu0 0
      %213 = vmatpush1.bf16.msra.mxu0 0
      %214 = vmatprep.subr.bf16.mxu0 0
      %215 = vmatpush1.bf16.msra.mxu0 0
      %216 = vmatprep.subr.bf16.mxu0 0
      %217 = vmatpush1.bf16.msra.mxu0 0
      %218 = vmatprep.subr.bf16.mxu0 0
      %219 = vmatpush1.bf16.msra.mxu0 0
      %220 = vmatprep.subr.bf16.mxu0 0
      %221 = vmatpush1.bf16.msra.mxu0 0
      %222 = vmatprep.subr.bf16.mxu0 %v203
      %223 = vmatpush1.bf16.msra.mxu0 %v200
      %224 = vmatprep.subr.bf16.mxu0 0
      %225 = vmatpush2.bf16.msra.mxu0 0
      %226 = vmatprep.subr.bf16.mxu0 0
      %227 = vmatpush2.bf16.msra.mxu0 0
      %228 = vmatprep.subr.bf16.mxu0 0
      %229 = vmatpush2.bf16.msra.mxu0 0
      %230 = vmatprep.subr.bf16.mxu0 0
      %231 = vmatpush2.bf16.msra.mxu0 0
      %232 = vmatprep.subr.bf16.mxu0 0
      %233 = vmatpush2.bf16.msra.mxu0 0
      %234 = vmatprep.subr.bf16.mxu0 0
      %235 = vmatpush2.bf16.msra.mxu0 0
      %236 = vmatprep.subr.bf16.mxu0 0
      %237 = vmatpush2.bf16.msra.mxu0 0
      %238 = vmatprep.subr.bf16.mxu0 0
      %239 = vmatpush2.bf16.msra.mxu0 0
      %240 = vmatprep.mubr.bf16.mxu0 0
      %241 = vmatmul.mubr.bf16.gmra.mxu0 %v196
      %v242 = vpop.f32.mrf.mxu0
      %v243 = vadd.f32 0.0, %v242
      %v244 = vpop.f32.mrf.mxu0
      %v245 = vadd.f32 0.0, %v244
      %v246 = vpop.f32.mrf.mxu0
      %v247 = vpop.f32.mrf.mxu0
      %248 = vdwg.mxu0
      %249 = vmatprep.subr.bf16.mxu0 0
      %250 = vmatpush1.bf16.msra.mxu0 0
      %251 = vmatprep.subr.bf16.mxu0 0
      %252 = vmatpush1.bf16.msra.mxu0 0
      %253 = vmatprep.subr.bf16.mxu0 0
      %254 = vmatpush1.bf16.msra.mxu0 0
      %255 = vmatprep.subr.bf16.mxu0 0
      %256 = vmatpush1.bf16.msra.mxu0 0
      %257 = vmatprep.subr.bf16.mxu0 0
      %258 = vmatpush1.bf16.msra.mxu0 0
      %259 = vmatprep.subr.bf16.mxu0 0
      %260 = vmatpush1.bf16.msra.mxu0 0
      %261 = vmatprep.subr.bf16.mxu0 0
      %262 = vmatpush1.bf16.msra.mxu0 0
      %263 = vmatprep.subr.bf16.mxu0 0
      %264 = vmatpush1.bf16.msra.mxu0 %v206
      %265 = vmatprep.subr.bf16.mxu0 0
      %266 = vmatpush2.bf16.msra.mxu0 0
      %267 = vmatprep.subr.bf16.mxu0 0
      %268 = vmatpush2.bf16.msra.mxu0 0
      %269 = vmatprep.subr.bf16.mxu0 0
      %270 = vmatpush2.bf16.msra.mxu0 0
      %271 = vmatprep.subr.bf16.mxu0 0
      %272 = vmatpush2.bf16.msra.mxu0 0
      %273 = vmatprep.subr.bf16.mxu0 0
      %274 = vmatpush2.bf16.msra.mxu0 0
      %275 = vmatprep.subr.bf16.mxu0 0
      %276 = vmatpush2.bf16.msra.mxu0 0
      %277 = vmatprep.subr.bf16.mxu0 0
      %278 = vmatpush2.bf16.msra.mxu0 0
      %279 = vmatprep.subr.bf16.mxu0 0
      %280 = vmatpush2.bf16.msra.mxu0 0
      %281 = vmatprep.mubr.bf16.mxu0 0
      %282 = vmatmul.mubr.bf16.gmra.mxu0 %v196
      %v283 = vpop.f32.mrf.mxu0
      %v284 = vadd.f32 0.0, %v283
      %v285 = vpop.f32.mrf.mxu0
      %v286 = vpop.f32.mrf.mxu0
      %v287 = vpop.f32.mrf.mxu0
      %288 = vdwg.mxu0
      %v290 = vsel %vm194, %v172, 0
      %v293 = vsel %vm198, %v182, 0
      %v296 = vsel %vm198, %v183, 0
      %v299 = vsel %vm198, %v184, 0
      %301 = vmatprep.subr.bf16.mxu0 0
      %302 = vmatpush1.bf16.msra.mxu0 0
      %303 = vmatprep.subr.bf16.mxu0 0
      %304 = vmatpush1.bf16.msra.mxu0 0
      %305 = vmatprep.subr.bf16.mxu0 0
      %306 = vmatpush1.bf16.msra.mxu0 0
      %307 = vmatprep.subr.bf16.mxu0 0
      %308 = vmatpush1.bf16.msra.mxu0 0
      %309 = vmatprep.subr.bf16.mxu0 0
      %310 = vmatpush1.bf16.msra.mxu0 0
      %311 = vmatprep.subr.bf16.mxu0 0
      %312 = vmatpush1.bf16.msra.mxu0 0
      %313 = vmatprep.subr.bf16.mxu0 0
      %314 = vmatpush1.bf16.msra.mxu0 0
      %315 = vmatprep.subr.bf16.mxu0 %v296
      %316 = vmatpush1.bf16.msra.mxu0 %v293
      %317 = vmatprep.subr.bf16.mxu0 0
      %318 = vmatpush2.bf16.msra.mxu0 0
      %319 = vmatprep.subr.bf16.mxu0 0
      %320 = vmatpush2.bf16.msra.mxu0 0
      %321 = vmatprep.subr.bf16.mxu0 0
      %322 = vmatpush2.bf16.msra.mxu0 0
      %323 = vmatprep.subr.bf16.mxu0 0
      %324 = vmatpush2.bf16.msra.mxu0 0
      %325 = vmatprep.subr.bf16.mxu0 0
      %326 = vmatpush2.bf16.msra.mxu0 0
      %327 = vmatprep.subr.bf16.mxu0 0
      %328 = vmatpush2.bf16.msra.mxu0 0
      %329 = vmatprep.subr.bf16.mxu0 0
      %330 = vmatpush2.bf16.msra.mxu0 0
      %331 = vmatprep.subr.bf16.mxu0 0
      %332 = vmatpush2.bf16.msra.mxu0 0
      %333 = vmatprep.mubr.bf16.mxu0 0
      %334 = vmatmul.mubr.bf16.gmra.mxu0 %v290
      %v335 = vpop.f32.mrf.mxu0
      %v336 = vadd.f32 %v243, %v335
      %v337 = vpop.f32.mrf.mxu0
      %v338 = vadd.f32 %v245, %v337
      %v339 = vpop.f32.mrf.mxu0
      %v340 = vpop.f32.mrf.mxu0
      %341 = vdwg.mxu0
      %342 = vmatprep.subr.bf16.mxu0 0
      %343 = vmatpush1.bf16.msra.mxu0 0
      %344 = vmatprep.subr.bf16.mxu0 0
      %345 = vmatpush1.bf16.msra.mxu0 0
      %346 = vmatprep.subr.bf16.mxu0 0
      %347 = vmatpush1.bf16.msra.mxu0 0
      %348 = vmatprep.subr.bf16.mxu0 0
      %349 = vmatpush1.bf16.msra.mxu0 0
      %350 = vmatprep.subr.bf16.mxu0 0
      %351 = vmatpush1.bf16.msra.mxu0 0
      %352 = vmatprep.subr.bf16.mxu0 0
      %353 = vmatpush1.bf16.msra.mxu0 0
      %354 = vmatprep.subr.bf16.mxu0 0
      %355 = vmatpush1.bf16.msra.mxu0 0
      %356 = vmatprep.subr.bf16.mxu0 0
      %357 = vmatpush1.bf16.msra.mxu0 %v299
      %358 = vmatprep.subr.bf16.mxu0 0
      %359 = vmatpush2.bf16.msra.mxu0 0
      %360 = vmatprep.subr.bf16.mxu0 0
      %361 = vmatpush2.bf16.msra.mxu0 0
      %362 = vmatprep.subr.bf16.mxu0 0
      %363 = vmatpush2.bf16.msra.mxu0 0
      %364 = vmatprep.subr.bf16.mxu0 0
      %365 = vmatpush2.bf16.msra.mxu0 0
      %366 = vmatprep.subr.bf16.mxu0 0
      %367 = vmatpush2.bf16.msra.mxu0 0
      %368 = vmatprep.subr.bf16.mxu0 0
      %369 = vmatpush2.bf16.msra.mxu0 0
      %370 = vmatprep.subr.bf16.mxu0 0
      %371 = vmatpush2.bf16.msra.mxu0 0
      %372 = vmatprep.subr.bf16.mxu0 0
      %373 = vmatpush2.bf16.msra.mxu0 0
      %374 = vmatprep.mubr.bf16.mxu0 0
      %375 = vmatmul.mubr.bf16.gmra.mxu0 %v290
      %v376 = vpop.f32.mrf.mxu0
      %v377 = vadd.f32 %v284, %v376
      %v378 = vpop.f32.mrf.mxu0
      %v379 = vpop.f32.mrf.mxu0
      %v380 = vpop.f32.mrf.mxu0
      %381 = vdwg.mxu0
      %s382 = scalar_lea.vmem %s1, 8
      %v383 = vld [vmem:[%s382] sm:$0xf]
      %384 = vrot.lane.b32.xlu0 %v182, 126
      %v385 = vpop.permute.xlu0 %384
      %386 = vrot.lane.b32.xlu0 %v183, 126
      %v387 = vpop.permute.xlu0 %386
      %388 = vrot.lane.b32.xlu0 %v184, 126
      %v389 = vpop.permute.xlu0 %388
      %vm390 = vcmask 1031168
      %v391 = vsel %vm390, %v385, %v387
      %v392 = vsel %vm390, %v387, %v389
      %v394 = vsel %vm194, %v383, 0
      %v397 = vsel %vm198, %v391, 0
      %v400 = vsel %vm198, %v392, 0
      %v403 = vsel %vm198, %v389, 0
      %405 = vmatprep.subr.bf16.mxu0 0
      %406 = vmatpush1.bf16.msra.mxu0 0
      %407 = vmatprep.subr.bf16.mxu0 0
      %408 = vmatpush1.bf16.msra.mxu0 0
      %409 = vmatprep.subr.bf16.mxu0 0
      %410 = vmatpush1.bf16.msra.mxu0 0
      %411 = vmatprep.subr.bf16.mxu0 0
      %412 = vmatpush1.bf16.msra.mxu0 0
      %413 = vmatprep.subr.bf16.mxu0 0
      %414 = vmatpush1.bf16.msra.mxu0 0
      %415 = vmatprep.subr.bf16.mxu0 0
      %416 = vmatpush1.bf16.msra.mxu0 0
      %417 = vmatprep.subr.bf16.mxu0 0
      %418 = vmatpush1.bf16.msra.mxu0 0
      %419 = vmatprep.subr.bf16.mxu0 %v400
      %420 = vmatpush1.bf16.msra.mxu0 %v397
      %421 = vmatprep.subr.bf16.mxu0 0
      %422 = vmatpush2.bf16.msra.mxu0 0
      %423 = vmatprep.subr.bf16.mxu0 0
      %424 = vmatpush2.bf16.msra.mxu0 0
      %425 = vmatprep.subr.bf16.mxu0 0
      %426 = vmatpush2.bf16.msra.mxu0 0
      %427 = vmatprep.subr.bf16.mxu0 0
      %428 = vmatpush2.bf16.msra.mxu0 0
      %429 = vmatprep.subr.bf16.mxu0 0
      %430 = vmatpush2.bf16.msra.mxu0 0
      %431 = vmatprep.subr.bf16.mxu0 0
      %432 = vmatpush2.bf16.msra.mxu0 0
      %433 = vmatprep.subr.bf16.mxu0 0
      %434 = vmatpush2.bf16.msra.mxu0 0
      %435 = vmatprep.subr.bf16.mxu0 0
      %436 = vmatpush2.bf16.msra.mxu0 0
      %437 = vmatprep.mubr.bf16.mxu0 0
      %438 = vmatmul.mubr.bf16.gmra.mxu0 %v394
      %v439 = vpop.f32.mrf.mxu0
      %v440 = vadd.f32 0.0, %v439
      %v441 = vpop.f32.mrf.mxu0
      %v442 = vadd.f32 0.0, %v441
      %v443 = vpop.f32.mrf.mxu0
      %v444 = vpop.f32.mrf.mxu0
      %445 = vdwg.mxu0
      %446 = vmatprep.subr.bf16.mxu0 0
      %447 = vmatpush1.bf16.msra.mxu0 0
      %448 = vmatprep.subr.bf16.mxu0 0
      %449 = vmatpush1.bf16.msra.mxu0 0
      %450 = vmatprep.subr.bf16.mxu0 0
      %451 = vmatpush1.bf16.msra.mxu0 0
      %452 = vmatprep.subr.bf16.mxu0 0
      %453 = vmatpush1.bf16.msra.mxu0 0
      %454 = vmatprep.subr.bf16.mxu0 0
      %455 = vmatpush1.bf16.msra.mxu0 0
      %456 = vmatprep.subr.bf16.mxu0 0
      %457 = vmatpush1.bf16.msra.mxu0 0
      %458 = vmatprep.subr.bf16.mxu0 0
      %459 = vmatpush1.bf16.msra.mxu0 0
      %460 = vmatprep.subr.bf16.mxu0 0
      %461 = vmatpush1.bf16.msra.mxu0 %v403
      %462 = vmatprep.subr.bf16.mxu0 0
      %463 = vmatpush2.bf16.msra.mxu0 0
      %464 = vmatprep.subr.bf16.mxu0 0
      %465 = vmatpush2.bf16.msra.mxu0 0
      %466 = vmatprep.subr.bf16.mxu0 0
      %467 = vmatpush2.bf16.msra.mxu0 0
      %468 = vmatprep.subr.bf16.mxu0 0
      %469 = vmatpush2.bf16.msra.mxu0 0
      %470 = vmatprep.subr.bf16.mxu0 0
      %471 = vmatpush2.bf16.msra.mxu0 0
      %472 = vmatprep.subr.bf16.mxu0 0
      %473 = vmatpush2.bf16.msra.mxu0 0
      %474 = vmatprep.subr.bf16.mxu0 0
      %475 = vmatpush2.bf16.msra.mxu0 0
      %476 = vmatprep.subr.bf16.mxu0 0
      %477 = vmatpush2.bf16.msra.mxu0 0
      %478 = vmatprep.mubr.bf16.mxu0 0
      %479 = vmatmul.mubr.bf16.gmra.mxu0 %v394
      %v480 = vpop.f32.mrf.mxu0
      %v481 = vadd.f32 0.0, %v480
      %v482 = vpop.f32.mrf.mxu0
      %v483 = vpop.f32.mrf.mxu0
      %v484 = vpop.f32.mrf.mxu0
      %485 = vdwg.mxu0
      %v486 = vadd.f32 %v336, %v440
      %v487 = vadd.f32 %v338, %v442
      %v488 = vadd.f32 %v377, %v481
      %s489 = scalar_lea.vmem %s1, 12
      %v490 = vld [vmem:[%s489] sm:$0xf]
      %491 = vrot.lane.b32.xlu0 %v182, 110
      %v492 = vpop.permute.xlu0 %491
      %493 = vrot.lane.b32.xlu0 %v183, 110
      %v494 = vpop.permute.xlu0 %493
      %495 = vrot.lane.b32.xlu0 %v184, 110
      %v496 = vpop.permute.xlu0 %495
      %vm497 = vcmask 900096
      %v498 = vsel %vm497, %v492, %v494
      %v499 = vsel %vm497, %v494, %v496
      %v501 = vsel %vm194, %v490, 0
      %v504 = vsel %vm198, %v498, 0
      %v507 = vsel %vm198, %v499, 0
      %v510 = vsel %vm198, %v496, 0
      %512 = vmatprep.subr.bf16.mxu0 0
      %513 = vmatpush1.bf16.msra.mxu0 0
      %514 = vmatprep.subr.bf16.mxu0 0
      %515 = vmatpush1.bf16.msra.mxu0 0
      %516 = vmatprep.subr.bf16.mxu0 0
      %517 = vmatpush1.bf16.msra.mxu0 0
      %518 = vmatprep.subr.bf16.mxu0 0
      %519 = vmatpush1.bf16.msra.mxu0 0
      %520 = vmatprep.subr.bf16.mxu0 0
      %521 = vmatpush1.bf16.msra.mxu0 0
      %522 = vmatprep.subr.bf16.mxu0 0
      %523 = vmatpush1.bf16.msra.mxu0 0
      %524 = vmatprep.subr.bf16.mxu0 0
      %525 = vmatpush1.bf16.msra.mxu0 0
      %526 = vmatprep.subr.bf16.mxu0 %v507
      %527 = vmatpush1.bf16.msra.mxu0 %v504
      %528 = vmatprep.subr.bf16.mxu0 0
      %529 = vmatpush2.bf16.msra.mxu0 0
      %530 = vmatprep.subr.bf16.mxu0 0
      %531 = vmatpush2.bf16.msra.mxu0 0
      %532 = vmatprep.subr.bf16.mxu0 0
      %533 = vmatpush2.bf16.msra.mxu0 0
      %534 = vmatprep.subr.bf16.mxu0 0
      %535 = vmatpush2.bf16.msra.mxu0 0
      %536 = vmatprep.subr.bf16.mxu0 0
      %537 = vmatpush2.bf16.msra.mxu0 0
      %538 = vmatprep.subr.bf16.mxu0 0
      %539 = vmatpush2.bf16.msra.mxu0 0
      %540 = vmatprep.subr.bf16.mxu0 0
      %541 = vmatpush2.bf16.msra.mxu0 0
      %542 = vmatprep.subr.bf16.mxu0 0
      %543 = vmatpush2.bf16.msra.mxu0 0
      %544 = vmatprep.mubr.bf16.mxu0 0
      %545 = vmatmul.mubr.bf16.gmra.mxu0 %v501
      %v546 = vpop.f32.mrf.mxu0
      %v547 = vadd.f32 0.0, %v546
      %v548 = vpop.f32.mrf.mxu0
      %v549 = vadd.f32 0.0, %v548
      %v550 = vpop.f32.mrf.mxu0
      %v551 = vpop.f32.mrf.mxu0
      %552 = vdwg.mxu0
      %553 = vmatprep.subr.bf16.mxu0 0
      %554 = vmatpush1.bf16.msra.mxu0 0
      %555 = vmatprep.subr.bf16.mxu0 0
      %556 = vmatpush1.bf16.msra.mxu0 0
      %557 = vmatprep.subr.bf16.mxu0 0
      %558 = vmatpush1.bf16.msra.mxu0 0
      %559 = vmatprep.subr.bf16.mxu0 0
      %560 = vmatpush1.bf16.msra.mxu0 0
      %561 = vmatprep.subr.bf16.mxu0 0
      %562 = vmatpush1.bf16.msra.mxu0 0
      %563 = vmatprep.subr.bf16.mxu0 0
      %564 = vmatpush1.bf16.msra.mxu0 0
      %565 = vmatprep.subr.bf16.mxu0 0
      %566 = vmatpush1.bf16.msra.mxu0 0
      %567 = vmatprep.subr.bf16.mxu0 0
      %568 = vmatpush1.bf16.msra.mxu0 %v510
      %569 = vmatprep.subr.bf16.mxu0 0
      %570 = vmatpush2.bf16.msra.mxu0 0
      %571 = vmatprep.subr.bf16.mxu0 0
      %572 = vmatpush2.bf16.msra.mxu0 0
      %573 = vmatprep.subr.bf16.mxu0 0
      %574 = vmatpush2.bf16.msra.mxu0 0
      %575 = vmatprep.subr.bf16.mxu0 0
      %576 = vmatpush2.bf16.msra.mxu0 0
      %577 = vmatprep.subr.bf16.mxu0 0
      %578 = vmatpush2.bf16.msra.mxu0 0
      %579 = vmatprep.subr.bf16.mxu0 0
      %580 = vmatpush2.bf16.msra.mxu0 0
      %581 = vmatprep.subr.bf16.mxu0 0
      %582 = vmatpush2.bf16.msra.mxu0 0
      %583 = vmatprep.subr.bf16.mxu0 0
      %584 = vmatpush2.bf16.msra.mxu0 0
      %585 = vmatprep.mubr.bf16.mxu0 0
      %586 = vmatmul.mubr.bf16.gmra.mxu0 %v501
      %v587 = vpop.f32.mrf.mxu0
      %v588 = vadd.f32 0.0, %v587
      %v589 = vpop.f32.mrf.mxu0
      %v590 = vpop.f32.mrf.mxu0
      %v591 = vpop.f32.mrf.mxu0
      %592 = vdwg.mxu0
      %v593 = vadd.f32 %v486, %v547
      %v594 = vadd.f32 %v487, %v549
      %v595 = vadd.f32 %v488, %v588
      %s596 = scalar_lea.vmem %s1, 16
      %v597 = vld [vmem:[%s596] sm:$0xf]
      %598 = vrot.lane.b32.xlu0 %v182, 109
      %v599 = vpop.permute.xlu0 %598
      %600 = vrot.lane.b32.xlu0 %v183, 109
      %v601 = vpop.permute.xlu0 %600
      %602 = vrot.lane.b32.xlu0 %v184, 109
      %v603 = vpop.permute.xlu0 %602
      %vm604 = vcmask 891904
      %v605 = vsel %vm604, %v599, %v601
      %v606 = vsel %vm604, %v601, %v603
      %v608 = vsel %vm194, %v597, 0
      %v611 = vsel %vm198, %v605, 0
      %v614 = vsel %vm198, %v606, 0
      %v617 = vsel %vm198, %v603, 0
      %619 = vmatprep.subr.bf16.mxu0 0
      %620 = vmatpush1.bf16.msra.mxu0 0
      %621 = vmatprep.subr.bf16.mxu0 0
      %622 = vmatpush1.bf16.msra.mxu0 0
      %623 = vmatprep.subr.bf16.mxu0 0
      %624 = vmatpush1.bf16.msra.mxu0 0
      %625 = vmatprep.subr.bf16.mxu0 0
      %626 = vmatpush1.bf16.msra.mxu0 0
      %627 = vmatprep.subr.bf16.mxu0 0
      %628 = vmatpush1.bf16.msra.mxu0 0
      %629 = vmatprep.subr.bf16.mxu0 0
      %630 = vmatpush1.bf16.msra.mxu0 0
      %631 = vmatprep.subr.bf16.mxu0 0
      %632 = vmatpush1.bf16.msra.mxu0 0
      %633 = vmatprep.subr.bf16.mxu0 %v614
      %634 = vmatpush1.bf16.msra.mxu0 %v611
      %635 = vmatprep.subr.bf16.mxu0 0
      %636 = vmatpush2.bf16.msra.mxu0 0
      %637 = vmatprep.subr.bf16.mxu0 0
      %638 = vmatpush2.bf16.msra.mxu0 0
      %639 = vmatprep.subr.bf16.mxu0 0
      %640 = vmatpush2.bf16.msra.mxu0 0
      %641 = vmatprep.subr.bf16.mxu0 0
      %642 = vmatpush2.bf16.msra.mxu0 0
      %643 = vmatprep.subr.bf16.mxu0 0
      %644 = vmatpush2.bf16.msra.mxu0 0
      %645 = vmatprep.subr.bf16.mxu0 0
      %646 = vmatpush2.bf16.msra.mxu0 0
      %647 = vmatprep.subr.bf16.mxu0 0
      %648 = vmatpush2.bf16.msra.mxu0 0
      %649 = vmatprep.subr.bf16.mxu0 0
      %650 = vmatpush2.bf16.msra.mxu0 0
      %651 = vmatprep.mubr.bf16.mxu0 0
      %652 = vmatmul.mubr.bf16.gmra.mxu0 %v608
      %v653 = vpop.f32.mrf.mxu0
      %v654 = vadd.f32 0.0, %v653
      %v655 = vpop.f32.mrf.mxu0
      %v656 = vadd.f32 0.0, %v655
      %v657 = vpop.f32.mrf.mxu0
      %v658 = vpop.f32.mrf.mxu0
      %659 = vdwg.mxu0
      %660 = vmatprep.subr.bf16.mxu0 0
      %661 = vmatpush1.bf16.msra.mxu0 0
      %662 = vmatprep.subr.bf16.mxu0 0
      %663 = vmatpush1.bf16.msra.mxu0 0
      %664 = vmatprep.subr.bf16.mxu0 0
      %665 = vmatpush1.bf16.msra.mxu0 0
      %666 = vmatprep.subr.bf16.mxu0 0
      %667 = vmatpush1.bf16.msra.mxu0 0
      %668 = vmatprep.subr.bf16.mxu0 0
      %669 = vmatpush1.bf16.msra.mxu0 0
      %670 = vmatprep.subr.bf16.mxu0 0
      %671 = vmatpush1.bf16.msra.mxu0 0
      %672 = vmatprep.subr.bf16.mxu0 0
      %673 = vmatpush1.bf16.msra.mxu0 0
      %674 = vmatprep.subr.bf16.mxu0 0
      %675 = vmatpush1.bf16.msra.mxu0 %v617
      %676 = vmatprep.subr.bf16.mxu0 0
      %677 = vmatpush2.bf16.msra.mxu0 0
      %678 = vmatprep.subr.bf16.mxu0 0
      %679 = vmatpush2.bf16.msra.mxu0 0
      %680 = vmatprep.subr.bf16.mxu0 0
      %681 = vmatpush2.bf16.msra.mxu0 0
      %682 = vmatprep.subr.bf16.mxu0 0
      %683 = vmatpush2.bf16.msra.mxu0 0
      %684 = vmatprep.subr.bf16.mxu0 0
      %685 = vmatpush2.bf16.msra.mxu0 0
      %686 = vmatprep.subr.bf16.mxu0 0
      %687 = vmatpush2.bf16.msra.mxu0 0
      %688 = vmatprep.subr.bf16.mxu0 0
      %689 = vmatpush2.bf16.msra.mxu0 0
      %690 = vmatprep.subr.bf16.mxu0 0
      %691 = vmatpush2.bf16.msra.mxu0 0
      %692 = vmatprep.mubr.bf16.mxu0 0
      %693 = vmatmul.mubr.bf16.gmra.mxu0 %v608
      %v694 = vpop.f32.mrf.mxu0
      %v695 = vadd.f32 0.0, %v694
      %v696 = vpop.f32.mrf.mxu0
      %v697 = vpop.f32.mrf.mxu0
      %v698 = vpop.f32.mrf.mxu0
      %699 = vdwg.mxu0
      %v700 = vadd.f32 %v593, %v654
      %v701 = vadd.f32 %v594, %v656
      %v702 = vadd.f32 %v595, %v695
      %s703 = scalar_lea.vmem %s1, 20
      %v704 = vld [vmem:[%s703] sm:$0xf]
      %705 = vrot.lane.b32.xlu0 %v182, 108
      %v706 = vpop.permute.xlu0 %705
      %707 = vrot.lane.b32.xlu0 %v183, 108
      %v708 = vpop.permute.xlu0 %707
      %709 = vrot.lane.b32.xlu0 %v184, 108
      %v710 = vpop.permute.xlu0 %709
      %vm711 = vcmask 883712
      %v712 = vsel %vm711, %v706, %v708
      %v713 = vsel %vm711, %v708, %v710
      %v715 = vsel %vm194, %v704, 0
      %v718 = vsel %vm198, %v712, 0
      %v721 = vsel %vm198, %v713, 0
      %v724 = vsel %vm198, %v710, 0
      %726 = vmatprep.subr.bf16.mxu0 0
      %727 = vmatpush1.bf16.msra.mxu0 0
      %728 = vmatprep.subr.bf16.mxu0 0
      %729 = vmatpush1.bf16.msra.mxu0 0
      %730 = vmatprep.subr.bf16.mxu0 0
      %731 = vmatpush1.bf16.msra.mxu0 0
      %732 = vmatprep.subr.bf16.mxu0 0
      %733 = vmatpush1.bf16.msra.mxu0 0
      %734 = vmatprep.subr.bf16.mxu0 0
      %735 = vmatpush1.bf16.msra.mxu0 0
      %736 = vmatprep.subr.bf16.mxu0 0
      %737 = vmatpush1.bf16.msra.mxu0 0
      %738 = vmatprep.subr.bf16.mxu0 0
      %739 = vmatpush1.bf16.msra.mxu0 0
      %740 = vmatprep.subr.bf16.mxu0 %v721
      %741 = vmatpush1.bf16.msra.mxu0 %v718
      %742 = vmatprep.subr.bf16.mxu0 0
      %743 = vmatpush2.bf16.msra.mxu0 0
      %744 = vmatprep.subr.bf16.mxu0 0
      %745 = vmatpush2.bf16.msra.mxu0 0
      %746 = vmatprep.subr.bf16.mxu0 0
      %747 = vmatpush2.bf16.msra.mxu0 0
      %748 = vmatprep.subr.bf16.mxu0 0
      %749 = vmatpush2.bf16.msra.mxu0 0
      %750 = vmatprep.subr.bf16.mxu0 0
      %751 = vmatpush2.bf16.msra.mxu0 0
      %752 = vmatprep.subr.bf16.mxu0 0
      %753 = vmatpush2.bf16.msra.mxu0 0
      %754 = vmatprep.subr.bf16.mxu0 0
      %755 = vmatpush2.bf16.msra.mxu0 0
      %756 = vmatprep.subr.bf16.mxu0 0
      %757 = vmatpush2.bf16.msra.mxu0 0
      %758 = vmatprep.mubr.bf16.mxu0 0
      %759 = vmatmul.mubr.bf16.gmra.mxu0 %v715
      %v760 = vpop.f32.mrf.mxu0
      %v761 = vadd.f32 0.0, %v760
      %v762 = vpop.f32.mrf.mxu0
      %v763 = vadd.f32 0.0, %v762
      %v764 = vpop.f32.mrf.mxu0
      %v765 = vpop.f32.mrf.mxu0
      %766 = vdwg.mxu0
      %767 = vmatprep.subr.bf16.mxu0 0
      %768 = vmatpush1.bf16.msra.mxu0 0
      %769 = vmatprep.subr.bf16.mxu0 0
      %770 = vmatpush1.bf16.msra.mxu0 0
      %771 = vmatprep.subr.bf16.mxu0 0
      %772 = vmatpush1.bf16.msra.mxu0 0
      %773 = vmatprep.subr.bf16.mxu0 0
      %774 = vmatpush1.bf16.msra.mxu0 0
      %775 = vmatprep.subr.bf16.mxu0 0
      %776 = vmatpush1.bf16.msra.mxu0 0
      %777 = vmatprep.subr.bf16.mxu0 0
      %778 = vmatpush1.bf16.msra.mxu0 0
      %779 = vmatprep.subr.bf16.mxu0 0
      %780 = vmatpush1.bf16.msra.mxu0 0
      %781 = vmatprep.subr.bf16.mxu0 0
      %782 = vmatpush1.bf16.msra.mxu0 %v724
      %783 = vmatprep.subr.bf16.mxu0 0
      %784 = vmatpush2.bf16.msra.mxu0 0
      %785 = vmatprep.subr.bf16.mxu0 0
      %786 = vmatpush2.bf16.msra.mxu0 0
      %787 = vmatprep.subr.bf16.mxu0 0
      %788 = vmatpush2.bf16.msra.mxu0 0
      %789 = vmatprep.subr.bf16.mxu0 0
      %790 = vmatpush2.bf16.msra.mxu0 0
      %791 = vmatprep.subr.bf16.mxu0 0
      %792 = vmatpush2.bf16.msra.mxu0 0
      %793 = vmatprep.subr.bf16.mxu0 0
      %794 = vmatpush2.bf16.msra.mxu0 0
      %795 = vmatprep.subr.bf16.mxu0 0
      %796 = vmatpush2.bf16.msra.mxu0 0
      %797 = vmatprep.subr.bf16.mxu0 0
      %798 = vmatpush2.bf16.msra.mxu0 0
      %799 = vmatprep.mubr.bf16.mxu0 0
      %800 = vmatmul.mubr.bf16.gmra.mxu0 %v715
      %v801 = vpop.f32.mrf.mxu0
      %v802 = vadd.f32 0.0, %v801
      %v803 = vpop.f32.mrf.mxu0
      %v804 = vpop.f32.mrf.mxu0
      %v805 = vpop.f32.mrf.mxu0
      %806 = vdwg.mxu0
      %v807 = vadd.f32 %v700, %v761
      %v808 = vadd.f32 %v701, %v763
      %v809 = vadd.f32 %v702, %v802
      %s810 = scalar_lea.vmem %s1, 24
      %v811 = vld [vmem:[%s810] sm:$0xf]
      %812 = vrot.lane.b32.xlu0 %v182, 92
      %v813 = vpop.permute.xlu0 %812
      %814 = vrot.lane.b32.xlu0 %v183, 92
      %v815 = vpop.permute.xlu0 %814
      %816 = vrot.lane.b32.xlu0 %v184, 92
      %v817 = vpop.permute.xlu0 %816
      %vm818 = vcmask 752640
      %v819 = vsel %vm818, %v813, %v815
      %v820 = vsel %vm818, %v815, %v817
      %v822 = vsel %vm194, %v811, 0
      %v825 = vsel %vm198, %v819, 0
      %v828 = vsel %vm198, %v820, 0
      %v831 = vsel %vm198, %v817, 0
      %833 = vmatprep.subr.bf16.mxu0 0
      %834 = vmatpush1.bf16.msra.mxu0 0
      %835 = vmatprep.subr.bf16.mxu0 0
      %836 = vmatpush1.bf16.msra.mxu0 0
      %837 = vmatprep.subr.bf16.mxu0 0
      %838 = vmatpush1.bf16.msra.mxu0 0
      %839 = vmatprep.subr.bf16.mxu0 0
      %840 = vmatpush1.bf16.msra.mxu0 0
      %841 = vmatprep.subr.bf16.mxu0 0
      %842 = vmatpush1.bf16.msra.mxu0 0
      %843 = vmatprep.subr.bf16.mxu0 0
      %844 = vmatpush1.bf16.msra.mxu0 0
      %845 = vmatprep.subr.bf16.mxu0 0
      %846 = vmatpush1.bf16.msra.mxu0 0
      %847 = vmatprep.subr.bf16.mxu0 %v828
      %848 = vmatpush1.bf16.msra.mxu0 %v825
      %849 = vmatprep.subr.bf16.mxu0 0
      %850 = vmatpush2.bf16.msra.mxu0 0
      %851 = vmatprep.subr.bf16.mxu0 0
      %852 = vmatpush2.bf16.msra.mxu0 0
      %853 = vmatprep.subr.bf16.mxu0 0
      %854 = vmatpush2.bf16.msra.mxu0 0
      %855 = vmatprep.subr.bf16.mxu0 0
      %856 = vmatpush2.bf16.msra.mxu0 0
      %857 = vmatprep.subr.bf16.mxu0 0
      %858 = vmatpush2.bf16.msra.mxu0 0
      %859 = vmatprep.subr.bf16.mxu0 0
      %860 = vmatpush2.bf16.msra.mxu0 0
      %861 = vmatprep.subr.bf16.mxu0 0
      %862 = vmatpush2.bf16.msra.mxu0 0
      %863 = vmatprep.subr.bf16.mxu0 0
      %864 = vmatpush2.bf16.msra.mxu0 0
      %865 = vmatprep.mubr.bf16.mxu0 0
      %866 = vmatmul.mubr.bf16.gmra.mxu0 %v822
      %v867 = vpop.f32.mrf.mxu0
      %v868 = vadd.f32 0.0, %v867
      %v869 = vpop.f32.mrf.mxu0
      %v870 = vadd.f32 0.0, %v869
      %v871 = vpop.f32.mrf.mxu0
      %v872 = vpop.f32.mrf.mxu0
      %873 = vdwg.mxu0
      %874 = vmatprep.subr.bf16.mxu0 0
      %875 = vmatpush1.bf16.msra.mxu0 0
      %876 = vmatprep.subr.bf16.mxu0 0
      %877 = vmatpush1.bf16.msra.mxu0 0
      %878 = vmatprep.subr.bf16.mxu0 0
      %879 = vmatpush1.bf16.msra.mxu0 0
      %880 = vmatprep.subr.bf16.mxu0 0
      %881 = vmatpush1.bf16.msra.mxu0 0
      %882 = vmatprep.subr.bf16.mxu0 0
      %883 = vmatpush1.bf16.msra.mxu0 0
      %884 = vmatprep.subr.bf16.mxu0 0
      %885 = vmatpush1.bf16.msra.mxu0 0
      %886 = vmatprep.subr.bf16.mxu0 0
      %887 = vmatpush1.bf16.msra.mxu0 0
      %888 = vmatprep.subr.bf16.mxu0 0
      %889 = vmatpush1.bf16.msra.mxu0 %v831
      %890 = vmatprep.subr.bf16.mxu0 0
      %891 = vmatpush2.bf16.msra.mxu0 0
      %892 = vmatprep.subr.bf16.mxu0 0
      %893 = vmatpush2.bf16.msra.mxu0 0
      %894 = vmatprep.subr.bf16.mxu0 0
      %895 = vmatpush2.bf16.msra.mxu0 0
      %896 = vmatprep.subr.bf16.mxu0 0
      %897 = vmatpush2.bf16.msra.mxu0 0
      %898 = vmatprep.subr.bf16.mxu0 0
      %899 = vmatpush2.bf16.msra.mxu0 0
      %900 = vmatprep.subr.bf16.mxu0 0
      %901 = vmatpush2.bf16.msra.mxu0 0
      %902 = vmatprep.subr.bf16.mxu0 0
      %903 = vmatpush2.bf16.msra.mxu0 0
      %904 = vmatprep.subr.bf16.mxu0 0
      %905 = vmatpush2.bf16.msra.mxu0 0
      %906 = vmatprep.mubr.bf16.mxu0 0
      %907 = vmatmul.mubr.bf16.gmra.mxu0 %v822
      %v908 = vpop.f32.mrf.mxu0
      %v909 = vadd.f32 0.0, %v908
      %v910 = vpop.f32.mrf.mxu0
      %v911 = vpop.f32.mrf.mxu0
      %v912 = vpop.f32.mrf.mxu0
      %913 = vdwg.mxu0
      %v914 = vadd.f32 %v807, %v868
      %v915 = vadd.f32 %v808, %v870
      %v916 = vadd.f32 %v809, %v909
      %s917 = scalar_lea.vmem %s1, 28
      %v918 = vld [vmem:[%s917] sm:$0xf]
      %919 = vrot.lane.b32.xlu0 %v182, 91
      %v920 = vpop.permute.xlu0 %919
      %921 = vrot.lane.b32.xlu0 %v183, 91
      %v922 = vpop.permute.xlu0 %921
      %923 = vrot.lane.b32.xlu0 %v184, 91
      %v924 = vpop.permute.xlu0 %923
      %vm925 = vcmask 744448
      %v926 = vsel %vm925, %v920, %v922
      %v927 = vsel %vm925, %v922, %v924
      %v929 = vsel %vm194, %v918, 0
      %v932 = vsel %vm198, %v926, 0
      %v935 = vsel %vm198, %v927, 0
      %v938 = vsel %vm198, %v924, 0
      %940 = vmatprep.subr.bf16.mxu0 0
      %941 = vmatpush1.bf16.msra.mxu0 0
      %942 = vmatprep.subr.bf16.mxu0 0
      %943 = vmatpush1.bf16.msra.mxu0 0
      %944 = vmatprep.subr.bf16.mxu0 0
      %945 = vmatpush1.bf16.msra.mxu0 0
      %946 = vmatprep.subr.bf16.mxu0 0
      %947 = vmatpush1.bf16.msra.mxu0 0
      %948 = vmatprep.subr.bf16.mxu0 0
      %949 = vmatpush1.bf16.msra.mxu0 0
      %950 = vmatprep.subr.bf16.mxu0 0
      %951 = vmatpush1.bf16.msra.mxu0 0
      %952 = vmatprep.subr.bf16.mxu0 0
      %953 = vmatpush1.bf16.msra.mxu0 0
      %954 = vmatprep.subr.bf16.mxu0 %v935
      %955 = vmatpush1.bf16.msra.mxu0 %v932
      %956 = vmatprep.subr.bf16.mxu0 0
      %957 = vmatpush2.bf16.msra.mxu0 0
      %958 = vmatprep.subr.bf16.mxu0 0
      %959 = vmatpush2.bf16.msra.mxu0 0
      %960 = vmatprep.subr.bf16.mxu0 0
      %961 = vmatpush2.bf16.msra.mxu0 0
      %962 = vmatprep.subr.bf16.mxu0 0
      %963 = vmatpush2.bf16.msra.mxu0 0
      %964 = vmatprep.subr.bf16.mxu0 0
      %965 = vmatpush2.bf16.msra.mxu0 0
      %966 = vmatprep.subr.bf16.mxu0 0
      %967 = vmatpush2.bf16.msra.mxu0 0
      %968 = vmatprep.subr.bf16.mxu0 0
      %969 = vmatpush2.bf16.msra.mxu0 0
      %970 = vmatprep.subr.bf16.mxu0 0
      %971 = vmatpush2.bf16.msra.mxu0 0
      %972 = vmatprep.mubr.bf16.mxu0 0
      %973 = vmatmul.mubr.bf16.gmra.mxu0 %v929
      %v974 = vpop.f32.mrf.mxu0
      %v975 = vadd.f32 0.0, %v974
      %v976 = vpop.f32.mrf.mxu0
      %v977 = vadd.f32 0.0, %v976
      %v978 = vpop.f32.mrf.mxu0
      %v979 = vpop.f32.mrf.mxu0
      %980 = vdwg.mxu0
      %981 = vmatprep.subr.bf16.mxu0 0
      %982 = vmatpush1.bf16.msra.mxu0 0
      %983 = vmatprep.subr.bf16.mxu0 0
      %984 = vmatpush1.bf16.msra.mxu0 0
      %985 = vmatprep.subr.bf16.mxu0 0
      %986 = vmatpush1.bf16.msra.mxu0 0
      %987 = vmatprep.subr.bf16.mxu0 0
      %988 = vmatpush1.bf16.msra.mxu0 0
      %989 = vmatprep.subr.bf16.mxu0 0
      %990 = vmatpush1.bf16.msra.mxu0 0
      %991 = vmatprep.subr.bf16.mxu0 0
      %992 = vmatpush1.bf16.msra.mxu0 0
      %993 = vmatprep.subr.bf16.mxu0 0
      %994 = vmatpush1.bf16.msra.mxu0 0
      %995 = vmatprep.subr.bf16.mxu0 0
      %996 = vmatpush1.bf16.msra.mxu0 %v938
      %997 = vmatprep.subr.bf16.mxu0 0
      %998 = vmatpush2.bf16.msra.mxu0 0
      %999 = vmatprep.subr.bf16.mxu0 0
      %1000 = vmatpush2.bf16.msra.mxu0 0
      %1001 = vmatprep.subr.bf16.mxu0 0
      %1002 = vmatpush2.bf16.msra.mxu0 0
      %1003 = vmatprep.subr.bf16.mxu0 0
      %1004 = vmatpush2.bf16.msra.mxu0 0
      %1005 = vmatprep.subr.bf16.mxu0 0
      %1006 = vmatpush2.bf16.msra.mxu0 0
      %1007 = vmatprep.subr.bf16.mxu0 0
      %1008 = vmatpush2.bf16.msra.mxu0 0
      %1009 = vmatprep.subr.bf16.mxu0 0
      %1010 = vmatpush2.bf16.msra.mxu0 0
      %1011 = vmatprep.subr.bf16.mxu0 0
      %1012 = vmatpush2.bf16.msra.mxu0 0
      %1013 = vmatprep.mubr.bf16.mxu0 0
      %1014 = vmatmul.mubr.bf16.gmra.mxu0 %v929
      %v1015 = vpop.f32.mrf.mxu0
      %v1016 = vadd.f32 0.0, %v1015
      %v1017 = vpop.f32.mrf.mxu0
      %v1018 = vpop.f32.mrf.mxu0
      %v1019 = vpop.f32.mrf.mxu0
      %1020 = vdwg.mxu0
      %v1021 = vadd.f32 %v914, %v975
      %v1022 = vadd.f32 %v915, %v977
      %v1023 = vadd.f32 %v916, %v1016
      %s1024 = scalar_lea.vmem %s1, 32
      %v1025 = vld [vmem:[%s1024] sm:$0xf]
      %1026 = vrot.lane.b32.xlu0 %v182, 90
      %v1027 = vpop.permute.xlu0 %1026
      %1028 = vrot.lane.b32.xlu0 %v183, 90
      %v1029 = vpop.permute.xlu0 %1028
      %1030 = vrot.lane.b32.xlu0 %v184, 90
      %v1031 = vpop.permute.xlu0 %1030
      %vm1032 = vcmask 736256
      %v1033 = vsel %vm1032, %v1027, %v1029
      %v1034 = vsel %vm1032, %v1029, %v1031
      %v1036 = vsel %vm194, %v1025, 0
      %v1039 = vsel %vm198, %v1033, 0
      %v1042 = vsel %vm198, %v1034, 0
      %v1045 = vsel %vm198, %v1031, 0
      %1047 = vmatprep.subr.bf16.mxu0 0
      %1048 = vmatpush1.bf16.msra.mxu0 0
      %1049 = vmatprep.subr.bf16.mxu0 0
      %1050 = vmatpush1.bf16.msra.mxu0 0
      %1051 = vmatprep.subr.bf16.mxu0 0
      %1052 = vmatpush1.bf16.msra.mxu0 0
      %1053 = vmatprep.subr.bf16.mxu0 0
      %1054 = vmatpush1.bf16.msra.mxu0 0
      %1055 = vmatprep.subr.bf16.mxu0 0
      %1056 = vmatpush1.bf16.msra.mxu0 0
      %1057 = vmatprep.subr.bf16.mxu0 0
      %1058 = vmatpush1.bf16.msra.mxu0 0
      %1059 = vmatprep.subr.bf16.mxu0 0
      %1060 = vmatpush1.bf16.msra.mxu0 0
      %1061 = vmatprep.subr.bf16.mxu0 %v1042
      %1062 = vmatpush1.bf16.msra.mxu0 %v1039
      %1063 = vmatprep.subr.bf16.mxu0 0
      %1064 = vmatpush2.bf16.msra.mxu0 0
      %1065 = vmatprep.subr.bf16.mxu0 0
      %1066 = vmatpush2.bf16.msra.mxu0 0
      %1067 = vmatprep.subr.bf16.mxu0 0
      %1068 = vmatpush2.bf16.msra.mxu0 0
      %1069 = vmatprep.subr.bf16.mxu0 0
      %1070 = vmatpush2.bf16.msra.mxu0 0
      %1071 = vmatprep.subr.bf16.mxu0 0
      %1072 = vmatpush2.bf16.msra.mxu0 0
      %1073 = vmatprep.subr.bf16.mxu0 0
      %1074 = vmatpush2.bf16.msra.mxu0 0
      %1075 = vmatprep.subr.bf16.mxu0 0
      %1076 = vmatpush2.bf16.msra.mxu0 0
      %1077 = vmatprep.subr.bf16.mxu0 0
      %1078 = vmatpush2.bf16.msra.mxu0 0
      %1079 = vmatprep.mubr.bf16.mxu0 0
      %1080 = vmatmul.mubr.bf16.gmra.mxu0 %v1036
      %v1081 = vpop.f32.mrf.mxu0
      %v1082 = vadd.f32 0.0, %v1081
      %v1083 = vpop.f32.mrf.mxu0
      %v1084 = vadd.f32 0.0, %v1083
      %v1085 = vpop.f32.mrf.mxu0
      %v1086 = vpop.f32.mrf.mxu0
      %1087 = vdwg.mxu0
      %1088 = vmatprep.subr.bf16.mxu0 0
      %1089 = vmatpush1.bf16.msra.mxu0 0
      %1090 = vmatprep.subr.bf16.mxu0 0
      %1091 = vmatpush1.bf16.msra.mxu0 0
      %1092 = vmatprep.subr.bf16.mxu0 0
      %1093 = vmatpush1.bf16.msra.mxu0 0
      %1094 = vmatprep.subr.bf16.mxu0 0
      %1095 = vmatpush1.bf16.msra.mxu0 0
      %1096 = vmatprep.subr.bf16.mxu0 0
      %1097 = vmatpush1.bf16.msra.mxu0 0
      %1098 = vmatprep.subr.bf16.mxu0 0
      %1099 = vmatpush1.bf16.msra.mxu0 0
      %1100 = vmatprep.subr.bf16.mxu0 0
      %1101 = vmatpush1.bf16.msra.mxu0 0
      %1102 = vmatprep.subr.bf16.mxu0 0
      %1103 = vmatpush1.bf16.msra.mxu0 %v1045
      %1104 = vmatprep.subr.bf16.mxu0 0
      %1105 = vmatpush2.bf16.msra.mxu0 0
      %1106 = vmatprep.subr.bf16.mxu0 0
      %1107 = vmatpush2.bf16.msra.mxu0 0
      %1108 = vmatprep.subr.bf16.mxu0 0
      %1109 = vmatpush2.bf16.msra.mxu0 0
      %1110 = vmatprep.subr.bf16.mxu0 0
      %1111 = vmatpush2.bf16.msra.mxu0 0
      %1112 = vmatprep.subr.bf16.mxu0 0
      %1113 = vmatpush2.bf16.msra.mxu0 0
      %1114 = vmatprep.subr.bf16.mxu0 0
      %1115 = vmatpush2.bf16.msra.mxu0 0
      %1116 = vmatprep.subr.bf16.mxu0 0
      %1117 = vmatpush2.bf16.msra.mxu0 0
      %1118 = vmatprep.subr.bf16.mxu0 0
      %1119 = vmatpush2.bf16.msra.mxu0 0
      %1120 = vmatprep.mubr.bf16.mxu0 0
      %1121 = vmatmul.mubr.bf16.gmra.mxu0 %v1036
      %v1122 = vpop.f32.mrf.mxu0
      %v1123 = vadd.f32 0.0, %v1122
      %v1124 = vpop.f32.mrf.mxu0
      %v1125 = vpop.f32.mrf.mxu0
      %v1126 = vpop.f32.mrf.mxu0
      %1127 = vdwg.mxu0
      %v1128 = vadd.f32 %v1021, %v1082
      %v1129 = vadd.f32 %v1022, %v1084
      %v1130 = vadd.f32 %v1023, %v1123
      %v1131 = vld [vmem:[%s2] sm:$0xff]
      %1133 = vset.pattern.permute.xlu0 0
      %1134 = vperm.xlu0 %1133, %v1131
      %v1135 = vpop.permute.xlu0 %1134
      %v1137 = vadd.f32 %v1128, %v1135
      %v1138 = vadd.f32 %v1129, %v1135
      %v1139 = vadd.f32 %v1130, %v1135
      %v1140 = vxor.u32 %v1137, 2147483648
      %v1141 = vxor.u32 %v1138, 2147483648
      %v1142 = vxor.u32 %v1139, 2147483648
      %v1143 = vmul.f32 %v1140, 1.442695
      %v1144 = vpow.pop %v1143
      %v1145 = vmul.f32 %v1141, 1.442695
      %v1146 = vpow.pop %v1145
      %v1147 = vmul.f32 %v1142, 1.442695
      %v1148 = vpow.pop %v1147
      %v1149 = vadd.f32 %v1144, 1.0
      %v1150 = vadd.f32 %v1146, 1.0
      %v1151 = vadd.f32 %v1148, 1.0
      %v1152 = vrcp.pop %v1149
      %v1153 = vmul.f32 1.0, %v1152
      %v1154 = vrcp.pop %v1150
      %v1155 = vmul.f32 1.0, %v1154
      %v1156 = vrcp.pop %v1151
      %v1157 = vmul.f32 1.0, %v1156
      %v1158 = vmul.f32 %v1137, %v1153
      %v1159 = vmul.f32 %v1138, %v1155
      %v1160 = vmul.f32 %v1139, %v1157
      %v1161 = vpack.c.bf16 %v1158, %v1158
      %v1162 = vpack.c.bf16 %v1159, %v1159
      %v1163 = vpack.c.bf16 %v1160, %v1160
      %v1167 = vunpack.c.l.b16 %v1161
      %v1168 = vunpack.c.l.b16 %v1162
      %v1169 = vunpack.c.l.b16 %v1163
      %v1170 = vpack.c.b16 %v1168, %v1167
      %v1171 = vpack.c.b16 %v1169, %v1169
      %1174 = vst [vmem:[%s170] sm:$0xff] %v1170
      %vm1175 = vcmask 257024
      %1176 = vst.msk [vmem:[%s170 + $0x8] sm:$0xf] %vm1175, %v1171
      %p1177 = scmp.lt.s32.totalorder %s14, 1
      %s1178 = scalar_select %p1177, %s14, 1
      %s1179 = smul.addr %s1178, 3
      %s1180 = smul.addr %s1179, 4
      %s1181 = scalar_lea.vmem %s3, %s1180
      // Predicated region
      $region33: #{_lambda_.6} parent=31 // pred_check
        %p1182 = pneg %p100
      $region34: #{_lambda_.6} parent=31 // pred_check_branch
        %1184 = sbr.rel (%p1182) target = $region36
      $region35: #{_lambda_.6} parent=31 // pred_region
        _
      $region36: #{_lambda_.6} parent=31 // pred_fallthru
        _
    $region32: #{_lambda_.6} parent=5 // pred_fallthru
      _
    %p1185 = scmp.le.s32.totalorder 2, %s9
    // Predicated region
    $region37: #{_lambda_.6} parent=5 // pred_check
      %p1186 = pneg %p1185
    $region38: #{_lambda_.6} parent=5 // pred_check_branch
      %1188 = sbr.rel (%p1186) target = $region40
    $region39: #{_lambda_.6} parent=5 // pred_region
      %s1189 = ssub.s32 %s9, 2
      // Predicated region
      $region41: #{_lambda_.6} parent=39 // pred_check
        %p1190 = pneg %p106
      $region42: #{_lambda_.6} parent=39 // pred_check_branch
        %1192 = sbr.rel (%p1190) target = $region44
      $region43: #{_lambda_.6} parent=39 // pred_region
        %p1193 = scmp.lt.s32.totalorder %s15, 1
        %s1194 = scalar_select %p1193, %s15, 1
        %s1195 = smul.addr %s1194, 3
        %s1196 = smul.addr %s1195, 4
        %s1197 = scalar_lea.vmem %s3, %s1196
      $region44: #{_lambda_.6} parent=39 // pred_fallthru
        _
    $region40: #{_lambda_.6} parent=5 // pred_fallthru
      _
  $region6: #{_lambda_.6} parent=0 // loop_footer
    %s13 = sadd.s32 1, %s9
  $region7: #{_lambda_.6} parent=0 // loop_footer_branch
    %8 = sbr.rel target = $region3
  $region8: #{_lambda_.6} parent=0 // loop_exit
    _

// kernel: _lambda_.9
$region0: #{_lambda_.9}
  #allocation0 [shape = 'u32[]', space=smem, size = 0x4, offset = 0x4, fixed_abs, tag = 'smem constant byte address 0x4 - core index']
  #allocation1 [shape = 'u32[144,128]{1,0:T(1,128)}', space=vmem, size = 0x12000, scoped, tag = 'internal scratch']
  %s0 = inlined_call_operand.vmem [shape: bf16[2,24,256], index: 0, kind: input, shape index: {}]
  %s1 = inlined_call_operand.vmem [shape: bf16[16,24], index: 1, kind: input, shape index: {}]
  %s2 = inlined_call_operand.vmem [shape: f32[16,1], index: 2, kind: input, shape index: {}]
  %s3 = inlined_call_operand.vmem [shape: f32[2,16,256], index: 3, kind: output, shape index: {}]
  %s4 = sld [smem:[#allocation0]]
  $region45: #{_lambda_.9} parent=0
    _
  %s6 = ssub.s32 1, %s4
  %s7 = scalar_select 0, %s6, %s4
  loop: start=0, step=1, limit=4
  $region2: #{_lambda_.9} parent=0 // loop_pre_header
    _
  $region3: #{_lambda_.9} parent=0 // loop_header
    %s9 = sphi 0, %s13
    %p10 = scmp.ge.s32.totalorder %s9, 4
    %s16 = sphi 0, %s28
    %s17 = sphi 0, %s24
    %s18 = sphi 0, %s16
    %s19 = sphi 0, %s17
    %s20 = sphi 0, %s18
    %s21 = sphi 0, %s19
    %s33 = sphi 0, %s35
    %s36 = sphi 0, %s33
    %s37 = sphi 0, %s36
    %s53 = sphi 0, %s37
    %s57 = sphi 0, %s57
    %s59 = sphi 0, %s57
    %s60 = sphi 0, %s59
    %s74 = sphi 0, %s60
    %s78 = sphi 0, %s78
    %s80 = sphi 0, %s78
    %s81 = sphi 0, %s80
    %s95 = sphi 0, %s81
    %s103 = sphi 0, %s105
    %s106 = sphi 0, %s103
    %s107 = sphi 0, %s106
    %s123 = sphi 0, %s107
  $region4: #{_lambda_.9} parent=0 // loop_header_branch
    %12 = sbr.rel (%p10) target = $region8
  $region5: #{_lambda_.9} parent=0 // loop_body
    %s14 = ssub.s32 %s9, 1
    %s15 = ssub.s32 %s9, 2
    %s22 = sadd.s32 1, %s17
    %p23 = scmp.ge.s32.totalorder %s22, 1
    %s24 = scalar_select %p23, 0, %s22
    %s25 = sadd.s32 1, %s16
    %s26 = scalar_select %p23, %s25, %s16
    %p27 = scmp.ge.s32.totalorder %s26, 2
    %s28 = scalar_select %p27, 0, %s26
    %s29 = ssub.s32 %s16, %s28
    %s30 = ssub.s32 %s17, %s24
    %s31 = sor.u32 %s29, %s30
    %p32 = scmp.eq.s32.totalorder %s31, 0
    %s34 = sadd.s32 %s33, 1
    %s35 = scalar_select %p32, %s33, %s34
    %p38 = pneg %p32
    %p39 = scmp.eq.s32.totalorder %s9, 1
    %p40 = por %p38, %p39
    %p41 = scmp.ne.s32.totalorder %s33, %s36
    %p42 = scmp.eq.s32.totalorder %s9, 0
    %p43 = por %p41, %p42
    %p44 = scmp.ne.s32.totalorder %s33, %s36
    %p45 = scmp.eq.s32.totalorder %s14, 1
    %p46 = por %p44, %p45
    %p47 = scmp.ne.s32.totalorder %s36, %s37
    %p48 = scmp.eq.s32.totalorder %s14, 0
    %p49 = por %p47, %p48
    %p50 = scmp.ne.s32.totalorder %s36, %s37
    %p51 = scmp.eq.s32.totalorder %s15, 1
    %p52 = por %p50, %p51
    %p54 = scmp.ne.s32.totalorder %s37, %s53
    %p55 = scmp.eq.s32.totalorder %s15, 0
    %p56 = por %p54, %p55
    %s58 = sadd.s32 %s57, 1
    %p61 = scmp.eq.s32.totalorder %s9, 1
    %p62 = scmp.ne.s32.totalorder %s57, %s59
    %p63 = scmp.eq.s32.totalorder %s9, 0
    %p64 = por %p62, %p63
    %p65 = scmp.ne.s32.totalorder %s57, %s59
    %p66 = scmp.eq.s32.totalorder %s14, 1
    %p67 = por %p65, %p66
    %p68 = scmp.ne.s32.totalorder %s59, %s60
    %p69 = scmp.eq.s32.totalorder %s14, 0
    %p70 = por %p68, %p69
    %p71 = scmp.ne.s32.totalorder %s59, %s60
    %p72 = scmp.eq.s32.totalorder %s15, 1
    %p73 = por %p71, %p72
    %p75 = scmp.ne.s32.totalorder %s60, %s74
    %p76 = scmp.eq.s32.totalorder %s15, 0
    %p77 = por %p75, %p76
    %s79 = sadd.s32 %s78, 1
    %p82 = scmp.eq.s32.totalorder %s9, 1
    %p83 = scmp.ne.s32.totalorder %s78, %s80
    %p84 = scmp.eq.s32.totalorder %s9, 0
    %p85 = por %p83, %p84
    %p86 = scmp.ne.s32.totalorder %s78, %s80
    %p87 = scmp.eq.s32.totalorder %s14, 1
    %p88 = por %p86, %p87
    %p89 = scmp.ne.s32.totalorder %s80, %s81
    %p90 = scmp.eq.s32.totalorder %s14, 0
    %p91 = por %p89, %p90
    %p92 = scmp.ne.s32.totalorder %s80, %s81
    %p93 = scmp.eq.s32.totalorder %s15, 1
    %p94 = por %p92, %p93
    %p96 = scmp.ne.s32.totalorder %s81, %s95
    %p97 = scmp.eq.s32.totalorder %s15, 0
    %p98 = por %p96, %p97
    %s99 = ssub.s32 %s16, %s28
    %s100 = ssub.s32 %s17, %s24
    %s101 = sor.u32 %s99, %s100
    %p102 = scmp.eq.s32.totalorder %s101, 0
    %s104 = sadd.s32 %s103, 1
    %s105 = scalar_select %p102, %s103, %s104
    %p108 = pneg %p102
    %p109 = scmp.eq.s32.totalorder %s9, 1
    %p110 = por %p108, %p109
    %p111 = scmp.ne.s32.totalorder %s103, %s106
    %p112 = scmp.eq.s32.totalorder %s9, 0
    %p113 = por %p111, %p112
    %p114 = scmp.ne.s32.totalorder %s103, %s106
    %p115 = scmp.eq.s32.totalorder %s14, 1
    %p116 = por %p114, %p115
    %p117 = scmp.ne.s32.totalorder %s106, %s107
    %p118 = scmp.eq.s32.totalorder %s14, 0
    %p119 = por %p117, %p118
    %p120 = scmp.ne.s32.totalorder %s106, %s107
    %p121 = scmp.eq.s32.totalorder %s15, 1
    %p122 = por %p120, %p121
    %p124 = scmp.ne.s32.totalorder %s107, %s123
    %p125 = scmp.eq.s32.totalorder %s15, 0
    %p126 = por %p124, %p125
    %p127 = scmp.le.s32.totalorder 1, %s9
    %p128 = scmp.lt.s32.totalorder %s9, 3
    %p129 = pnand %p127, %p128
    %p130 = pneg %p129
    // Predicated region
    $region9: #{_lambda_.9} parent=5 // pred_check
      _
    $region10: #{_lambda_.9} parent=5 // pred_check_branch
      %132 = sbr.rel (%p129) target = $region12
    $region11: #{_lambda_.9} parent=5 // pred_region
      %s133 = ssub.s32 %s9, 1
      // Predicated region
      $region13: #{_lambda_.9} parent=11 // pred_check
        %p134 = pneg %p70
      $region14: #{_lambda_.9} parent=11 // pred_check_branch
        %136 = sbr.rel (%p134) target = $region16
      $region15: #{_lambda_.9} parent=11 // pred_region
        _
      $region16: #{_lambda_.9} parent=11 // pred_fallthru
        _
      // Predicated region
      $region17: #{_lambda_.9} parent=11 // pred_check
        %p137 = pneg %p91
      $region18: #{_lambda_.9} parent=11 // pred_check_branch
        %139 = sbr.rel (%p137) target = $region20
      $region19: #{_lambda_.9} parent=11 // pred_region
        _
      $region20: #{_lambda_.9} parent=11 // pred_fallthru
        _
    $region12: #{_lambda_.9} parent=5 // pred_fallthru
      _
    %p140 = scmp.lt.s32.totalorder %s9, 2
    // Predicated region
    $region21: #{_lambda_.9} parent=5 // pred_check
      %p141 = pneg %p140
    $region22: #{_lambda_.9} parent=5 // pred_check_branch
      %143 = sbr.rel (%p141) target = $region24
    $region23: #{_lambda_.9} parent=5 // pred_region
      // Predicated region
      $region25: #{_lambda_.9} parent=23 // pred_check
        %p144 = pneg %p43
      $region26: #{_lambda_.9} parent=23 // pred_check_branch
        %146 = sbr.rel (%p144) target = $region28
      $region27: #{_lambda_.9} parent=23 // pred_region
        %s147 = smul.u32 2, %s17
        %p148 = scmp.lt.s32.totalorder %s16, 1
        %s149 = scalar_select %p148, %s16, 1
        %p150 = scmp.lt.s32.totalorder %s147, 1
        %s151 = scalar_select %p150, %s147, 1
        %s152 = smul.addr %s149, 6
        %s153 = sadd.s32 %s151, %s152
        %s154 = smul.addr %s153, 4
        %s155 = scalar_lea.vmem %s0, %s154
        %s156 = smul.u32 2, %s17
      $region28: #{_lambda_.9} parent=23 // pred_fallthru
        _
    $region24: #{_lambda_.9} parent=5 // pred_fallthru
      _
    %p157 = scmp.le.s32.totalorder 1, %s9
    %p158 = scmp.lt.s32.totalorder %s9, 3
    %p159 = pnand %p157, %p158
    %p160 = pneg %p159
    // Predicated region
    $region29: #{_lambda_.9} parent=5 // pred_check
      _
    $region30: #{_lambda_.9} parent=5 // pred_check_branch
      %162 = sbr.rel (%p159) target = $region32
    $region31: #{_lambda_.9} parent=5 // pred_region
      %s163 = ssub.s32 %s9, 1
      %s164 = smul.u32 2, %s19
      %p165 = scmp.lt.s32.totalorder %s18, 1
      %s166 = scalar_select %p165, %s18, 1
      %p167 = scmp.lt.s32.totalorder %s164, 1
      %s168 = scalar_select %p167, %s164, 1
      %s169 = smul.addr %s166, 6
      %s170 = sadd.s32 %s168, %s169
      %s171 = smul.addr %s170, 4
      %s172 = scalar_lea.vmem %s0, %s171
      %p173 = pneg %p49
      %p174 = pneg %p46
      %p175 = pneg %p70
      %p176 = pneg %p67
      %p177 = pneg %p91
      %p178 = pneg %p88
      %p179 = pneg %p119
      %p180 = pneg %p116
      %s181 = smul.u32 2, %s19
      %p182 = scmp.lt.s32.totalorder %s18, 1
      %s183 = scalar_select %p182, %s18, 1
      %p184 = scmp.lt.s32.totalorder %s181, 1
      %s185 = scalar_select %p184, %s181, 1
      %s186 = smul.addr %s183, 4
      %s187 = sadd.s32 %s185, %s186
      %s188 = smul.addr %s187, 8
      %s189 = scalar_lea.vmem %s3, %s188
      %s190 = smul.u32 2, %s19
      %p191 = scmp.lt.s32.totalorder %s18, 1
      %s192 = scalar_select %p191, %s18, 1
      %p193 = scmp.lt.s32.totalorder %s190, 1
      %s194 = scalar_select %p193, %s190, 1
      %s195 = smul.addr %s192, 6
      %s196 = sadd.s32 %s194, %s195
      %s197 = smul.addr %s196, 4
      %s198 = scalar_lea.vmem %s0, %s197
      %s199 = smul.u32 2, %s19
      %s200 = smul.u32 2, %s19
      %p201 = scmp.lt.s32.totalorder %s18, 1
      %s202 = scalar_select %p201, %s18, 1
      %p203 = scmp.lt.s32.totalorder %s200, 1
      %s204 = scalar_select %p203, %s200, 1
      %s205 = smul.addr %s202, 4
      %s206 = sadd.s32 %s204, %s205
      %s207 = smul.addr %s206, 8
      %s208 = scalar_lea.vmem %s3, %s207
      %s209 = smul.u32 2, %s19
      %v211 = vld [vmem:[%s1] sm:$0xf]
      %v212 = vld [vmem:[%s1 + $0x4] sm:$0xf]
      %v213 = vld [vmem:[%s198] sm:$0xff]
      %v214 = vld [vmem:[%s198 + $0x8] sm:$0xff]
      %v215 = vld [vmem:[%s198 + $0x10] sm:$0xff]
      %v216 = vld [vmem:[%s2] sm:$0xff]
      %v217 = vld [vmem:[%s2 + $0x8] sm:$0xff]
      %219 = vset.pattern.permute.xlu0 0
      %220 = vperm.xlu0 %219, %v216
      %v221 = vpop.permute.xlu0 %220
      %224 = vset.pattern.permute.xlu0 0
      %225 = vperm.xlu0 %224, %v217
      %v226 = vpop.permute.xlu0 %225
      %v230 = vunpack.c.l.b16 %v211
      %v231 = vunpack.c.l.b16 %v212
      %v232 = vpack.c.b16 %v231, %v230
      %v236 = vunpack.c.l.b16 %v213
      %v237 = vunpack.c.h.b16 %v213
      %v238 = vunpack.c.l.b16 %v214
      %v239 = vunpack.c.h.b16 %v214
      %v240 = vunpack.c.l.b16 %v215
      %v241 = vunpack.c.h.b16 %v215
      %v242 = vpack.c.b16 %v238, %v236
      %v243 = vpack.c.b16 %v239, %v237
      %v244 = vpack.c.b16 %v240, %v240
      %v245 = vpack.c.b16 %v241, %v241
      %vm248 = vcmask 195584
      %v250 = vsel %vm248, %v232, 0
      %vm252 = vcmask 1043456
      %v254 = vsel %vm252, %v244, 0
      %v257 = vsel %vm252, %v245, 0
      %259 = vmatprep.subr.bf16.mxu0 0
      %260 = vmatpush1.bf16.msra.mxu0 0
      %261 = vmatprep.subr.bf16.mxu0 0
      %262 = vmatpush1.bf16.msra.mxu0 0
      %263 = vmatprep.subr.bf16.mxu0 0
      %264 = vmatpush1.bf16.msra.mxu0 0
      %265 = vmatprep.subr.bf16.mxu0 0
      %266 = vmatpush1.bf16.msra.mxu0 0
      %267 = vmatprep.subr.bf16.mxu0 0
      %268 = vmatpush1.bf16.msra.mxu0 0
      %269 = vmatprep.subr.bf16.mxu0 0
      %270 = vmatpush1.bf16.msra.mxu0 0
      %271 = vmatprep.subr.bf16.mxu0 %v257
      %272 = vmatpush1.bf16.msra.mxu0 %v254
      %273 = vmatprep.subr.bf16.mxu0 %v243
      %274 = vmatpush1.bf16.msra.mxu0 %v242
      %275 = vmatprep.subr.bf16.mxu0 0
      %276 = vmatpush2.bf16.msra.mxu0 0
      %277 = vmatprep.subr.bf16.mxu0 0
      %278 = vmatpush2.bf16.msra.mxu0 0
      %279 = vmatprep.subr.bf16.mxu0 0
      %280 = vmatpush2.bf16.msra.mxu0 0
      %281 = vmatprep.subr.bf16.mxu0 0
      %282 = vmatpush2.bf16.msra.mxu0 0
      %283 = vmatprep.subr.bf16.mxu0 0
      %284 = vmatpush2.bf16.msra.mxu0 0
      %285 = vmatprep.subr.bf16.mxu0 0
      %286 = vmatpush2.bf16.msra.mxu0 0
      %287 = vmatprep.subr.bf16.mxu0 0
      %288 = vmatpush2.bf16.msra.mxu0 0
      %289 = vmatprep.subr.bf16.mxu0 0
      %290 = vmatpush2.bf16.msra.mxu0 0
      %291 = vmatprep.mubr.bf16.mxu0 0
      %292 = vmatmul.mubr.bf16.gmra.mxu0 %v250
      %v293 = vpop.f32.mrf.mxu0
      %v294 = vadd.f32 %v221, %v293
      %v295 = vpop.f32.mrf.mxu0
      %v296 = vadd.f32 %v221, %v295
      %v297 = vpop.f32.mrf.mxu0
      %v298 = vadd.f32 %v226, %v297
      %v299 = vpop.f32.mrf.mxu0
      %v300 = vadd.f32 %v226, %v299
      %301 = vdwg.mxu0
      %v302 = vxor.u32 %v294, 2147483648
      %v303 = vxor.u32 %v296, 2147483648
      %v304 = vxor.u32 %v298, 2147483648
      %v305 = vxor.u32 %v300, 2147483648
      %v306 = vmul.f32 %v302, 1.442695
      %v307 = vpow.pop %v306
      %v308 = vmul.f32 %v303, 1.442695
      %v309 = vpow.pop %v308
      %v310 = vmul.f32 %v304, 1.442695
      %v311 = vpow.pop %v310
      %v312 = vmul.f32 %v305, 1.442695
      %v313 = vpow.pop %v312
      %v314 = vadd.f32 %v307, 1.0
      %v315 = vadd.f32 %v309, 1.0
      %v316 = vadd.f32 %v311, 1.0
      %v317 = vadd.f32 %v313, 1.0
      %v318 = vrcp.pop %v314
      %v319 = vmul.f32 1.0, %v318
      %v320 = vrcp.pop %v315
      %v321 = vmul.f32 1.0, %v320
      %v322 = vrcp.pop %v316
      %v323 = vmul.f32 1.0, %v322
      %v324 = vrcp.pop %v317
      %v325 = vmul.f32 1.0, %v324
      %v326 = vmul.f32 %v294, %v319
      %v327 = vmul.f32 %v296, %v321
      %v328 = vmul.f32 %v298, %v323
      %v329 = vmul.f32 %v300, %v325
      %330 = vst [vmem:[%s208] sm:$0xff] %v326
      %331 = vst [vmem:[%s208 + $0x8] sm:$0xff] %v327
      %332 = vst [vmem:[%s208 + $0x10] sm:$0xff] %v328
      %333 = vst [vmem:[%s208 + $0x18] sm:$0xff] %v329
      %s334 = smul.u32 2, %s19
      %p335 = scmp.lt.s32.totalorder %s18, 1
      %s336 = scalar_select %p335, %s18, 1
      %p337 = scmp.lt.s32.totalorder %s334, 1
      %s338 = scalar_select %p337, %s334, 1
      %s339 = smul.addr %s336, 4
      %s340 = sadd.s32 %s338, %s339
      %s341 = smul.addr %s340, 8
      %s342 = scalar_lea.vmem %s3, %s341
      // Predicated region
      $region33: #{_lambda_.9} parent=31 // pred_check
        %p343 = pneg %p116
      $region34: #{_lambda_.9} parent=31 // pred_check_branch
        %345 = sbr.rel (%p343) target = $region36
      $region35: #{_lambda_.9} parent=31 // pred_region
        %s346 = smul.u32 2, %s19
      $region36: #{_lambda_.9} parent=31 // pred_fallthru
        _
    $region32: #{_lambda_.9} parent=5 // pred_fallthru
      _
    %p347 = scmp.le.s32.totalorder 2, %s9
    // Predicated region
    $region37: #{_lambda_.9} parent=5 // pred_check
      %p348 = pneg %p347
    $region38: #{_lambda_.9} parent=5 // pred_check_branch
      %350 = sbr.rel (%p348) target = $region40
    $region39: #{_lambda_.9} parent=5 // pred_region
      %s351 = ssub.s32 %s9, 2
      // Predicated region
      $region41: #{_lambda_.9} parent=39 // pred_check
        %p352 = pneg %p122
      $region42: #{_lambda_.9} parent=39 // pred_check_branch
        %354 = sbr.rel (%p352) target = $region44
      $region43: #{_lambda_.9} parent=39 // pred_region
        %s355 = smul.u32 2, %s21
        %p356 = scmp.lt.s32.totalorder %s20, 1
        %s357 = scalar_select %p356, %s20, 1
        %p358 = scmp.lt.s32.totalorder %s355, 1
        %s359 = scalar_select %p358, %s355, 1
        %s360 = smul.addr %s357, 4
        %s361 = sadd.s32 %s359, %s360
        %s362 = smul.addr %s361, 8
        %s363 = scalar_lea.vmem %s3, %s362
      $region44: #{_lambda_.9} parent=39 // pred_fallthru
        _
    $region40: #{_lambda_.9} parent=5 // pred_fallthru
      _
  $region6: #{_lambda_.9} parent=0 // loop_footer
    %s13 = sadd.s32 1, %s9
  $region7: #{_lambda_.9} parent=0 // loop_footer_branch
    %8 = sbr.rel target = $region3
  $region8: #{_lambda_.9} parent=0 // loop_exit
    _

// kernel: _lambda_.7
$region0: #{_lambda_.7}
  #allocation0 [shape = 'u32[]', space=smem, size = 0x4, offset = 0x4, fixed_abs, tag = 'smem constant byte address 0x4 - core index']
  #allocation1 [shape = 'u32[144,128]{1,0:T(1,128)}', space=vmem, size = 0x12000, scoped, tag = 'internal scratch']
  %s0 = inlined_call_operand.vmem [shape: bf16[2,8,256], index: 0, kind: input, shape index: {}]
  %s1 = inlined_call_operand.vmem [shape: f32[8,9], index: 1, kind: input, shape index: {}]
  %s2 = inlined_call_operand.vmem [shape: f32[8,10], index: 2, kind: input, shape index: {}]
  %s3 = inlined_call_operand.vmem [shape: f32[256,32], index: 3, kind: input, shape index: {}]
  %s4 = inlined_call_operand.vmem [shape: f32[16,144], index: 4, kind: input, shape index: {}, may-alias: {4,5}]
  %s5 = inlined_call_operand.vmem [shape: f32[16,144], index: 5, kind: input, shape index: {}, may-alias: {4,5}]
  %s6 = inlined_call_operand.vmem [shape: f32[16,256], index: 6, kind: input, shape index: {}]
  %s7 = inlined_call_operand.vmem [shape: f32[16,256], index: 7, kind: input, shape index: {}]
  %s8 = inlined_call_operand.vmem [shape: f32[256,4], index: 8, kind: input, shape index: {}]
  %s9 = inlined_call_operand.vmem [shape: bf16[2,8,256], index: 9, kind: output, shape index: {}]
  %s10 = sld [smem:[#allocation0]]
  $region69: #{_lambda_.7} parent=0
    _
  %s12 = ssub.s32 1, %s10
  %s13 = scalar_select 0, %s12, %s10
  loop: start=0, step=1, limit=4
  $region2: #{_lambda_.7} parent=0 // loop_pre_header
    _
  $region3: #{_lambda_.7} parent=0 // loop_header
    %s15 = sphi 0, %s19
    %p16 = scmp.ge.s32.totalorder %s15, 4
    %s25 = sphi 0, %s27
    %s28 = sphi 0, %s25
    %s29 = sphi 0, %s28
    %s45 = sphi 0, %s29
    %s49 = sphi 0, %s49
    %s51 = sphi 0, %s49
    %s52 = sphi 0, %s51
    %s66 = sphi 0, %s52
    %s70 = sphi 0, %s70
    %s72 = sphi 0, %s70
    %s73 = sphi 0, %s72
    %s87 = sphi 0, %s73
    %s91 = sphi 0, %s91
    %s93 = sphi 0, %s91
    %s94 = sphi 0, %s93
    %s108 = sphi 0, %s94
    %s112 = sphi 0, %s112
    %s114 = sphi 0, %s112
    %s115 = sphi 0, %s114
    %s129 = sphi 0, %s115
    %s133 = sphi 0, %s133
    %s135 = sphi 0, %s133
    %s136 = sphi 0, %s135
    %s150 = sphi 0, %s136
    %s154 = sphi 0, %s154
    %s156 = sphi 0, %s154
    %s157 = sphi 0, %s156
    %s171 = sphi 0, %s157
    %s175 = sphi 0, %s175
    %s177 = sphi 0, %s175
    %s178 = sphi 0, %s177
    %s192 = sphi 0, %s178
    %s196 = sphi 0, %s196
    %s198 = sphi 0, %s196
    %s199 = sphi 0, %s198
    %s213 = sphi 0, %s199
    %s219 = sphi 0, %s221
    %s222 = sphi 0, %s219
    %s223 = sphi 0, %s222
    %s239 = sphi 0, %s223
  $region4: #{_lambda_.7} parent=0 // loop_header_branch
    %18 = sbr.rel (%p16) target = $region8
  $region5: #{_lambda_.7} parent=0 // loop_body
    %s20 = ssub.s32 %s15, 1
    %s21 = ssub.s32 %s15, 2
    %s22 = sadd.s32 %s15, 1
    %s23 = ssub.s32 %s15, %s22
    %p24 = scmp.eq.s32.totalorder %s23, 0
    %s26 = sadd.s32 %s25, 1
    %s27 = scalar_select %p24, %s25, %s26
    %p30 = pneg %p24
    %p31 = scmp.eq.s32.totalorder %s15, 1
    %p32 = por %p30, %p31
    %p33 = scmp.ne.s32.totalorder %s25, %s28
    %p34 = scmp.eq.s32.totalorder %s15, 0
    %p35 = por %p33, %p34
    %p36 = scmp.ne.s32.totalorder %s25, %s28
    %p37 = scmp.eq.s32.totalorder %s20, 1
    %p38 = por %p36, %p37
    %p39 = scmp.ne.s32.totalorder %s28, %s29
    %p40 = scmp.eq.s32.totalorder %s20, 0
    %p41 = por %p39, %p40
    %p42 = scmp.ne.s32.totalorder %s28, %s29
    %p43 = scmp.eq.s32.totalorder %s21, 1
    %p44 = por %p42, %p43
    %p46 = scmp.ne.s32.totalorder %s29, %s45
    %p47 = scmp.eq.s32.totalorder %s21, 0
    %p48 = por %p46, %p47
    %s50 = sadd.s32 %s49, 1
    %p53 = scmp.eq.s32.totalorder %s15, 1
    %p54 = scmp.ne.s32.totalorder %s49, %s51
    %p55 = scmp.eq.s32.totalorder %s15, 0
    %p56 = por %p54, %p55
    %p57 = scmp.ne.s32.totalorder %s49, %s51
    %p58 = scmp.eq.s32.totalorder %s20, 1
    %p59 = por %p57, %p58
    %p60 = scmp.ne.s32.totalorder %s51, %s52
    %p61 = scmp.eq.s32.totalorder %s20, 0
    %p62 = por %p60, %p61
    %p63 = scmp.ne.s32.totalorder %s51, %s52
    %p64 = scmp.eq.s32.totalorder %s21, 1
    %p65 = por %p63, %p64
    %p67 = scmp.ne.s32.totalorder %s52, %s66
    %p68 = scmp.eq.s32.totalorder %s21, 0
    %p69 = por %p67, %p68
    %s71 = sadd.s32 %s70, 1
    %p74 = scmp.eq.s32.totalorder %s15, 1
    %p75 = scmp.ne.s32.totalorder %s70, %s72
    %p76 = scmp.eq.s32.totalorder %s15, 0
    %p77 = por %p75, %p76
    %p78 = scmp.ne.s32.totalorder %s70, %s72
    %p79 = scmp.eq.s32.totalorder %s20, 1
    %p80 = por %p78, %p79
    %p81 = scmp.ne.s32.totalorder %s72, %s73
    %p82 = scmp.eq.s32.totalorder %s20, 0
    %p83 = por %p81, %p82
    %p84 = scmp.ne.s32.totalorder %s72, %s73
    %p85 = scmp.eq.s32.totalorder %s21, 1
    %p86 = por %p84, %p85
    %p88 = scmp.ne.s32.totalorder %s73, %s87
    %p89 = scmp.eq.s32.totalorder %s21, 0
    %p90 = por %p88, %p89
    %s92 = sadd.s32 %s91, 1
    %p95 = scmp.eq.s32.totalorder %s15, 1
    %p96 = scmp.ne.s32.totalorder %s91, %s93
    %p97 = scmp.eq.s32.totalorder %s15, 0
    %p98 = por %p96, %p97
    %p99 = scmp.ne.s32.totalorder %s91, %s93
    %p100 = scmp.eq.s32.totalorder %s20, 1
    %p101 = por %p99, %p100
    %p102 = scmp.ne.s32.totalorder %s93, %s94
    %p103 = scmp.eq.s32.totalorder %s20, 0
    %p104 = por %p102, %p103
    %p105 = scmp.ne.s32.totalorder %s93, %s94
    %p106 = scmp.eq.s32.totalorder %s21, 1
    %p107 = por %p105, %p106
    %p109 = scmp.ne.s32.totalorder %s94, %s108
    %p110 = scmp.eq.s32.totalorder %s21, 0
    %p111 = por %p109, %p110
    %s113 = sadd.s32 %s112, 1
    %p116 = scmp.eq.s32.totalorder %s15, 1
    %p117 = scmp.ne.s32.totalorder %s112, %s114
    %p118 = scmp.eq.s32.totalorder %s15, 0
    %p119 = por %p117, %p118
    %p120 = scmp.ne.s32.totalorder %s112, %s114
    %p121 = scmp.eq.s32.totalorder %s20, 1
    %p122 = por %p120, %p121
    %p123 = scmp.ne.s32.totalorder %s114, %s115
    %p124 = scmp.eq.s32.totalorder %s20, 0
    %p125 = por %p123, %p124
    %p126 = scmp.ne.s32.totalorder %s114, %s115
    %p127 = scmp.eq.s32.totalorder %s21, 1
    %p128 = por %p126, %p127
    %p130 = scmp.ne.s32.totalorder %s115, %s129
    %p131 = scmp.eq.s32.totalorder %s21, 0
    %p132 = por %p130, %p131
    %s134 = sadd.s32 %s133, 1
    %p137 = scmp.eq.s32.totalorder %s15, 1
    %p138 = scmp.ne.s32.totalorder %s133, %s135
    %p139 = scmp.eq.s32.totalorder %s15, 0
    %p140 = por %p138, %p139
    %p141 = scmp.ne.s32.totalorder %s133, %s135
    %p142 = scmp.eq.s32.totalorder %s20, 1
    %p143 = por %p141, %p142
    %p144 = scmp.ne.s32.totalorder %s135, %s136
    %p145 = scmp.eq.s32.totalorder %s20, 0
    %p146 = por %p144, %p145
    %p147 = scmp.ne.s32.totalorder %s135, %s136
    %p148 = scmp.eq.s32.totalorder %s21, 1
    %p149 = por %p147, %p148
    %p151 = scmp.ne.s32.totalorder %s136, %s150
    %p152 = scmp.eq.s32.totalorder %s21, 0
    %p153 = por %p151, %p152
    %s155 = sadd.s32 %s154, 1
    %p158 = scmp.eq.s32.totalorder %s15, 1
    %p159 = scmp.ne.s32.totalorder %s154, %s156
    %p160 = scmp.eq.s32.totalorder %s15, 0
    %p161 = por %p159, %p160
    %p162 = scmp.ne.s32.totalorder %s154, %s156
    %p163 = scmp.eq.s32.totalorder %s20, 1
    %p164 = por %p162, %p163
    %p165 = scmp.ne.s32.totalorder %s156, %s157
    %p166 = scmp.eq.s32.totalorder %s20, 0
    %p167 = por %p165, %p166
    %p168 = scmp.ne.s32.totalorder %s156, %s157
    %p169 = scmp.eq.s32.totalorder %s21, 1
    %p170 = por %p168, %p169
    %p172 = scmp.ne.s32.totalorder %s157, %s171
    %p173 = scmp.eq.s32.totalorder %s21, 0
    %p174 = por %p172, %p173
    %s176 = sadd.s32 %s175, 1
    %p179 = scmp.eq.s32.totalorder %s15, 1
    %p180 = scmp.ne.s32.totalorder %s175, %s177
    %p181 = scmp.eq.s32.totalorder %s15, 0
    %p182 = por %p180, %p181
    %p183 = scmp.ne.s32.totalorder %s175, %s177
    %p184 = scmp.eq.s32.totalorder %s20, 1
    %p185 = por %p183, %p184
    %p186 = scmp.ne.s32.totalorder %s177, %s178
    %p187 = scmp.eq.s32.totalorder %s20, 0
    %p188 = por %p186, %p187
    %p189 = scmp.ne.s32.totalorder %s177, %s178
    %p190 = scmp.eq.s32.totalorder %s21, 1
    %p191 = por %p189, %p190
    %p193 = scmp.ne.s32.totalorder %s178, %s192
    %p194 = scmp.eq.s32.totalorder %s21, 0
    %p195 = por %p193, %p194
    %s197 = sadd.s32 %s196, 1
    %p200 = scmp.eq.s32.totalorder %s15, 1
    %p201 = scmp.ne.s32.totalorder %s196, %s198
    %p202 = scmp.eq.s32.totalorder %s15, 0
    %p203 = por %p201, %p202
    %p204 = scmp.ne.s32.totalorder %s196, %s198
    %p205 = scmp.eq.s32.totalorder %s20, 1
    %p206 = por %p204, %p205
    %p207 = scmp.ne.s32.totalorder %s198, %s199
    %p208 = scmp.eq.s32.totalorder %s20, 0
    %p209 = por %p207, %p208
    %p210 = scmp.ne.s32.totalorder %s198, %s199
    %p211 = scmp.eq.s32.totalorder %s21, 1
    %p212 = por %p210, %p211
    %p214 = scmp.ne.s32.totalorder %s199, %s213
    %p215 = scmp.eq.s32.totalorder %s21, 0
    %p216 = por %p214, %p215
    %s217 = ssub.s32 %s15, %s22
    %p218 = scmp.eq.s32.totalorder %s217, 0
    %s220 = sadd.s32 %s219, 1
    %s221 = scalar_select %p218, %s219, %s220
    %p224 = pneg %p218
    %p225 = scmp.eq.s32.totalorder %s15, 1
    %p226 = por %p224, %p225
    %p227 = scmp.ne.s32.totalorder %s219, %s222
    %p228 = scmp.eq.s32.totalorder %s15, 0
    %p229 = por %p227, %p228
    %p230 = scmp.ne.s32.totalorder %s219, %s222
    %p231 = scmp.eq.s32.totalorder %s20, 1
    %p232 = por %p230, %p231
    %p233 = scmp.ne.s32.totalorder %s222, %s223
    %p234 = scmp.eq.s32.totalorder %s20, 0
    %p235 = por %p233, %p234
    %p236 = scmp.ne.s32.totalorder %s222, %s223
    %p237 = scmp.eq.s32.totalorder %s21, 1
    %p238 = por %p236, %p237
    %p240 = scmp.ne.s32.totalorder %s223, %s239
    %p241 = scmp.eq.s32.totalorder %s21, 0
    %p242 = por %p240, %p241
    %p243 = scmp.le.s32.totalorder 1, %s15
    %p244 = scmp.lt.s32.totalorder %s15, 3
    %p245 = pnand %p243, %p244
    %p246 = pneg %p245
    // Predicated region
    $region9: #{_lambda_.7} parent=5 // pred_check
      _
    $region10: #{_lambda_.7} parent=5 // pred_check_branch
      %248 = sbr.rel (%p245) target = $region12
    $region11: #{_lambda_.7} parent=5 // pred_region
      %s249 = ssub.s32 %s15, 1
      // Predicated region
      $region13: #{_lambda_.7} parent=11 // pred_check
        %p250 = pneg %p62
      $region14: #{_lambda_.7} parent=11 // pred_check_branch
        %252 = sbr.rel (%p250) target = $region16
      $region15: #{_lambda_.7} parent=11 // pred_region
        _
      $region16: #{_lambda_.7} parent=11 // pred_fallthru
        _
      // Predicated region
      $region17: #{_lambda_.7} parent=11 // pred_check
        %p253 = pneg %p83
      $region18: #{_lambda_.7} parent=11 // pred_check_branch
        %255 = sbr.rel (%p253) target = $region20
      $region19: #{_lambda_.7} parent=11 // pred_region
        _
      $region20: #{_lambda_.7} parent=11 // pred_fallthru
        _
      // Predicated region
      $region21: #{_lambda_.7} parent=11 // pred_check
        %p256 = pneg %p104
      $region22: #{_lambda_.7} parent=11 // pred_check_branch
        %258 = sbr.rel (%p256) target = $region24
      $region23: #{_lambda_.7} parent=11 // pred_region
        _
      $region24: #{_lambda_.7} parent=11 // pred_fallthru
        _
      // Predicated region
      $region25: #{_lambda_.7} parent=11 // pred_check
        %p259 = pneg %p125
      $region26: #{_lambda_.7} parent=11 // pred_check_branch
        %261 = sbr.rel (%p259) target = $region28
      $region27: #{_lambda_.7} parent=11 // pred_region
        _
      $region28: #{_lambda_.7} parent=11 // pred_fallthru
        _
      // Predicated region
      $region29: #{_lambda_.7} parent=11 // pred_check
        %p262 = pneg %p146
      $region30: #{_lambda_.7} parent=11 // pred_check_branch
        %264 = sbr.rel (%p262) target = $region32
      $region31: #{_lambda_.7} parent=11 // pred_region
        _
      $region32: #{_lambda_.7} parent=11 // pred_fallthru
        _
      // Predicated region
      $region33: #{_lambda_.7} parent=11 // pred_check
        %p265 = pneg %p167
      $region34: #{_lambda_.7} parent=11 // pred_check_branch
        %267 = sbr.rel (%p265) target = $region36
      $region35: #{_lambda_.7} parent=11 // pred_region
        _
      $region36: #{_lambda_.7} parent=11 // pred_fallthru
        _
      // Predicated region
      $region37: #{_lambda_.7} parent=11 // pred_check
        %p268 = pneg %p188
      $region38: #{_lambda_.7} parent=11 // pred_check_branch
        %270 = sbr.rel (%p268) target = $region40
      $region39: #{_lambda_.7} parent=11 // pred_region
        _
      $region40: #{_lambda_.7} parent=11 // pred_fallthru
        _
      // Predicated region
      $region41: #{_lambda_.7} parent=11 // pred_check
        %p271 = pneg %p209
      $region42: #{_lambda_.7} parent=11 // pred_check_branch
        %273 = sbr.rel (%p271) target = $region44
      $region43: #{_lambda_.7} parent=11 // pred_region
        _
      $region44: #{_lambda_.7} parent=11 // pred_fallthru
        _
    $region12: #{_lambda_.7} parent=5 // pred_fallthru
      _
    %p274 = scmp.lt.s32.totalorder %s15, 2
    // Predicated region
    $region45: #{_lambda_.7} parent=5 // pred_check
      %p275 = pneg %p274
    $region46: #{_lambda_.7} parent=5 // pred_check_branch
      %277 = sbr.rel (%p275) target = $region48
    $region47: #{_lambda_.7} parent=5 // pred_region
      // Predicated region
      $region49: #{_lambda_.7} parent=47 // pred_check
        %p278 = pneg %p35
      $region50: #{_lambda_.7} parent=47 // pred_check_branch
        %280 = sbr.rel (%p278) target = $region52
      $region51: #{_lambda_.7} parent=47 // pred_region
        %p281 = scmp.lt.s32.totalorder %s15, 1
        %s282 = scalar_select %p281, %s15, 1
        %s283 = smul.addr %s282, 2
        %s284 = smul.addr %s283, 4
        %s285 = scalar_lea.vmem %s0, %s284
      $region52: #{_lambda_.7} parent=47 // pred_fallthru
        _
    $region48: #{_lambda_.7} parent=5 // pred_fallthru
      _
    %p286 = scmp.le.s32.totalorder 1, %s15
    %p287 = scmp.lt.s32.totalorder %s15, 3
    %p288 = pnand %p286, %p287
    %p289 = pneg %p288
    // Predicated region
    $region53: #{_lambda_.7} parent=5 // pred_check
      _
    $region54: #{_lambda_.7} parent=5 // pred_check_branch
      %291 = sbr.rel (%p288) target = $region56
    $region55: #{_lambda_.7} parent=5 // pred_region
      %s292 = ssub.s32 %s15, 1
      %p293 = scmp.lt.s32.totalorder %s20, 1
      %s294 = scalar_select %p293, %s20, 1
      %s295 = smul.addr %s294, 2
      %s296 = smul.addr %s295, 4
      %s297 = scalar_lea.vmem %s0, %s296
      %p298 = pneg %p41
      %p299 = pneg %p38
      %p300 = pneg %p62
      %p301 = pneg %p59
      %p302 = pneg %p83
      %p303 = pneg %p80
      %p304 = pneg %p104
      %p305 = pneg %p101
      %p306 = pneg %p125
      %p307 = pneg %p122
      %p308 = pneg %p146
      %p309 = pneg %p143
      %p310 = pneg %p167
      %p311 = pneg %p164
      %p312 = pneg %p188
      %p313 = pneg %p185
      %p314 = pneg %p209
      %p315 = pneg %p206
      %p316 = pneg %p235
      %p317 = pneg %p232
      %p318 = scmp.lt.s32.totalorder %s20, 1
      %s319 = scalar_select %p318, %s20, 1
      %s320 = smul.addr %s319, 2
      %s321 = smul.addr %s320, 4
      %s322 = scalar_lea.vmem %s9, %s321
      %p323 = scmp.lt.s32.totalorder %s20, 1
      %s324 = scalar_select %p323, %s20, 1
      %s325 = smul.addr %s324, 2
      %s326 = smul.addr %s325, 4
      %s327 = scalar_lea.vmem %s0, %s326
      %p328 = scmp.lt.s32.totalorder %s20, 1
      %s329 = scalar_select %p328, %s20, 1
      %s330 = smul.addr %s329, 2
      %s331 = smul.addr %s330, 4
      %s332 = scalar_lea.vmem %s9, %s331
      %v333 = vld [vmem:[%s327] sm:$0xff]
      %v334 = vunpack.c.l.bf16 %v333
      %v335 = vunpack.c.h.bf16 %v333
      %v336 = vld [vmem:[%s1] sm:$0xff]
      %v337 = vld [vmem:[%s2] sm:$0xff]
      %v338 = vld [vmem:[%s3] sm:$0xff]
      %v339 = vld [vmem:[%s3 + $0x8] sm:$0xff]
      %v340 = vld [vmem:[%s3 + $0x10] sm:$0xff]
      %v341 = vld [vmem:[%s3 + $0x18] sm:$0xff]
      %v342 = vld [vmem:[%s3 + $0x20] sm:$0xff]
      %v343 = vld [vmem:[%s3 + $0x28] sm:$0xff]
      %v344 = vld [vmem:[%s3 + $0x30] sm:$0xff]
      %v345 = vld [vmem:[%s3 + $0x38] sm:$0xff]
      %v346 = vld [vmem:[%s3 + $0x40] sm:$0xff]
      %v347 = vld [vmem:[%s3 + $0x48] sm:$0xff]
      %v348 = vld [vmem:[%s3 + $0x50] sm:$0xff]
      %v349 = vld [vmem:[%s3 + $0x58] sm:$0xff]
      %v350 = vld [vmem:[%s3 + $0x60] sm:$0xff]
      %v351 = vld [vmem:[%s3 + $0x68] sm:$0xff]
      %v352 = vld [vmem:[%s3 + $0x70] sm:$0xff]
      %v353 = vld [vmem:[%s3 + $0x78] sm:$0xff]
      %v354 = vld [vmem:[%s3 + $0x80] sm:$0xff]
      %v355 = vld [vmem:[%s3 + $0x88] sm:$0xff]
      %v356 = vld [vmem:[%s3 + $0x90] sm:$0xff]
      %v357 = vld [vmem:[%s3 + $0x98] sm:$0xff]
      %v358 = vld [vmem:[%s3 + $0xa0] sm:$0xff]
      %v359 = vld [vmem:[%s3 + $0xa8] sm:$0xff]
      %v360 = vld [vmem:[%s3 + $0xb0] sm:$0xff]
      %v361 = vld [vmem:[%s3 + $0xb8] sm:$0xff]
      %v362 = vld [vmem:[%s3 + $0xc0] sm:$0xff]
      %v363 = vld [vmem:[%s3 + $0xc8] sm:$0xff]
      %v364 = vld [vmem:[%s3 + $0xd0] sm:$0xff]
      %v365 = vld [vmem:[%s3 + $0xd8] sm:$0xff]
      %v366 = vld [vmem:[%s3 + $0xe0] sm:$0xff]
      %v367 = vld [vmem:[%s3 + $0xe8] sm:$0xff]
      %v368 = vld [vmem:[%s3 + $0xf0] sm:$0xff]
      %v369 = vld [vmem:[%s3 + $0xf8] sm:$0xff]
      %370 = vmatprep.subr.mxu0 0.0
      %371 = vmatpush1.msra.mxu0 %v353
      %372 = vmatprep.subr.mxu0 0.0
      %373 = vmatpush1.msra.mxu0 %v352
      %374 = vmatprep.subr.mxu0 0.0
      %375 = vmatpush1.msra.mxu0 %v351
      %376 = vmatprep.subr.mxu0 0.0
      %377 = vmatpush1.msra.mxu0 %v350
      %378 = vmatprep.subr.mxu0 0.0
      %379 = vmatpush1.msra.mxu0 %v349
      %380 = vmatprep.subr.mxu0 0.0
      %381 = vmatpush1.msra.mxu0 %v348
      %382 = vmatprep.subr.mxu0 0.0
      %383 = vmatpush1.msra.mxu0 %v347
      %384 = vmatprep.subr.mxu0 0.0
      %385 = vmatpush1.msra.mxu0 %v346
      %386 = vmatprep.subr.mxu0 0.0
      %387 = vmatpush1.msra.mxu0 %v345
      %388 = vmatprep.subr.mxu0 0.0
      %389 = vmatpush1.msra.mxu0 %v344
      %390 = vmatprep.subr.mxu0 0.0
      %391 = vmatpush1.msra.mxu0 %v343
      %392 = vmatprep.subr.mxu0 0.0
      %393 = vmatpush1.msra.mxu0 %v342
      %394 = vmatprep.subr.mxu0 0.0
      %395 = vmatpush1.msra.mxu0 %v341
      %396 = vmatprep.subr.mxu0 0.0
      %397 = vmatpush1.msra.mxu0 %v340
      %398 = vmatprep.subr.mxu0 0.0
      %399 = vmatpush1.msra.mxu0 %v339
      %400 = vmatprep.subr.mxu0 0.0
      %401 = vmatpush1.msra.mxu0 %v338
      %402 = vmatprep.subr.mxu0 0.0
      %403 = vmatpush2.msra.mxu0 %v369
      %404 = vmatprep.subr.mxu0 0.0
      %405 = vmatpush2.msra.mxu0 %v368
      %406 = vmatprep.subr.mxu0 0.0
      %407 = vmatpush2.msra.mxu0 %v367
      %408 = vmatprep.subr.mxu0 0.0
      %409 = vmatpush2.msra.mxu0 %v366
      %410 = vmatprep.subr.mxu0 0.0
      %411 = vmatpush2.msra.mxu0 %v365
      %412 = vmatprep.subr.mxu0 0.0
      %413 = vmatpush2.msra.mxu0 %v364
      %414 = vmatprep.subr.mxu0 0.0
      %415 = vmatpush2.msra.mxu0 %v363
      %416 = vmatprep.subr.mxu0 0.0
      %417 = vmatpush2.msra.mxu0 %v362
      %418 = vmatprep.subr.mxu0 0.0
      %419 = vmatpush2.msra.mxu0 %v361
      %420 = vmatprep.subr.mxu0 0.0
      %421 = vmatpush2.msra.mxu0 %v360
      %422 = vmatprep.subr.mxu0 0.0
      %423 = vmatpush2.msra.mxu0 %v359
      %424 = vmatprep.subr.mxu0 0.0
      %425 = vmatpush2.msra.mxu0 %v358
      %426 = vmatprep.subr.mxu0 0.0
      %427 = vmatpush2.msra.mxu0 %v357
      %428 = vmatprep.subr.mxu0 0.0
      %429 = vmatpush2.msra.mxu0 %v356
      %430 = vmatprep.subr.mxu0 0.0
      %431 = vmatpush2.msra.mxu0 %v355
      %432 = vmatprep.subr.mxu0 0.0
      %433 = vmatpush2.msra.mxu0 %v354
      %434 = vmatprep.mubr.f32.mxu0 %v335
      %435 = vmatmul.mubr.f32.gmra.mxu0 %v334
      %v436 = vpop.f32.mrf.mxu0
      %v437 = vadd.f32 0.0, %v436
      %v438 = vpop.f32.mrf.mxu0
      %439 = vdwg.mxu0
      %v440 = vld [vmem:[%s4] sm:$0xff]
      %v441 = vld [vmem:[%s4 + $0x8] sm:$0xff]
      %v442 = vld [vmem:[%s4 + $0x10] sm:$0xff]
      %v443 = vld [vmem:[%s4 + $0x18] sm:$0xff]
      %vm444 = vcmask 130048
      %v446 = vsel %vm444, %v437, 0
      %448 = vmatprep.subr.mxu0 0.0
      %449 = vmatpush1.msra.mxu0 0.0
      %450 = vmatprep.subr.mxu0 0.0
      %451 = vmatpush1.msra.mxu0 0.0
      %452 = vmatprep.subr.mxu0 0.0
      %453 = vmatpush1.msra.mxu0 0.0
      %454 = vmatprep.subr.mxu0 0.0
      %455 = vmatpush1.msra.mxu0 0.0
      %456 = vmatprep.subr.mxu0 0.0
      %457 = vmatpush1.msra.mxu0 0.0
      %458 = vmatprep.subr.mxu0 0.0
      %459 = vmatpush1.msra.mxu0 0.0
      %460 = vmatprep.subr.mxu0 0.0
      %461 = vmatpush1.msra.mxu0 0.0
      %462 = vmatprep.subr.mxu0 0.0
      %463 = vmatpush1.msra.mxu0 0.0
      %464 = vmatprep.subr.mxu0 0.0
      %465 = vmatpush1.msra.mxu0 0.0
      %466 = vmatprep.subr.mxu0 0.0
      %467 = vmatpush1.msra.mxu0 0.0
      %468 = vmatprep.subr.mxu0 0.0
      %469 = vmatpush1.msra.mxu0 0.0
      %470 = vmatprep.subr.mxu0 0.0
      %471 = vmatpush1.msra.mxu0 0.0
      %472 = vmatprep.subr.mxu0 0.0
      %473 = vmatpush1.msra.mxu0 0.0
      %474 = vmatprep.subr.mxu0 0.0
      %475 = vmatpush1.msra.mxu0 0.0
      %476 = vmatprep.subr.mxu0 %v443
      %477 = vmatpush1.msra.mxu0 %v442
      %478 = vmatprep.subr.mxu0 %v441
      %479 = vmatpush1.msra.mxu0 %v440
      %480 = vmatprep.subr.mxu0 0.0
      %481 = vmatpush2.msra.mxu0 0.0
      %482 = vmatprep.subr.mxu0 0.0
      %483 = vmatpush2.msra.mxu0 0.0
      %484 = vmatprep.subr.mxu0 0.0
      %485 = vmatpush2.msra.mxu0 0.0
      %486 = vmatprep.subr.mxu0 0.0
      %487 = vmatpush2.msra.mxu0 0.0
      %488 = vmatprep.subr.mxu0 0.0
      %489 = vmatpush2.msra.mxu0 0.0
      %490 = vmatprep.subr.mxu0 0.0
      %491 = vmatpush2.msra.mxu0 0.0
      %492 = vmatprep.subr.mxu0 0.0
      %493 = vmatpush2.msra.mxu0 0.0
      %494 = vmatprep.subr.mxu0 0.0
      %495 = vmatpush2.msra.mxu0 0.0
      %496 = vmatprep.subr.mxu0 0.0
      %497 = vmatpush2.msra.mxu0 0.0
      %498 = vmatprep.subr.mxu0 0.0
      %499 = vmatpush2.msra.mxu0 0.0
      %500 = vmatprep.subr.mxu0 0.0
      %501 = vmatpush2.msra.mxu0 0.0
      %502 = vmatprep.subr.mxu0 0.0
      %503 = vmatpush2.msra.mxu0 0.0
      %504 = vmatprep.subr.mxu0 0.0
      %505 = vmatpush2.msra.mxu0 0.0
      %506 = vmatprep.subr.mxu0 0.0
      %507 = vmatpush2.msra.mxu0 0.0
      %508 = vmatprep.subr.mxu0 0.0
      %509 = vmatpush2.msra.mxu0 0.0
      %510 = vmatprep.subr.mxu0 0.0
      %511 = vmatpush2.msra.mxu0 0.0
      %512 = vmatprep.mubr.f32.mxu0 0.0
      %513 = vmatmul.mubr.f32.gmra.mxu0 %v446
      %v514 = vpop.f32.mrf.mxu0
      %v515 = vadd.f32 0.0, %v514
      %v516 = vpop.f32.mrf.mxu0
      %v517 = vadd.f32 0.0, %v516
      %518 = vdwg.mxu0
      %v519 = vld [vmem:[%s5] sm:$0xff]
      %v520 = vld [vmem:[%s5 + $0x8] sm:$0xff]
      %v521 = vld [vmem:[%s5 + $0x10] sm:$0xff]
      %v522 = vld [vmem:[%s5 + $0x18] sm:$0xff]
      %523 = vrot.lane.b32.xlu0 %v437, 112
      %v524 = vpop.permute.xlu0 %523
      %v525 = vsel %vm444, %v524, 0
      %527 = vmatprep.subr.mxu0 0.0
      %528 = vmatpush1.msra.mxu0 0.0
      %529 = vmatprep.subr.mxu0 0.0
      %530 = vmatpush1.msra.mxu0 0.0
      %531 = vmatprep.subr.mxu0 0.0
      %532 = vmatpush1.msra.mxu0 0.0
      %533 = vmatprep.subr.mxu0 0.0
      %534 = vmatpush1.msra.mxu0 0.0
      %535 = vmatprep.subr.mxu0 0.0
      %536 = vmatpush1.msra.mxu0 0.0
      %537 = vmatprep.subr.mxu0 0.0
      %538 = vmatpush1.msra.mxu0 0.0
      %539 = vmatprep.subr.mxu0 0.0
      %540 = vmatpush1.msra.mxu0 0.0
      %541 = vmatprep.subr.mxu0 0.0
      %542 = vmatpush1.msra.mxu0 0.0
      %543 = vmatprep.subr.mxu0 0.0
      %544 = vmatpush1.msra.mxu0 0.0
      %545 = vmatprep.subr.mxu0 0.0
      %546 = vmatpush1.msra.mxu0 0.0
      %547 = vmatprep.subr.mxu0 0.0
      %548 = vmatpush1.msra.mxu0 0.0
      %549 = vmatprep.subr.mxu0 0.0
      %550 = vmatpush1.msra.mxu0 0.0
      %551 = vmatprep.subr.mxu0 0.0
      %552 = vmatpush1.msra.mxu0 0.0
      %553 = vmatprep.subr.mxu0 0.0
      %554 = vmatpush1.msra.mxu0 0.0
      %555 = vmatprep.subr.mxu0 %v522
      %556 = vmatpush1.msra.mxu0 %v521
      %557 = vmatprep.subr.mxu0 %v520
      %558 = vmatpush1.msra.mxu0 %v519
      %559 = vmatprep.subr.mxu0 0.0
      %560 = vmatpush2.msra.mxu0 0.0
      %561 = vmatprep.subr.mxu0 0.0
      %562 = vmatpush2.msra.mxu0 0.0
      %563 = vmatprep.subr.mxu0 0.0
      %564 = vmatpush2.msra.mxu0 0.0
      %565 = vmatprep.subr.mxu0 0.0
      %566 = vmatpush2.msra.mxu0 0.0
      %567 = vmatprep.subr.mxu0 0.0
      %568 = vmatpush2.msra.mxu0 0.0
      %569 = vmatprep.subr.mxu0 0.0
      %570 = vmatpush2.msra.mxu0 0.0
      %571 = vmatprep.subr.mxu0 0.0
      %572 = vmatpush2.msra.mxu0 0.0
      %573 = vmatprep.subr.mxu0 0.0
      %574 = vmatpush2.msra.mxu0 0.0
      %575 = vmatprep.subr.mxu0 0.0
      %576 = vmatpush2.msra.mxu0 0.0
      %577 = vmatprep.subr.mxu0 0.0
      %578 = vmatpush2.msra.mxu0 0.0
      %579 = vmatprep.subr.mxu0 0.0
      %580 = vmatpush2.msra.mxu0 0.0
      %581 = vmatprep.subr.mxu0 0.0
      %582 = vmatpush2.msra.mxu0 0.0
      %583 = vmatprep.subr.mxu0 0.0
      %584 = vmatpush2.msra.mxu0 0.0
      %585 = vmatprep.subr.mxu0 0.0
      %586 = vmatpush2.msra.mxu0 0.0
      %587 = vmatprep.subr.mxu0 0.0
      %588 = vmatpush2.msra.mxu0 0.0
      %589 = vmatprep.subr.mxu0 0.0
      %590 = vmatpush2.msra.mxu0 0.0
      %591 = vmatprep.mubr.f32.mxu0 0.0
      %592 = vmatmul.mubr.f32.gmra.mxu0 %v525
      %v593 = vpop.f32.mrf.mxu0
      %v594 = vadd.f32 0.0, %v593
      %v595 = vpop.f32.mrf.mxu0
      %v596 = vadd.f32 0.0, %v595
      %597 = vdwg.mxu0
      %v598 = vlaneseq
      %v599 = vshrl.u32 %v598, 7
      %601 = vset.pattern.permute.xlu0 0
      %602 = vperm.xlu0 %601, %v337
      %v603 = vpop.permute.xlu0 %602
      %606 = vset.pattern.permute.xlu0 0
      %607 = vperm.xlu0 %606, %v336
      %v608 = vpop.permute.xlu0 %607
      %v610 = vmul.f32 %v608, %v515
      %v611 = vadd.f32 %v603, %v610
      %612 = vset.pattern.permute.xlu0 1
      %613 = vperm.xlu0 %612, %v336
      %v614 = vpop.permute.xlu0 %613
      %v616 = vmul.f32 %v614, %v515
      %618 = vrot.lane.b32.xlu0 %v616, 112
      %v619 = vpop.permute.xlu0 %618
      %v621 = vadd.f32 %v611, %v619
      %622 = vset.pattern.permute.xlu0 2
      %623 = vperm.xlu0 %622, %v336
      %v624 = vpop.permute.xlu0 %623
      %v626 = vmul.f32 %v624, %v515
      %628 = vrot.lane.b32.xlu0 %v626, 96
      %v629 = vpop.permute.xlu0 %628
      %v631 = vadd.f32 %v621, %v629
      %632 = vset.pattern.permute.xlu0 3
      %633 = vperm.xlu0 %632, %v336
      %v634 = vpop.permute.xlu0 %633
      %v636 = vmul.f32 %v634, %v515
      %638 = vrot.lane.b32.xlu0 %v636, 80
      %v639 = vpop.permute.xlu0 %638
      %v641 = vadd.f32 %v631, %v639
      %642 = vset.pattern.permute.xlu0 4
      %643 = vperm.xlu0 %642, %v336
      %v644 = vpop.permute.xlu0 %643
      %v646 = vmul.f32 %v644, %v515
      %648 = vrot.lane.b32.xlu0 %v646, 64
      %v649 = vpop.permute.xlu0 %648
      %v651 = vadd.f32 %v641, %v649
      %652 = vset.pattern.permute.xlu0 5
      %653 = vperm.xlu0 %652, %v336
      %v654 = vpop.permute.xlu0 %653
      %v656 = vmul.f32 %v654, %v515
      %658 = vrot.lane.b32.xlu0 %v656, 48
      %v659 = vpop.permute.xlu0 %658
      %v661 = vadd.f32 %v651, %v659
      %662 = vset.pattern.permute.xlu0 6
      %663 = vperm.xlu0 %662, %v336
      %v664 = vpop.permute.xlu0 %663
      %v666 = vmul.f32 %v664, %v515
      %668 = vrot.lane.b32.xlu0 %v666, 32
      %v669 = vpop.permute.xlu0 %668
      %v671 = vadd.f32 %v661, %v669
      %672 = vset.pattern.permute.xlu0 7
      %673 = vperm.xlu0 %672, %v336
      %v674 = vpop.permute.xlu0 %673
      %v676 = vmul.f32 %v674, %v515
      %678 = vrot.lane.b32.xlu0 %v676, 16
      %v679 = vpop.permute.xlu0 %678
      %v681 = vadd.f32 %v671, %v679
      %682 = vset.pattern.permute.xlu0 8
      %683 = vperm.xlu0 %682, %v336
      %v684 = vpop.permute.xlu0 %683
      %v686 = vmul.f32 %v684, %v517
      %v687 = vadd.f32 %v681, %v686
      %vm688 = vcmp.ge.s32.totalorder %v599, 0
      %vm689 = vcmp.lt.s32.totalorder %v599, 2
      %vm690 = vmand %vm688, %vm689
      %v691 = vsel %vm690, 1, 0
      %v692 = vcvt.s32.f32 %v691
      %v693 = vmul.f32 %v687, %v692
      %v694 = vsel %vm444, %v693, 0.0
      %695 = vadd.xlane.f32.xlu0 %v694
      %v696 = vpop.xlane.xlu0 %695
      %v697 = vrot.slane %v696, 4
      %v698 = vadd.f32 %v696, %v697
      %v699 = vrot.slane %v698, 2
      %v700 = vadd.f32 %v698, %v699
      %v701 = vrot.slane %v700, 1
      %v702 = vadd.f32 %v700, %v701
      %s703 = vtos %v702
      %s704 = smul.f32 %s703, 0.03125
      %v705 = vstv %s704
      %v706 = vsub.f32 %v687, %v705
      %v707 = vmul.f32 %v706, %v706
      %v708 = vmul.f32 %v707, %v692
      %v709 = vsel %vm444, %v708, 0.0
      %710 = vadd.xlane.f32.xlu0 %v709
      %v711 = vpop.xlane.xlu0 %710
      %v712 = vrot.slane %v711, 4
      %v713 = vadd.f32 %v711, %v712
      %v714 = vrot.slane %v713, 2
      %v715 = vadd.f32 %v713, %v714
      %v716 = vrot.slane %v715, 1
      %v717 = vadd.f32 %v715, %v716
      %s718 = vtos %v717
      %s719 = smul.f32 %s718, 0.03125
      %v720 = vmul.f32 %v692, %v705
      %v721 = vadd.f32 %v720, 0.0
      %v722 = vstv %s719
      %v723 = vmul.f32 %v692, %v722
      %v724 = vadd.f32 %v723, 0.0
      %vm725 = vcmp.ge.s32.totalorder %v599, 2
      %vm726 = vcmp.lt.s32.totalorder %v599, 4
      %vm727 = vmand %vm725, %vm726
      %v728 = vsel %vm727, 1, 0
      %v729 = vcvt.s32.f32 %v728
      %v730 = vmul.f32 %v687, %v729
      %v731 = vsel %vm444, %v730, 0.0
      %732 = vadd.xlane.f32.xlu0 %v731
      %v733 = vpop.xlane.xlu0 %732
      %v734 = vrot.slane %v733, 4
      %v735 = vadd.f32 %v733, %v734
      %v736 = vrot.slane %v735, 2
      %v737 = vadd.f32 %v735, %v736
      %v738 = vrot.slane %v737, 1
      %v739 = vadd.f32 %v737, %v738
      %s740 = vtos %v739
      %s741 = smul.f32 %s740, 0.03125
      %v742 = vstv %s741
      %v743 = vsub.f32 %v687, %v742
      %v744 = vmul.f32 %v743, %v743
      %v745 = vmul.f32 %v744, %v729
      %v746 = vsel %vm444, %v745, 0.0
      %747 = vadd.xlane.f32.xlu0 %v746
      %v748 = vpop.xlane.xlu0 %747
      %v749 = vrot.slane %v748, 4
      %v750 = vadd.f32 %v748, %v749
      %v751 = vrot.slane %v750, 2
      %v752 = vadd.f32 %v750, %v751
      %v753 = vrot.slane %v752, 1
      %v754 = vadd.f32 %v752, %v753
      %s755 = vtos %v754
      %s756 = smul.f32 %s755, 0.03125
      %v757 = vmul.f32 %v729, %v742
      %v758 = vadd.f32 %v721, %v757
      %v759 = vstv %s756
      %v760 = vmul.f32 %v729, %v759
      %v761 = vadd.f32 %v724, %v760
      %vm762 = vcmp.ge.s32.totalorder %v599, 4
      %vm763 = vcmp.lt.s32.totalorder %v599, 6
      %vm764 = vmand %vm762, %vm763
      %v765 = vsel %vm764, 1, 0
      %v766 = vcvt.s32.f32 %v765
      %v767 = vmul.f32 %v687, %v766
      %v768 = vsel %vm444, %v767, 0.0
      %769 = vadd.xlane.f32.xlu0 %v768
      %v770 = vpop.xlane.xlu0 %769
      %v771 = vrot.slane %v770, 4
      %v772 = vadd.f32 %v770, %v771
      %v773 = vrot.slane %v772, 2
      %v774 = vadd.f32 %v772, %v773
      %v775 = vrot.slane %v774, 1
      %v776 = vadd.f32 %v774, %v775
      %s777 = vtos %v776
      %s778 = smul.f32 %s777, 0.03125
      %v779 = vstv %s778
      %v780 = vsub.f32 %v687, %v779
      %v781 = vmul.f32 %v780, %v780
      %v782 = vmul.f32 %v781, %v766
      %v783 = vsel %vm444, %v782, 0.0
      %784 = vadd.xlane.f32.xlu0 %v783
      %v785 = vpop.xlane.xlu0 %784
      %v786 = vrot.slane %v785, 4
      %v787 = vadd.f32 %v785, %v786
      %v788 = vrot.slane %v787, 2
      %v789 = vadd.f32 %v787, %v788
      %v790 = vrot.slane %v789, 1
      %v791 = vadd.f32 %v789, %v790
      %s792 = vtos %v791
      %s793 = smul.f32 %s792, 0.03125
      %v794 = vmul.f32 %v766, %v779
      %v795 = vadd.f32 %v758, %v794
      %v796 = vstv %s793
      %v797 = vmul.f32 %v766, %v796
      %v798 = vadd.f32 %v761, %v797
      %vm799 = vcmp.ge.s32.totalorder %v599, 6
      %vm800 = vcmp.lt.s32.totalorder %v599, 8
      %vm801 = vmand %vm799, %vm800
      %v802 = vsel %vm801, 1, 0
      %v803 = vcvt.s32.f32 %v802
      %v804 = vmul.f32 %v687, %v803
      %v805 = vsel %vm444, %v804, 0.0
      %806 = vadd.xlane.f32.xlu0 %v805
      %v807 = vpop.xlane.xlu0 %806
      %v808 = vrot.slane %v807, 4
      %v809 = vadd.f32 %v807, %v808
      %v810 = vrot.slane %v809, 2
      %v811 = vadd.f32 %v809, %v810
      %v812 = vrot.slane %v811, 1
      %v813 = vadd.f32 %v811, %v812
      %s814 = vtos %v813
      %s815 = smul.f32 %s814, 0.03125
      %v816 = vstv %s815
      %v817 = vsub.f32 %v687, %v816
      %v818 = vmul.f32 %v817, %v817
      %v819 = vmul.f32 %v818, %v803
      %v820 = vsel %vm444, %v819, 0.0
      %821 = vadd.xlane.f32.xlu0 %v820
      %v822 = vpop.xlane.xlu0 %821
      %v823 = vrot.slane %v822, 4
      %v824 = vadd.f32 %v822, %v823
      %v825 = vrot.slane %v824, 2
      %v826 = vadd.f32 %v824, %v825
      %v827 = vrot.slane %v826, 1
      %v828 = vadd.f32 %v826, %v827
      %s829 = vtos %v828
      %s830 = smul.f32 %s829, 0.03125
      %v831 = vmul.f32 %v803, %v816
      %v832 = vadd.f32 %v795, %v831
      %v833 = vstv %s830
      %v834 = vmul.f32 %v803, %v833
      %v835 = vadd.f32 %v798, %v834
      %v836 = vsub.f32 %v687, %v832
      %v837 = vadd.f32 %v835, 1e-05
      %v838 = vrsqrt.pop %v837
      %v839 = vmul.f32 %v836, %v838
      %840 = vset.pattern.permute.xlu0 1
      %841 = vperm.xlu0 %840, %v337
      %v842 = vpop.permute.xlu0 %841
      %v844 = vmul.f32 %v839, %v842
      %845 = vset.pattern.permute.xlu0 2
      %846 = vperm.xlu0 %845, %v337
      %v847 = vpop.permute.xlu0 %846
      %v849 = vadd.f32 %v844, %v847
      %v850 = vxor.u32 %v849, 2147483648
      %v851 = vmul.f32 %v850, 1.442695
      %v852 = vpow.pop %v851
      %v853 = vadd.f32 %v852, 1.0
      %v854 = vrcp.pop %v853
      %v855 = vmul.f32 1.0, %v854
      %v856 = vmul.f32 %v608, %v594
      %v857 = vadd.f32 %v603, %v856
      %v858 = vmul.f32 %v614, %v594
      %860 = vrot.lane.b32.xlu0 %v858, 112
      %v861 = vpop.permute.xlu0 %860
      %v863 = vadd.f32 %v857, %v861
      %v864 = vmul.f32 %v624, %v594
      %866 = vrot.lane.b32.xlu0 %v864, 96
      %v867 = vpop.permute.xlu0 %866
      %v869 = vadd.f32 %v863, %v867
      %v870 = vmul.f32 %v634, %v594
      %872 = vrot.lane.b32.xlu0 %v870, 80
      %v873 = vpop.permute.xlu0 %872
      %v875 = vadd.f32 %v869, %v873
      %v876 = vmul.f32 %v644, %v594
      %878 = vrot.lane.b32.xlu0 %v876, 64
      %v879 = vpop.permute.xlu0 %878
      %v881 = vadd.f32 %v875, %v879
      %v882 = vmul.f32 %v654, %v594
      %884 = vrot.lane.b32.xlu0 %v882, 48
      %v885 = vpop.permute.xlu0 %884
      %v887 = vadd.f32 %v881, %v885
      %v888 = vmul.f32 %v664, %v594
      %890 = vrot.lane.b32.xlu0 %v888, 32
      %v891 = vpop.permute.xlu0 %890
      %v893 = vadd.f32 %v887, %v891
      %v894 = vmul.f32 %v674, %v594
      %896 = vrot.lane.b32.xlu0 %v894, 16
      %v897 = vpop.permute.xlu0 %896
      %v899 = vadd.f32 %v893, %v897
      %v900 = vmul.f32 %v684, %v596
      %v901 = vadd.f32 %v899, %v900
      %v902 = vmul.f32 %v901, %v692
      %v903 = vsel %vm444, %v902, 0.0
      %904 = vadd.xlane.f32.xlu0 %v903
      %v905 = vpop.xlane.xlu0 %904
      %v906 = vrot.slane %v905, 4
      %v907 = vadd.f32 %v905, %v906
      %v908 = vrot.slane %v907, 2
      %v909 = vadd.f32 %v907, %v908
      %v910 = vrot.slane %v909, 1
      %v911 = vadd.f32 %v909, %v910
      %s912 = vtos %v911
      %s913 = smul.f32 %s912, 0.03125
      %v914 = vstv %s913
      %v915 = vsub.f32 %v901, %v914
      %v916 = vmul.f32 %v915, %v915
      %v917 = vmul.f32 %v916, %v692
      %v918 = vsel %vm444, %v917, 0.0
      %919 = vadd.xlane.f32.xlu0 %v918
      %v920 = vpop.xlane.xlu0 %919
      %v921 = vrot.slane %v920, 4
      %v922 = vadd.f32 %v920, %v921
      %v923 = vrot.slane %v922, 2
      %v924 = vadd.f32 %v922, %v923
      %v925 = vrot.slane %v924, 1
      %v926 = vadd.f32 %v924, %v925
      %s927 = vtos %v926
      %s928 = smul.f32 %s927, 0.03125
      %v929 = vmul.f32 %v692, %v914
      %v930 = vadd.f32 %v929, 0.0
      %v931 = vstv %s928
      %v932 = vmul.f32 %v692, %v931
      %v933 = vadd.f32 %v932, 0.0
      %v934 = vmul.f32 %v901, %v729
      %v935 = vsel %vm444, %v934, 0.0
      %936 = vadd.xlane.f32.xlu0 %v935
      %v937 = vpop.xlane.xlu0 %936
      %v938 = vrot.slane %v937, 4
      %v939 = vadd.f32 %v937, %v938
      %v940 = vrot.slane %v939, 2
      %v941 = vadd.f32 %v939, %v940
      %v942 = vrot.slane %v941, 1
      %v943 = vadd.f32 %v941, %v942
      %s944 = vtos %v943
      %s945 = smul.f32 %s944, 0.03125
      %v946 = vstv %s945
      %v947 = vsub.f32 %v901, %v946
      %v948 = vmul.f32 %v947, %v947
      %v949 = vmul.f32 %v948, %v729
      %v950 = vsel %vm444, %v949, 0.0
      %951 = vadd.xlane.f32.xlu0 %v950
      %v952 = vpop.xlane.xlu0 %951
      %v953 = vrot.slane %v952, 4
      %v954 = vadd.f32 %v952, %v953
      %v955 = vrot.slane %v954, 2
      %v956 = vadd.f32 %v954, %v955
      %v957 = vrot.slane %v956, 1
      %v958 = vadd.f32 %v956, %v957
      %s959 = vtos %v958
      %s960 = smul.f32 %s959, 0.03125
      %v961 = vmul.f32 %v729, %v946
      %v962 = vadd.f32 %v930, %v961
      %v963 = vstv %s960
      %v964 = vmul.f32 %v729, %v963
      %v965 = vadd.f32 %v933, %v964
      %v966 = vmul.f32 %v901, %v766
      %v967 = vsel %vm444, %v966, 0.0
      %968 = vadd.xlane.f32.xlu0 %v967
      %v969 = vpop.xlane.xlu0 %968
      %v970 = vrot.slane %v969, 4
      %v971 = vadd.f32 %v969, %v970
      %v972 = vrot.slane %v971, 2
      %v973 = vadd.f32 %v971, %v972
      %v974 = vrot.slane %v973, 1
      %v975 = vadd.f32 %v973, %v974
      %s976 = vtos %v975
      %s977 = smul.f32 %s976, 0.03125
      %v978 = vstv %s977
      %v979 = vsub.f32 %v901, %v978
      %v980 = vmul.f32 %v979, %v979
      %v981 = vmul.f32 %v980, %v766
      %v982 = vsel %vm444, %v981, 0.0
      %983 = vadd.xlane.f32.xlu0 %v982
      %v984 = vpop.xlane.xlu0 %983
      %v985 = vrot.slane %v984, 4
      %v986 = vadd.f32 %v984, %v985
      %v987 = vrot.slane %v986, 2
      %v988 = vadd.f32 %v986, %v987
      %v989 = vrot.slane %v988, 1
      %v990 = vadd.f32 %v988, %v989
      %s991 = vtos %v990
      %s992 = smul.f32 %s991, 0.03125
      %v993 = vmul.f32 %v766, %v978
      %v994 = vadd.f32 %v962, %v993
      %v995 = vstv %s992
      %v996 = vmul.f32 %v766, %v995
      %v997 = vadd.f32 %v965, %v996
      %v998 = vmul.f32 %v901, %v803
      %v999 = vsel %vm444, %v998, 0.0
      %1000 = vadd.xlane.f32.xlu0 %v999
      %v1001 = vpop.xlane.xlu0 %1000
      %v1002 = vrot.slane %v1001, 4
      %v1003 = vadd.f32 %v1001, %v1002
      %v1004 = vrot.slane %v1003, 2
      %v1005 = vadd.f32 %v1003, %v1004
      %v1006 = vrot.slane %v1005, 1
      %v1007 = vadd.f32 %v1005, %v1006
      %s1008 = vtos %v1007
      %s1009 = smul.f32 %s1008, 0.03125
      %v1010 = vstv %s1009
      %v1011 = vsub.f32 %v901, %v1010
      %v1012 = vmul.f32 %v1011, %v1011
      %v1013 = vmul.f32 %v1012, %v803
      %v1014 = vsel %vm444, %v1013, 0.0
      %1015 = vadd.xlane.f32.xlu0 %v1014
      %v1016 = vpop.xlane.xlu0 %1015
      %v1017 = vrot.slane %v1016, 4
      %v1018 = vadd.f32 %v1016, %v1017
      %v1019 = vrot.slane %v1018, 2
      %v1020 = vadd.f32 %v1018, %v1019
      %v1021 = vrot.slane %v1020, 1
      %v1022 = vadd.f32 %v1020, %v1021
      %s1023 = vtos %v1022
      %s1024 = smul.f32 %s1023, 0.03125
      %v1025 = vmul.f32 %v803, %v1010
      %v1026 = vadd.f32 %v994, %v1025
      %v1027 = vstv %s1024
      %v1028 = vmul.f32 %v803, %v1027
      %v1029 = vadd.f32 %v997, %v1028
      %v1030 = vsub.f32 %v901, %v1026
      %v1031 = vadd.f32 %v1029, 1e-05
      %v1032 = vrsqrt.pop %v1031
      %v1033 = vmul.f32 %v1030, %v1032
      %1034 = vset.pattern.permute.xlu0 3
      %1035 = vperm.xlu0 %1034, %v337
      %v1036 = vpop.permute.xlu0 %1035
      %v1038 = vmul.f32 %v1033, %v1036
      %1039 = vset.pattern.permute.xlu0 4
      %1040 = vperm.xlu0 %1039, %v337
      %v1041 = vpop.permute.xlu0 %1040
      %v1043 = vadd.f32 %v1038, %v1041
      %v1044 = vxor.u32 %v1043, 2147483648
      %v1045 = vmul.f32 %v1044, 1.442695
      %v1046 = vpow.pop %v1045
      %v1047 = vadd.f32 %v1046, 1.0
      %v1048 = vrcp.pop %v1047
      %v1049 = vmul.f32 1.0, %v1048
      %v1050 = vld [vmem:[%s6] sm:$0xff]
      %v1051 = vld [vmem:[%s6 + $0x8] sm:$0xff]
      %v1052 = vld [vmem:[%s6 + $0x10] sm:$0xff]
      %v1053 = vld [vmem:[%s6 + $0x18] sm:$0xff]
      %v1055 = vsel %vm444, %v855, 0
      %1057 = vmatprep.subr.mxu0 0.0
      %1058 = vmatpush1.msra.mxu0 0.0
      %1059 = vmatprep.subr.mxu0 0.0
      %1060 = vmatpush1.msra.mxu0 0.0
      %1061 = vmatprep.subr.mxu0 0.0
      %1062 = vmatpush1.msra.mxu0 0.0
      %1063 = vmatprep.subr.mxu0 0.0
      %1064 = vmatpush1.msra.mxu0 0.0
      %1065 = vmatprep.subr.mxu0 0.0
      %1066 = vmatpush1.msra.mxu0 0.0
      %1067 = vmatprep.subr.mxu0 0.0
      %1068 = vmatpush1.msra.mxu0 0.0
      %1069 = vmatprep.subr.mxu0 0.0
      %1070 = vmatpush1.msra.mxu0 0.0
      %1071 = vmatprep.subr.mxu0 0.0
      %1072 = vmatpush1.msra.mxu0 0.0
      %1073 = vmatprep.subr.mxu0 0.0
      %1074 = vmatpush1.msra.mxu0 0.0
      %1075 = vmatprep.subr.mxu0 0.0
      %1076 = vmatpush1.msra.mxu0 0.0
      %1077 = vmatprep.subr.mxu0 0.0
      %1078 = vmatpush1.msra.mxu0 0.0
      %1079 = vmatprep.subr.mxu0 0.0
      %1080 = vmatpush1.msra.mxu0 0.0
      %1081 = vmatprep.subr.mxu0 0.0
      %1082 = vmatpush1.msra.mxu0 0.0
      %1083 = vmatprep.subr.mxu0 0.0
      %1084 = vmatpush1.msra.mxu0 0.0
      %1085 = vmatprep.subr.mxu0 %v1053
      %1086 = vmatpush1.msra.mxu0 %v1052
      %1087 = vmatprep.subr.mxu0 %v1051
      %1088 = vmatpush1.msra.mxu0 %v1050
      %1089 = vmatprep.subr.mxu0 0.0
      %1090 = vmatpush2.msra.mxu0 0.0
      %1091 = vmatprep.subr.mxu0 0.0
      %1092 = vmatpush2.msra.mxu0 0.0
      %1093 = vmatprep.subr.mxu0 0.0
      %1094 = vmatpush2.msra.mxu0 0.0
      %1095 = vmatprep.subr.mxu0 0.0
      %1096 = vmatpush2.msra.mxu0 0.0
      %1097 = vmatprep.subr.mxu0 0.0
      %1098 = vmatpush2.msra.mxu0 0.0
      %1099 = vmatprep.subr.mxu0 0.0
      %1100 = vmatpush2.msra.mxu0 0.0
      %1101 = vmatprep.subr.mxu0 0.0
      %1102 = vmatpush2.msra.mxu0 0.0
      %1103 = vmatprep.subr.mxu0 0.0
      %1104 = vmatpush2.msra.mxu0 0.0
      %1105 = vmatprep.subr.mxu0 0.0
      %1106 = vmatpush2.msra.mxu0 0.0
      %1107 = vmatprep.subr.mxu0 0.0
      %1108 = vmatpush2.msra.mxu0 0.0
      %1109 = vmatprep.subr.mxu0 0.0
      %1110 = vmatpush2.msra.mxu0 0.0
      %1111 = vmatprep.subr.mxu0 0.0
      %1112 = vmatpush2.msra.mxu0 0.0
      %1113 = vmatprep.subr.mxu0 0.0
      %1114 = vmatpush2.msra.mxu0 0.0
      %1115 = vmatprep.subr.mxu0 0.0
      %1116 = vmatpush2.msra.mxu0 0.0
      %1117 = vmatprep.subr.mxu0 0.0
      %1118 = vmatpush2.msra.mxu0 0.0
      %1119 = vmatprep.subr.mxu0 0.0
      %1120 = vmatpush2.msra.mxu0 0.0
      %1121 = vmatprep.mubr.f32.mxu0 0.0
      %1122 = vmatmul.mubr.f32.gmra.mxu0 %v1055
      %v1123 = vpop.f32.mrf.mxu0
      %v1124 = vadd.f32 0.0, %v1123
      %v1125 = vpop.f32.mrf.mxu0
      %v1126 = vadd.f32 0.0, %v1125
      %1127 = vdwg.mxu0
      %v1128 = vld [vmem:[%s7] sm:$0xff]
      %v1129 = vld [vmem:[%s7 + $0x8] sm:$0xff]
      %v1130 = vld [vmem:[%s7 + $0x10] sm:$0xff]
      %v1131 = vld [vmem:[%s7 + $0x18] sm:$0xff]
      %v1133 = vsel %vm444, %v1049, 0
      %1135 = vmatprep.subr.mxu0 0.0
      %1136 = vmatpush1.msra.mxu0 0.0
      %1137 = vmatprep.subr.mxu0 0.0
      %1138 = vmatpush1.msra.mxu0 0.0
      %1139 = vmatprep.subr.mxu0 0.0
      %1140 = vmatpush1.msra.mxu0 0.0
      %1141 = vmatprep.subr.mxu0 0.0
      %1142 = vmatpush1.msra.mxu0 0.0
      %1143 = vmatprep.subr.mxu0 0.0
      %1144 = vmatpush1.msra.mxu0 0.0
      %1145 = vmatprep.subr.mxu0 0.0
      %1146 = vmatpush1.msra.mxu0 0.0
      %1147 = vmatprep.subr.mxu0 0.0
      %1148 = vmatpush1.msra.mxu0 0.0
      %1149 = vmatprep.subr.mxu0 0.0
      %1150 = vmatpush1.msra.mxu0 0.0
      %1151 = vmatprep.subr.mxu0 0.0
      %1152 = vmatpush1.msra.mxu0 0.0
      %1153 = vmatprep.subr.mxu0 0.0
      %1154 = vmatpush1.msra.mxu0 0.0
      %1155 = vmatprep.subr.mxu0 0.0
      %1156 = vmatpush1.msra.mxu0 0.0
      %1157 = vmatprep.subr.mxu0 0.0
      %1158 = vmatpush1.msra.mxu0 0.0
      %1159 = vmatprep.subr.mxu0 0.0
      %1160 = vmatpush1.msra.mxu0 0.0
      %1161 = vmatprep.subr.mxu0 0.0
      %1162 = vmatpush1.msra.mxu0 0.0
      %1163 = vmatprep.subr.mxu0 %v1131
      %1164 = vmatpush1.msra.mxu0 %v1130
      %1165 = vmatprep.subr.mxu0 %v1129
      %1166 = vmatpush1.msra.mxu0 %v1128
      %1167 = vmatprep.subr.mxu0 0.0
      %1168 = vmatpush2.msra.mxu0 0.0
      %1169 = vmatprep.subr.mxu0 0.0
      %1170 = vmatpush2.msra.mxu0 0.0
      %1171 = vmatprep.subr.mxu0 0.0
      %1172 = vmatpush2.msra.mxu0 0.0
      %1173 = vmatprep.subr.mxu0 0.0
      %1174 = vmatpush2.msra.mxu0 0.0
      %1175 = vmatprep.subr.mxu0 0.0
      %1176 = vmatpush2.msra.mxu0 0.0
      %1177 = vmatprep.subr.mxu0 0.0
      %1178 = vmatpush2.msra.mxu0 0.0
      %1179 = vmatprep.subr.mxu0 0.0
      %1180 = vmatpush2.msra.mxu0 0.0
      %1181 = vmatprep.subr.mxu0 0.0
      %1182 = vmatpush2.msra.mxu0 0.0
      %1183 = vmatprep.subr.mxu0 0.0
      %1184 = vmatpush2.msra.mxu0 0.0
      %1185 = vmatprep.subr.mxu0 0.0
      %1186 = vmatpush2.msra.mxu0 0.0
      %1187 = vmatprep.subr.mxu0 0.0
      %1188 = vmatpush2.msra.mxu0 0.0
      %1189 = vmatprep.subr.mxu0 0.0
      %1190 = vmatpush2.msra.mxu0 0.0
      %1191 = vmatprep.subr.mxu0 0.0
      %1192 = vmatpush2.msra.mxu0 0.0
      %1193 = vmatprep.subr.mxu0 0.0
      %1194 = vmatpush2.msra.mxu0 0.0
      %1195 = vmatprep.subr.mxu0 0.0
      %1196 = vmatpush2.msra.mxu0 0.0
      %1197 = vmatprep.subr.mxu0 0.0
      %1198 = vmatpush2.msra.mxu0 0.0
      %1199 = vmatprep.mubr.f32.mxu0 0.0
      %1200 = vmatmul.mubr.f32.gmra.mxu0 %v1133
      %v1201 = vpop.f32.mrf.mxu0
      %v1202 = vadd.f32 0.0, %v1201
      %v1203 = vpop.f32.mrf.mxu0
      %v1204 = vadd.f32 0.0, %v1203
      %1205 = vdwg.mxu0
      %v1206 = vmul.f32 %v334, %v1124
      %v1207 = vmul.f32 %v335, %v1126
      %v1208 = vmul.f32 %v1206, %v1202
      %v1209 = vmul.f32 %v1207, %v1204
      %v1210 = vld [vmem:[%s8] sm:$0xff]
      %v1211 = vld [vmem:[%s8 + $0x8] sm:$0xff]
      %v1212 = vld [vmem:[%s8 + $0x10] sm:$0xff]
      %v1213 = vld [vmem:[%s8 + $0x18] sm:$0xff]
      %v1214 = vld [vmem:[%s8 + $0x20] sm:$0xff]
      %v1215 = vld [vmem:[%s8 + $0x28] sm:$0xff]
      %v1216 = vld [vmem:[%s8 + $0x30] sm:$0xff]
      %v1217 = vld [vmem:[%s8 + $0x38] sm:$0xff]
      %v1218 = vld [vmem:[%s8 + $0x40] sm:$0xff]
      %v1219 = vld [vmem:[%s8 + $0x48] sm:$0xff]
      %v1220 = vld [vmem:[%s8 + $0x50] sm:$0xff]
      %v1221 = vld [vmem:[%s8 + $0x58] sm:$0xff]
      %v1222 = vld [vmem:[%s8 + $0x60] sm:$0xff]
      %v1223 = vld [vmem:[%s8 + $0x68] sm:$0xff]
      %v1224 = vld [vmem:[%s8 + $0x70] sm:$0xff]
      %v1225 = vld [vmem:[%s8 + $0x78] sm:$0xff]
      %v1226 = vld [vmem:[%s8 + $0x80] sm:$0xff]
      %v1227 = vld [vmem:[%s8 + $0x88] sm:$0xff]
      %v1228 = vld [vmem:[%s8 + $0x90] sm:$0xff]
      %v1229 = vld [vmem:[%s8 + $0x98] sm:$0xff]
      %v1230 = vld [vmem:[%s8 + $0xa0] sm:$0xff]
      %v1231 = vld [vmem:[%s8 + $0xa8] sm:$0xff]
      %v1232 = vld [vmem:[%s8 + $0xb0] sm:$0xff]
      %v1233 = vld [vmem:[%s8 + $0xb8] sm:$0xff]
      %v1234 = vld [vmem:[%s8 + $0xc0] sm:$0xff]
      %v1235 = vld [vmem:[%s8 + $0xc8] sm:$0xff]
      %v1236 = vld [vmem:[%s8 + $0xd0] sm:$0xff]
      %v1237 = vld [vmem:[%s8 + $0xd8] sm:$0xff]
      %v1238 = vld [vmem:[%s8 + $0xe0] sm:$0xff]
      %v1239 = vld [vmem:[%s8 + $0xe8] sm:$0xff]
      %v1240 = vld [vmem:[%s8 + $0xf0] sm:$0xff]
      %v1241 = vld [vmem:[%s8 + $0xf8] sm:$0xff]
      %1242 = vmatprep.subr.mxu0 0.0
      %1243 = vmatpush1.msra.mxu0 %v1225
      %1244 = vmatprep.subr.mxu0 0.0
      %1245 = vmatpush1.msra.mxu0 %v1224
      %1246 = vmatprep.subr.mxu0 0.0
      %1247 = vmatpush1.msra.mxu0 %v1223
      %1248 = vmatprep.subr.mxu0 0.0
      %1249 = vmatpush1.msra.mxu0 %v1222
      %1250 = vmatprep.subr.mxu0 0.0
      %1251 = vmatpush1.msra.mxu0 %v1221
      %1252 = vmatprep.subr.mxu0 0.0
      %1253 = vmatpush1.msra.mxu0 %v1220
      %1254 = vmatprep.subr.mxu0 0.0
      %1255 = vmatpush1.msra.mxu0 %v1219
      %1256 = vmatprep.subr.mxu0 0.0
      %1257 = vmatpush1.msra.mxu0 %v1218
      %1258 = vmatprep.subr.mxu0 0.0
      %1259 = vmatpush1.msra.mxu0 %v1217
      %1260 = vmatprep.subr.mxu0 0.0
      %1261 = vmatpush1.msra.mxu0 %v1216
      %1262 = vmatprep.subr.mxu0 0.0
      %1263 = vmatpush1.msra.mxu0 %v1215
      %1264 = vmatprep.subr.mxu0 0.0
      %1265 = vmatpush1.msra.mxu0 %v1214
      %1266 = vmatprep.subr.mxu0 0.0
      %1267 = vmatpush1.msra.mxu0 %v1213
      %1268 = vmatprep.subr.mxu0 0.0
      %1269 = vmatpush1.msra.mxu0 %v1212
      %1270 = vmatprep.subr.mxu0 0.0
      %1271 = vmatpush1.msra.mxu0 %v1211
      %1272 = vmatprep.subr.mxu0 0.0
      %1273 = vmatpush1.msra.mxu0 %v1210
      %1274 = vmatprep.subr.mxu0 0.0
      %1275 = vmatpush2.msra.mxu0 %v1241
      %1276 = vmatprep.subr.mxu0 0.0
      %1277 = vmatpush2.msra.mxu0 %v1240
      %1278 = vmatprep.subr.mxu0 0.0
      %1279 = vmatpush2.msra.mxu0 %v1239
      %1280 = vmatprep.subr.mxu0 0.0
      %1281 = vmatpush2.msra.mxu0 %v1238
      %1282 = vmatprep.subr.mxu0 0.0
      %1283 = vmatpush2.msra.mxu0 %v1237
      %1284 = vmatprep.subr.mxu0 0.0
      %1285 = vmatpush2.msra.mxu0 %v1236
      %1286 = vmatprep.subr.mxu0 0.0
      %1287 = vmatpush2.msra.mxu0 %v1235
      %1288 = vmatprep.subr.mxu0 0.0
      %1289 = vmatpush2.msra.mxu0 %v1234
      %1290 = vmatprep.subr.mxu0 0.0
      %1291 = vmatpush2.msra.mxu0 %v1233
      %1292 = vmatprep.subr.mxu0 0.0
      %1293 = vmatpush2.msra.mxu0 %v1232
      %1294 = vmatprep.subr.mxu0 0.0
      %1295 = vmatpush2.msra.mxu0 %v1231
      %1296 = vmatprep.subr.mxu0 0.0
      %1297 = vmatpush2.msra.mxu0 %v1230
      %1298 = vmatprep.subr.mxu0 0.0
      %1299 = vmatpush2.msra.mxu0 %v1229
      %1300 = vmatprep.subr.mxu0 0.0
      %1301 = vmatpush2.msra.mxu0 %v1228
      %1302 = vmatprep.subr.mxu0 0.0
      %1303 = vmatpush2.msra.mxu0 %v1227
      %1304 = vmatprep.subr.mxu0 0.0
      %1305 = vmatpush2.msra.mxu0 %v1226
      %1306 = vmatprep.mubr.f32.mxu0 %v1209
      %1307 = vmatmul.mubr.f32.gmra.mxu0 %v1208
      %v1308 = vpop.f32.mrf.mxu0
      %v1309 = vadd.f32 0.0, %v1308
      %v1310 = vpop.f32.mrf.mxu0
      %1311 = vdwg.mxu0
      %vm1312 = vcmask 31744
      %v1313 = vsel %vm1312, %v1309, 0.0
      %1314 = vadd.xlane.f32.xlu0 %v1313
      %v1315 = vpop.xlane.xlu0 %1314
      %v1316 = vrot.slane %v1315, 4
      %v1317 = vadd.f32 %v1315, %v1316
      %v1318 = vrot.slane %v1317, 2
      %v1319 = vadd.f32 %v1317, %v1318
      %v1320 = vrot.slane %v1319, 1
      %v1321 = vadd.f32 %v1319, %v1320
      %s1322 = vtos %v1321
      %v1323 = vrcp.pop 32.0
      %s1324 = vtos %v1323
      %s1325 = smul.f32 %s1322, %s1324
      %v1326 = vstv %s1325
      %v1327 = vsub.f32 %v1309, %v1326
      %v1328 = vmul.f32 %v1327, %v1327
      %v1329 = vsel %vm1312, %v1328, 0.0
      %1330 = vadd.xlane.f32.xlu0 %v1329
      %v1331 = vpop.xlane.xlu0 %1330
      %v1332 = vrot.slane %v1331, 4
      %v1333 = vadd.f32 %v1331, %v1332
      %v1334 = vrot.slane %v1333, 2
      %v1335 = vadd.f32 %v1333, %v1334
      %v1336 = vrot.slane %v1335, 1
      %v1337 = vadd.f32 %v1335, %v1336
      %s1338 = vtos %v1337
      %v1339 = vrcp.pop 32.0
      %s1340 = vtos %v1339
      %s1341 = smul.f32 %s1338, %s1340
      %s1342 = sadd.f32 %s1341, 1e-05
      %v1343 = vstv %s1342
      %v1344 = vrsqrt.pop %v1343
      %s1345 = vtos %v1344
      %v1346 = vstv %s1345
      %v1347 = vmul.f32 %v1327, %v1346
      %1348 = vset.pattern.permute.xlu0 5
      %1349 = vperm.xlu0 %1348, %v337
      %v1350 = vpop.permute.xlu0 %1349
      %v1352 = vmul.f32 %v1347, %v1350
      %1353 = vset.pattern.permute.xlu0 6
      %1354 = vperm.xlu0 %1353, %v337
      %v1355 = vpop.permute.xlu0 %1354
      %v1357 = vadd.f32 %v1352, %v1355
      %1358 = vset.pattern.permute.xlu0 7
      %1359 = vperm.xlu0 %1358, %v337
      %v1360 = vpop.permute.xlu0 %1359
      %v1362 = vmul.f32 %v1357, %v1360
      %1363 = vset.pattern.permute.xlu0 8
      %1364 = vperm.xlu0 %1363, %v337
      %v1365 = vpop.permute.xlu0 %1364
      %v1367 = vmul.f32 %v1357, %v1365
      %1368 = vset.pattern.permute.xlu0 9
      %1369 = vperm.xlu0 %1368, %v337
      %v1370 = vpop.permute.xlu0 %1369
      %v1372 = vmul.f32 %v1357, %v1370
      %v1374 = vsel %vm1312, %v1362, 0
      %v1377 = vsel %vm1312, %v1367, 0
      %1379 = vmatprep.subr.mxu0 0.0
      %1380 = vmatpush1.xpose.msra.mxu0 0.0
      %1381 = vmatprep.subr.mxu0 0.0
      %1382 = vmatpush1.xpose.msra.mxu0 0.0
      %1383 = vmatprep.subr.mxu0 0.0
      %1384 = vmatpush1.xpose.msra.mxu0 0.0
      %1385 = vmatprep.subr.mxu0 0.0
      %1386 = vmatpush1.xpose.msra.mxu0 0.0
      %1387 = vmatprep.subr.mxu0 0.0
      %1388 = vmatpush1.xpose.msra.mxu0 0.0
      %1389 = vmatprep.subr.mxu0 0.0
      %1390 = vmatpush1.xpose.msra.mxu0 0.0
      %1391 = vmatprep.subr.mxu0 0.0
      %1392 = vmatpush1.xpose.msra.mxu0 0.0
      %1393 = vmatprep.subr.mxu0 0.0
      %1394 = vmatpush1.xpose.msra.mxu0 0.0
      %1395 = vmatprep.subr.mxu0 0.0
      %1396 = vmatpush1.xpose.msra.mxu0 0.0
      %1397 = vmatprep.subr.mxu0 0.0
      %1398 = vmatpush1.xpose.msra.mxu0 0.0
      %1399 = vmatprep.subr.mxu0 0.0
      %1400 = vmatpush1.xpose.msra.mxu0 0.0
      %1401 = vmatprep.subr.mxu0 0.0
      %1402 = vmatpush1.xpose.msra.mxu0 0.0
      %1403 = vmatprep.subr.mxu0 0.0
      %1404 = vmatpush1.xpose.msra.mxu0 0.0
      %1405 = vmatprep.subr.mxu0 0.0
      %1406 = vmatpush1.xpose.msra.mxu0 0.0
      %1407 = vmatprep.subr.mxu0 0.0
      %1408 = vmatpush1.xpose.msra.mxu0 0.0
      %1409 = vmatprep.subr.mxu0 0.0
      %1410 = vmatpush1.xpose.msra.mxu0 %v1377
      %1411 = vmatprep.subr.mxu0 0.0
      %1412 = vmatpush2.xpose.msra.mxu0 0.0
      %1413 = vmatprep.subr.mxu0 0.0
      %1414 = vmatpush2.xpose.msra.mxu0 0.0
      %1415 = vmatprep.subr.mxu0 0.0
      %1416 = vmatpush2.xpose.msra.mxu0 0.0
      %1417 = vmatprep.subr.mxu0 0.0
      %1418 = vmatpush2.xpose.msra.mxu0 0.0
      %1419 = vmatprep.subr.mxu0 0.0
      %1420 = vmatpush2.xpose.msra.mxu0 0.0
      %1421 = vmatprep.subr.mxu0 0.0
      %1422 = vmatpush2.xpose.msra.mxu0 0.0
      %1423 = vmatprep.subr.mxu0 0.0
      %1424 = vmatpush2.xpose.msra.mxu0 0.0
      %1425 = vmatprep.subr.mxu0 0.0
      %1426 = vmatpush2.xpose.msra.mxu0 0.0
      %1427 = vmatprep.subr.mxu0 0.0
      %1428 = vmatpush2.xpose.msra.mxu0 0.0
      %1429 = vmatprep.subr.mxu0 0.0
      %1430 = vmatpush2.xpose.msra.mxu0 0.0
      %1431 = vmatprep.subr.mxu0 0.0
      %1432 = vmatpush2.xpose.msra.mxu0 0.0
      %1433 = vmatprep.subr.mxu0 0.0
      %1434 = vmatpush2.xpose.msra.mxu0 0.0
      %1435 = vmatprep.subr.mxu0 0.0
      %1436 = vmatpush2.xpose.msra.mxu0 0.0
      %1437 = vmatprep.subr.mxu0 0.0
      %1438 = vmatpush2.xpose.msra.mxu0 0.0
      %1439 = vmatprep.subr.mxu0 0.0
      %1440 = vmatpush2.xpose.msra.mxu0 0.0
      %1441 = vmatprep.subr.mxu0 0.0
      %1442 = vmatpush2.xpose.msra.mxu0 0.0
      %1443 = vmatprep.mubr.f32.mxu0 0.0
      %1444 = vmatmul.mubr.f32.gmra.mxu0 %v1374
      %v1445 = vpop.f32.mrf.mxu0
      %v1446 = vadd.f32 0.0, %v1445
      %v1447 = vpop.f32.mrf.mxu0
      %1448 = vdwg.mxu0
      %v1449 = vmul.f32 %v1446, 0.35355338
      %vm1450 = vcmask 64512
      %v1451 = vsel %vm1450, %v1449, -inf
      %1452 = vmax.xlane.f32.xlu0 %v1451
      %v1453 = vpop.xlane.xlu0 %1452
      %v1454 = vsub.f32 %v1449, %v1453
      %v1455 = vmul.f32 %v1454, 1.442695
      %v1456 = vpow.pop %v1455
      %v1457 = vsel %vm1450, %v1456, 0.0
      %1458 = vadd.xlane.f32.xlu0 %v1457
      %v1459 = vpop.xlane.xlu0 %1458
      %v1460 = vrcp.pop %v1459
      %v1461 = vmul.f32 %v1456, %v1460
      %v1463 = vsel %vm1450, %v1461, 0
      %1465 = vmatprep.subr.mxu0 0.0
      %1466 = vmatpush1.msra.mxu0 0.0
      %1467 = vmatprep.subr.mxu0 0.0
      %1468 = vmatpush1.msra.mxu0 0.0
      %1469 = vmatprep.subr.mxu0 0.0
      %1470 = vmatpush1.msra.mxu0 0.0
      %1471 = vmatprep.subr.mxu0 0.0
      %1472 = vmatpush1.msra.mxu0 0.0
      %1473 = vmatprep.subr.mxu0 0.0
      %1474 = vmatpush1.msra.mxu0 0.0
      %1475 = vmatprep.subr.mxu0 0.0
      %1476 = vmatpush1.msra.mxu0 0.0
      %1477 = vmatprep.subr.mxu0 0.0
      %1478 = vmatpush1.msra.mxu0 0.0
      %1479 = vmatprep.subr.mxu0 0.0
      %1480 = vmatpush1.msra.mxu0 0.0
      %1481 = vmatprep.subr.mxu0 0.0
      %1482 = vmatpush1.msra.mxu0 0.0
      %1483 = vmatprep.subr.mxu0 0.0
      %1484 = vmatpush1.msra.mxu0 0.0
      %1485 = vmatprep.subr.mxu0 0.0
      %1486 = vmatpush1.msra.mxu0 0.0
      %1487 = vmatprep.subr.mxu0 0.0
      %1488 = vmatpush1.msra.mxu0 0.0
      %1489 = vmatprep.subr.mxu0 0.0
      %1490 = vmatpush1.msra.mxu0 0.0
      %1491 = vmatprep.subr.mxu0 0.0
      %1492 = vmatpush1.msra.mxu0 0.0
      %1493 = vmatprep.subr.mxu0 0.0
      %1494 = vmatpush1.msra.mxu0 0.0
      %1495 = vmatprep.subr.mxu0 0.0
      %1496 = vmatpush1.msra.mxu0 %v1372
      %1497 = vmatprep.subr.mxu0 0.0
      %1498 = vmatpush2.msra.mxu0 0.0
      %1499 = vmatprep.subr.mxu0 0.0
      %1500 = vmatpush2.msra.mxu0 0.0
      %1501 = vmatprep.subr.mxu0 0.0
      %1502 = vmatpush2.msra.mxu0 0.0
      %1503 = vmatprep.subr.mxu0 0.0
      %1504 = vmatpush2.msra.mxu0 0.0
      %1505 = vmatprep.subr.mxu0 0.0
      %1506 = vmatpush2.msra.mxu0 0.0
      %1507 = vmatprep.subr.mxu0 0.0
      %1508 = vmatpush2.msra.mxu0 0.0
      %1509 = vmatprep.subr.mxu0 0.0
      %1510 = vmatpush2.msra.mxu0 0.0
      %1511 = vmatprep.subr.mxu0 0.0
      %1512 = vmatpush2.msra.mxu0 0.0
      %1513 = vmatprep.subr.mxu0 0.0
      %1514 = vmatpush2.msra.mxu0 0.0
      %1515 = vmatprep.subr.mxu0 0.0
      %1516 = vmatpush2.msra.mxu0 0.0
      %1517 = vmatprep.subr.mxu0 0.0
      %1518 = vmatpush2.msra.mxu0 0.0
      %1519 = vmatprep.subr.mxu0 0.0
      %1520 = vmatpush2.msra.mxu0 0.0
      %1521 = vmatprep.subr.mxu0 0.0
      %1522 = vmatpush2.msra.mxu0 0.0
      %1523 = vmatprep.subr.mxu0 0.0
      %1524 = vmatpush2.msra.mxu0 0.0
      %1525 = vmatprep.subr.mxu0 0.0
      %1526 = vmatpush2.msra.mxu0 0.0
      %1527 = vmatprep.subr.mxu0 0.0
      %1528 = vmatpush2.msra.mxu0 0.0
      %1529 = vmatprep.mubr.f32.mxu0 0.0
      %1530 = vmatmul.mubr.f32.gmra.mxu0 %v1463
      %v1531 = vpop.f32.mrf.mxu0
      %v1532 = vadd.f32 0.0, %v1531
      %v1533 = vpop.f32.mrf.mxu0
      %1534 = vdwg.mxu0
      %v1535 = vsel %vm1312, %v1532, 0.0
      %1536 = vadd.xlane.f32.xlu0 %v1535
      %v1537 = vpop.xlane.xlu0 %1536
      %v1538 = vrcp.pop 4.0
      %v1539 = vmul.f32 %v1537, %v1538
      %v1540 = vxor.u32 %v1539, 2147483648
      %v1541 = vmul.f32 %v1540, 1.442695
      %v1542 = vpow.pop %v1541
      %v1543 = vadd.f32 %v1542, 1.0
      %v1544 = vrcp.pop %v1543
      %v1545 = vmul.f32 1.0, %v1544
      %v1546 = vmul.f32 %v1208, %v1545
      %v1547 = vmul.f32 %v1209, %v1545
      %v1548 = vpack.c.bf16 %v1546, %v1546
      %v1549 = vpack.c.bf16 %v1547, %v1547
      %v1552 = vunpack.c.l.b16 %v1548
      %v1553 = vunpack.c.l.b16 %v1549
      %v1554 = vpack.c.b16 %v1553, %v1552
      %1556 = vst [vmem:[%s332] sm:$0xff] %v1554
      %p1557 = scmp.lt.s32.totalorder %s20, 1
      %s1558 = scalar_select %p1557, %s20, 1
      %s1559 = smul.addr %s1558, 2
      %s1560 = smul.addr %s1559, 4
      %s1561 = scalar_lea.vmem %s9, %s1560
      // Predicated region
      $region57: #{_lambda_.7} parent=55 // pred_check
        %p1562 = pneg %p232
      $region58: #{_lambda_.7} parent=55 // pred_check_branch
        %1564 = sbr.rel (%p1562) target = $region60
      $region59: #{_lambda_.7} parent=55 // pred_region
        _
      $region60: #{_lambda_.7} parent=55 // pred_fallthru
        _
    $region56: #{_lambda_.7} parent=5 // pred_fallthru
      _
    %p1565 = scmp.le.s32.totalorder 2, %s15
    // Predicated region
    $region61: #{_lambda_.7} parent=5 // pred_check
      %p1566 = pneg %p1565
    $region62: #{_lambda_.7} parent=5 // pred_check_branch
      %1568 = sbr.rel (%p1566) target = $region64
    $region63: #{_lambda_.7} parent=5 // pred_region
      %s1569 = ssub.s32 %s15, 2
      // Predicated region
      $region65: #{_lambda_.7} parent=63 // pred_check
        %p1570 = pneg %p238
      $region66: #{_lambda_.7} parent=63 // pred_check_branch
        %1572 = sbr.rel (%p1570) target = $region68
      $region67: #{_lambda_.7} parent=63 // pred_region
        %p1573 = scmp.lt.s32.totalorder %s21, 1
        %s1574 = scalar_select %p1573, %s21, 1
        %s1575 = smul.addr %s1574, 2
        %s1576 = smul.addr %s1575, 4
        %s1577 = scalar_lea.vmem %s9, %s1576
      $region68: #{_lambda_.7} parent=63 // pred_fallthru
        _
    $region64: #{_lambda_.7} parent=5 // pred_fallthru
      _
  $region6: #{_lambda_.7} parent=0 // loop_footer
    %s19 = sadd.s32 1, %s15
  $region7: #{_lambda_.7} parent=0 // loop_footer_branch
    %14 = sbr.rel target = $region3
  $region8: #{_lambda_.7} parent=0 // loop_exit
    _

</llo_original>
